<compile_context>
chip_gen: v7x
topology: tpu7x:2x2x1
jax: 0.10.0
libtpu: 0.0.40
codegen_flags: <defaults>
</compile_context>

<pallas_src>
import jax
import jax.numpy as jnp
from jax.experimental import pallas as pl
from jax.experimental.pallas import tpu as pltpu

# ---- small demo configuration ----
EMBED      = 32
HIDDEN     = 32
VOCAB      = 64
NUM_LAYERS = 2
IN_CH      = 3
IMG_HW     = 16
KSIZE      = 3
BATCH      = 2
CAP_LEN    = 8          # captions length; decoder consumes CAP_LEN - 1 tokens

LANE  = 128
B_PAD = 8               # sublane-aligned per-timestep row block


def _round_up(x, m):
    return (x + m - 1) // m * m


# ---------------------------------------------------------------------------
# One fused kernel: chunked encoder + wavefront 2-layer GRU + vocab projection.
# All refs are whole-array VMEM residents (no grid).
# TODO(synk): for larger batch on v7x, add a leading "parallel" batch grid axis
# so work shards across the 2 TensorCores (B=2 here -> not worth it).
# TODO(synk): for a realistic vocab (32K+), tile the vocab projection over V
# with a BlockSpec sized for v7x's 64 MiB VMEM (e.g. 2048-4096 lane V-tiles,
# double-buffered) instead of whole-array residency.
# ---------------------------------------------------------------------------
def _make_fused_kernel(T, B_pad, H, GP, E, chunk, n_chunks):
    TBP = T * B_pad

    def kernel(patches_ref, pool_ref, wc_ref, cb_ref, emb_ref,
               wih0_ref, bih0_ref, wf_ref, bfg_ref, whh1_ref, bhh1_ref,
               ow_ref, ob_ref, out_ref, ys_ref):
        # ---- Encoder: chunked conv-as-matmul + ReLU, pooled + T-broadcast ----
        # pool_ref is the extended (T*B_pad, B*HW) mean-pool matrix, so the
        # accumulator directly holds the image feature broadcast to every
        # timestep row; the (B*HW, E) activation never exists in full.
        # TODO(synk): at realistic image sizes, generate the 9 conv taps
        # in-kernel from a padded NHWC image instead of wrapper-side im2col.
        img_bc = jnp.zeros((TBP, E), jnp.float32)
        for c in range(n_chunks):
            lo = c * chunk
            conv_c = jnp.dot(patches_ref[lo:lo + chunk, :], wc_ref[...],
                             preferred_element_type=jnp.float32) + cb_ref[...]
            relu_c = jnp.maximum(conv_c, 0.0).astype(jnp.bfloat16)
            img_bc = img_bc + jnp.dot(pool_ref[:, lo:lo + chunk], relu_c,
                                      preferred_element_type=jnp.float32)

        # ---- Layer-0 input projection hoisted over ALL timesteps ----
        x0 = emb_ref[...] + img_bc                                    # (T*B_pad, E) f32
        gi0 = jnp.dot(x0.astype(jnp.bfloat16), wih0_ref[...],
                      preferred_element_type=jnp.float32) + bih0_ref[...]   # (T*B_pad, GP)

        wf_w   = wf_ref[...]       # [W_hh0 | W_ih1]  (H, 2*GP) bf16
        bfg_b  = bfg_ref[...]      # [b_hh0 | b_ih1]  (1, 2*GP) f32
        whh1_w = whh1_ref[...]     # (H, GP) bf16
        bhh1_b = bhh1_ref[...]     # (1, GP) f32

        h0 = jnp.zeros((B_pad, H), jnp.float32)
        h1 = jnp.zeros((B_pad, H), jnp.float32)

        # ---- Wavefront-interleaved recurrence (fully unrolled, T+1 steps) ----
        # Wavefront s computes layer-0 step s and layer-1 step s-1; both only
        # need h0_{s-1}, so one fused matmul h0 @ [W_hh0 | W_ih1] feeds both.
        for s in range(T + 1):
            if s == 0:
                m = bfg_b                                   # h0_{-1} == 0
            else:
                m = jnp.dot(h0.astype(jnp.bfloat16), wf_w,
                            preferred_element_type=jnp.float32) + bfg_b   # (B_pad, 2*GP)

            # layer 1, timestep s-1 (input = h0_{s-1}, carried via m's right half)
            if s >= 1:
                if s == 1:
                    gh1 = bhh1_b                            # h1_{-1} == 0
                else:
                    gh1 = jnp.dot(h1.astype(jnp.bfloat16), whh1_w,
                                  preferred_element_type=jnp.float32) + bhh1_b
                gi1 = m[:, GP:2 * GP]
                r1 = jax.nn.sigmoid(gi1[:, 0:H] + gh1[:, 0:H])
                z1 = jax.nn.sigmoid(gi1[:, H:2 * H] + gh1[:, H:2 * H])
                n1 = jnp.tanh(gi1[:, 2 * H:3 * H] + r1 * gh1[:, 2 * H:3 * H])
                h1 = (1.0 - z1) * n1 + z1 * h1
                ys_ref[(s - 1) * B_pad:s * B_pad, :] = h1   # sublane-aligned store

            # layer 0, timestep s
            if s < T:
                gh0 = m[:, 0:GP]
                gi0s = gi0[s * B_pad:(s + 1) * B_pad, :]    # vreg-row-aligned slice
                r0 = jax.nn.sigmoid(gi0s[:, 0:H] + gh0[:, 0:H])
                z0 = jax.nn.sigmoid(gi0s[:, H:2 * H] + gh0[:, H:2 * H])
                n0 = jnp.tanh(gi0s[:, 2 * H:3 * H] + r0 * gh0[:, 2 * H:3 * H])
                h0 = (1.0 - z0) * n0 + z0 * h0

        # ---- vocab projection: one hoisted matmul, lane-dense (VP=128) output ----
        out_ref[...] = jnp.dot(ys_ref[...].astype(jnp.bfloat16), ow_ref[...],
                               preferred_element_type=jnp.float32) + ob_ref[...]

    return kernel


# ---------------------------------------------------------------------------
# Parameters (deterministic synthetic init) and full forward pass.
# ---------------------------------------------------------------------------
def init_params(key):
    ks = jax.random.split(key, 8 + 4 * NUM_LAYERS)
    s = 0.1
    params = {
        "conv_w": s * jax.random.normal(ks[0], (KSIZE, KSIZE, IN_CH, EMBED), jnp.float32),
        "conv_b": s * jax.random.normal(ks[1], (EMBED,), jnp.float32),
        "embedding": s * jax.random.normal(ks[2], (VOCAB, EMBED), jnp.float32),
        "out_w": s * jax.random.normal(ks[3], (HIDDEN, VOCAB), jnp.float32),
        "out_b": s * jax.random.normal(ks[4], (VOCAB,), jnp.float32),
        "gru": [],
    }
    for l in range(NUM_LAYERS):
        ein = EMBED if l == 0 else HIDDEN
        base = 8 + 4 * l
        params["gru"].append(dict(
            w_ih=s * jax.random.normal(ks[base + 0], (ein, 3 * HIDDEN), jnp.float32),
            w_hh=s * jax.random.normal(ks[base + 1], (HIDDEN, 3 * HIDDEN), jnp.float32),
            b_ih=s * jax.random.normal(ks[base + 2], (3 * HIDDEN,), jnp.float32),
            b_hh=s * jax.random.normal(ks[base + 3], (3 * HIDDEN,), jnp.float32),
        ))
    return params


def image_caption_forward(params, images, captions):
    B, C, Himg, Wimg = images.shape
    L = captions.shape[1]
    T = L - 1
    HW = Himg * Wimg
    BHW = B * HW
    E = params["conv_w"].shape[-1]
    Hd = params["gru"][0]["w_hh"].shape[0]
    V = params["out_w"].shape[1]
    GP = _round_up(3 * Hd, LANE)      # gate width padded to lane-dense 128
    VP = _round_up(V, LANE)           # vocab width padded to lane-dense 128
    BP = B_PAD
    assert B <= BP
    # TODO(synk): generalize the wavefront/fused-weight path to num_layers != 2.
    assert len(params["gru"]) == 2

    # ---- JAX glue: im2col patches for the 3x3 / pad=1 conv (bf16 operands) ----
    x = jnp.transpose(images, (0, 2, 3, 1)).astype(jnp.float32)
    xp = jnp.pad(x, ((0, 0), (1, 1), (1, 1), (0, 0)))
    cols = [xp[:, kh:kh + Himg, kw:kw + Wimg, :]
            for kh in range(KSIZE) for kw in range(KSIZE)]
    patches = jnp.stack(cols, axis=3).reshape(BHW, KSIZE * KSIZE * C).astype(jnp.bfloat16)
    wc = params["conv_w"].reshape(KSIZE * KSIZE * C, E).astype(jnp.bfloat16)
    cb = params["conv_b"].reshape(1, E).astype(jnp.float32)

    # Extended mean-pool matrix (T*BP, B*HW): row t*BP+b averages image b's
    # spatial positions (zero rows for the batch padding), so the pooled
    # feature comes out already broadcast over timesteps.
    sel = jnp.zeros((BP, B), jnp.float32).at[jnp.arange(B), jnp.arange(B)].set(1.0)
    pool_one = jnp.kron(sel, jnp.ones((1, HW), jnp.float32) / HW)          # (BP, B*HW)
    pool_ext = jnp.tile(pool_one, (T, 1)).astype(jnp.bfloat16)             # (T*BP, B*HW)

    # ---- word embedding lookup (gather kept in JAX glue), time-major, B padded ----
    dec_ids = captions[:, :-1]
    emb = jnp.take(params["embedding"], dec_ids, axis=0)                   # (B, T, E)
    emb = jnp.transpose(emb, (1, 0, 2))                                    # (T, B, E)
    emb = jnp.pad(emb, ((0, 0), (0, BP - B), (0, 0))).reshape(T * BP, E).astype(jnp.float32)

    def pad_lanes(a, target):
        return jnp.pad(a, ((0, 0), (0, target - a.shape[-1])))

    g0, g1 = params["gru"]
    wih0 = pad_lanes(g0["w_ih"], GP).astype(jnp.bfloat16)                  # (E, GP)
    bih0 = pad_lanes(g0["b_ih"].reshape(1, -1), GP).astype(jnp.float32)
    # Fused recurrent weight [W_hh0 | W_ih1] and bias [b_hh0 | b_ih1].
    wf = jnp.concatenate([pad_lanes(g0["w_hh"], GP),
                          pad_lanes(g1["w_ih"], GP)], axis=1).astype(jnp.bfloat16)   # (H, 2GP)
    bfg = jnp.concatenate([pad_lanes(g0["b_hh"].reshape(1, -1), GP),
                           pad_lanes(g1["b_ih"].reshape(1, -1), GP)], axis=1).astype(jnp.float32)
    whh1 = pad_lanes(g1["w_hh"], GP).astype(jnp.bfloat16)
    bhh1 = pad_lanes(g1["b_hh"].reshape(1, -1), GP).astype(jnp.float32)
    ow = pad_lanes(params["out_w"], VP).astype(jnp.bfloat16)
    ob = pad_lanes(params["out_b"].reshape(1, -1), VP).astype(jnp.float32)

    chunk = 128 if BHW % 128 == 0 else BHW
    n_chunks = BHW // chunk

    vmem = pl.BlockSpec(memory_space=pltpu.MemorySpace.VMEM)
    out = pl.pallas_call(
        _make_fused_kernel(T, BP, Hd, GP, E, chunk, n_chunks),
        out_shape=jax.ShapeDtypeStruct((T * BP, VP), jnp.float32),
        in_specs=[vmem] * 13,
        out_specs=vmem,
        scratch_shapes=[pltpu.VMEM((T * BP, Hd), jnp.float32)],
    )(patches, pool_ext, wc, cb, emb, wih0, bih0, wf, bfg, whh1, bhh1, ow, ob)

    logits = out.reshape(T, BP, VP)[:, :B, :V].transpose(1, 0, 2)          # (B, T, V)
    return logits


if __name__ == "__main__":
    key = jax.random.PRNGKey(0)
    k_img, k_cap, k_par = jax.random.split(key, 3)

    images = jax.random.normal(k_img, (BATCH, IN_CH, IMG_HW, IMG_HW), jnp.float32)
    captions = jax.random.randint(k_cap, (BATCH, CAP_LEN), 0, VOCAB, dtype=jnp.int32)
    params = init_params(k_par)

    fwd = jax.jit(image_caption_forward)
    out = fwd(params, images, captions)
    jax.block_until_ready(out)

    assert out.shape == (BATCH, CAP_LEN - 1, VOCAB)
    assert bool(jnp.all(jnp.isfinite(out)))
    print("KERNEL_OK")
</pallas_src>

<mosaic_0001>
module attributes {stable_mosaic.version = 11 : i64} {
  func.func @kernel(%arg0: memref<512x27xbf16, #tpu.memory_space<vmem>>, %arg1: memref<56x512xbf16, #tpu.memory_space<vmem>>, %arg2: memref<27x32xbf16, #tpu.memory_space<vmem>>, %arg3: memref<1x32xf32, #tpu.memory_space<vmem>>, %arg4: memref<56x32xf32, #tpu.memory_space<vmem>>, %arg5: memref<32x128xbf16, #tpu.memory_space<vmem>>, %arg6: memref<1x128xf32, #tpu.memory_space<vmem>>, %arg7: memref<32x256xbf16, #tpu.memory_space<vmem>>, %arg8: memref<1x256xf32, #tpu.memory_space<vmem>>, %arg9: memref<32x128xbf16, #tpu.memory_space<vmem>>, %arg10: memref<1x128xf32, #tpu.memory_space<vmem>>, %arg11: memref<32x128xbf16, #tpu.memory_space<vmem>>, %arg12: memref<1x128xf32, #tpu.memory_space<vmem>>, %arg13: memref<56x128xf32, #tpu.memory_space<vmem>>, %arg14: memref<56x32xf32, #tpu.memory_space<vmem>>) attributes {dimension_semantics = [], scalar_prefetch = 0 : i64, scratch_operands = 1 : i64, tpu.core_type = #tpu.core_type<tc>} {
    %cst = arith.constant 0.000000e+00 : f32
    %0 = vector.broadcast %cst : f32 to vector<56x32xf32>
    %c0 = arith.constant 0 : index
    %c0_0 = arith.constant 0 : index
    %1 = vector.load %arg0[%c0, %c0_0] : memref<512x27xbf16, #tpu.memory_space<vmem>>, vector<128x27xbf16>
    %c0_1 = arith.constant 0 : index
    %c0_2 = arith.constant 0 : index
    %2 = vector.load %arg2[%c0_1, %c0_2] : memref<27x32xbf16, #tpu.memory_space<vmem>>, vector<27x32xbf16>
    %cst_3 = arith.constant dense<0.000000e+00> : vector<128x32xf32>
    %3 = tpu.matmul %1, %2, %cst_3 {dimension_numbers = #tpu.dot_dimension_numbers<[1], [0], [0], [1], [0, 0, 1, 1], [], []>} : vector<128x27xbf16>, vector<27x32xbf16>, vector<128x32xf32> -> vector<128x32xf32>
    %c0_4 = arith.constant 0 : index
    %c0_5 = arith.constant 0 : index
    %4 = vector.load %arg3[%c0_4, %c0_5] : memref<1x32xf32, #tpu.memory_space<vmem>>, vector<1x32xf32>
    %5 = vector.broadcast %4 : vector<1x32xf32> to vector<128x32xf32>
    %6 = arith.addf %3, %5 : vector<128x32xf32>
    %cst_6 = arith.constant 0.000000e+00 : f32
    %7 = vector.broadcast %cst_6 : f32 to vector<128x32xf32>
    %8 = arith.maximumf %6, %7 : vector<128x32xf32>
    %9 = arith.truncf %8 : vector<128x32xf32> to vector<128x32xbf16>
    %c0_7 = arith.constant 0 : index
    %c0_8 = arith.constant 0 : index
    %10 = vector.load %arg1[%c0_7, %c0_8] : memref<56x512xbf16, #tpu.memory_space<vmem>>, vector<56x128xbf16>
    %cst_9 = arith.constant dense<0.000000e+00> : vector<56x32xf32>
    %11 = tpu.matmul %10, %9, %cst_9 {dimension_numbers = #tpu.dot_dimension_numbers<[1], [0], [0], [1], [0, 0, 1, 1], [], []>} : vector<56x128xbf16>, vector<128x32xbf16>, vector<56x32xf32> -> vector<56x32xf32>
    %12 = arith.addf %0, %11 : vector<56x32xf32>
    %c128 = arith.constant 128 : index
    %c0_10 = arith.constant 0 : index
    %13 = vector.load %arg0[%c128, %c0_10] : memref<512x27xbf16, #tpu.memory_space<vmem>>, vector<128x27xbf16>
    %c0_11 = arith.constant 0 : index
    %c0_12 = arith.constant 0 : index
    %14 = vector.load %arg2[%c0_11, %c0_12] : memref<27x32xbf16, #tpu.memory_space<vmem>>, vector<27x32xbf16>
    %cst_13 = arith.constant dense<0.000000e+00> : vector<128x32xf32>
    %15 = tpu.matmul %13, %14, %cst_13 {dimension_numbers = #tpu.dot_dimension_numbers<[1], [0], [0], [1], [0, 0, 1, 1], [], []>} : vector<128x27xbf16>, vector<27x32xbf16>, vector<128x32xf32> -> vector<128x32xf32>
    %c0_14 = arith.constant 0 : index
    %c0_15 = arith.constant 0 : index
    %16 = vector.load %arg3[%c0_14, %c0_15] : memref<1x32xf32, #tpu.memory_space<vmem>>, vector<1x32xf32>
    %17 = vector.broadcast %16 : vector<1x32xf32> to vector<128x32xf32>
    %18 = arith.addf %15, %17 : vector<128x32xf32>
    %cst_16 = arith.constant 0.000000e+00 : f32
    %19 = vector.broadcast %cst_16 : f32 to vector<128x32xf32>
    %20 = arith.maximumf %18, %19 : vector<128x32xf32>
    %21 = arith.truncf %20 : vector<128x32xf32> to vector<128x32xbf16>
    %c0_17 = arith.constant 0 : index
    %c128_18 = arith.constant 128 : index
    %22 = vector.load %arg1[%c0_17, %c128_18] : memref<56x512xbf16, #tpu.memory_space<vmem>>, vector<56x128xbf16>
    %cst_19 = arith.constant dense<0.000000e+00> : vector<56x32xf32>
    %23 = tpu.matmul %22, %21, %cst_19 {dimension_numbers = #tpu.dot_dimension_numbers<[1], [0], [0], [1], [0, 0, 1, 1], [], []>} : vector<56x128xbf16>, vector<128x32xbf16>, vector<56x32xf32> -> vector<56x32xf32>
    %24 = arith.addf %12, %23 : vector<56x32xf32>
    %c256 = arith.constant 256 : index
    %c0_20 = arith.constant 0 : index
    %25 = vector.load %arg0[%c256, %c0_20] : memref<512x27xbf16, #tpu.memory_space<vmem>>, vector<128x27xbf16>
    %c0_21 = arith.constant 0 : index
    %c0_22 = arith.constant 0 : index
    %26 = vector.load %arg2[%c0_21, %c0_22] : memref<27x32xbf16, #tpu.memory_space<vmem>>, vector<27x32xbf16>
    %cst_23 = arith.constant dense<0.000000e+00> : vector<128x32xf32>
    %27 = tpu.matmul %25, %26, %cst_23 {dimension_numbers = #tpu.dot_dimension_numbers<[1], [0], [0], [1], [0, 0, 1, 1], [], []>} : vector<128x27xbf16>, vector<27x32xbf16>, vector<128x32xf32> -> vector<128x32xf32>
    %c0_24 = arith.constant 0 : index
    %c0_25 = arith.constant 0 : index
    %28 = vector.load %arg3[%c0_24, %c0_25] : memref<1x32xf32, #tpu.memory_space<vmem>>, vector<1x32xf32>
    %29 = vector.broadcast %28 : vector<1x32xf32> to vector<128x32xf32>
    %30 = arith.addf %27, %29 : vector<128x32xf32>
    %cst_26 = arith.constant 0.000000e+00 : f32
    %31 = vector.broadcast %cst_26 : f32 to vector<128x32xf32>
    %32 = arith.maximumf %30, %31 : vector<128x32xf32>
    %33 = arith.truncf %32 : vector<128x32xf32> to vector<128x32xbf16>
    %c0_27 = arith.constant 0 : index
    %c256_28 = arith.constant 256 : index
    %34 = vector.load %arg1[%c0_27, %c256_28] : memref<56x512xbf16, #tpu.memory_space<vmem>>, vector<56x128xbf16>
    %cst_29 = arith.constant dense<0.000000e+00> : vector<56x32xf32>
    %35 = tpu.matmul %34, %33, %cst_29 {dimension_numbers = #tpu.dot_dimension_numbers<[1], [0], [0], [1], [0, 0, 1, 1], [], []>} : vector<56x128xbf16>, vector<128x32xbf16>, vector<56x32xf32> -> vector<56x32xf32>
    %36 = arith.addf %24, %35 : vector<56x32xf32>
    %c384 = arith.constant 384 : index
    %c0_30 = arith.constant 0 : index
    %37 = vector.load %arg0[%c384, %c0_30] : memref<512x27xbf16, #tpu.memory_space<vmem>>, vector<128x27xbf16>
    %c0_31 = arith.constant 0 : index
    %c0_32 = arith.constant 0 : index
    %38 = vector.load %arg2[%c0_31, %c0_32] : memref<27x32xbf16, #tpu.memory_space<vmem>>, vector<27x32xbf16>
    %cst_33 = arith.constant dense<0.000000e+00> : vector<128x32xf32>
    %39 = tpu.matmul %37, %38, %cst_33 {dimension_numbers = #tpu.dot_dimension_numbers<[1], [0], [0], [1], [0, 0, 1, 1], [], []>} : vector<128x27xbf16>, vector<27x32xbf16>, vector<128x32xf32> -> vector<128x32xf32>
    %c0_34 = arith.constant 0 : index
    %c0_35 = arith.constant 0 : index
    %40 = vector.load %arg3[%c0_34, %c0_35] : memref<1x32xf32, #tpu.memory_space<vmem>>, vector<1x32xf32>
    %41 = vector.broadcast %40 : vector<1x32xf32> to vector<128x32xf32>
    %42 = arith.addf %39, %41 : vector<128x32xf32>
    %cst_36 = arith.constant 0.000000e+00 : f32
    %43 = vector.broadcast %cst_36 : f32 to vector<128x32xf32>
    %44 = arith.maximumf %42, %43 : vector<128x32xf32>
    %45 = arith.truncf %44 : vector<128x32xf32> to vector<128x32xbf16>
    %c0_37 = arith.constant 0 : index
    %c384_38 = arith.constant 384 : index
    %46 = vector.load %arg1[%c0_37, %c384_38] : memref<56x512xbf16, #tpu.memory_space<vmem>>, vector<56x128xbf16>
    %cst_39 = arith.constant dense<0.000000e+00> : vector<56x32xf32>
    %47 = tpu.matmul %46, %45, %cst_39 {dimension_numbers = #tpu.dot_dimension_numbers<[1], [0], [0], [1], [0, 0, 1, 1], [], []>} : vector<56x128xbf16>, vector<128x32xbf16>, vector<56x32xf32> -> vector<56x32xf32>
    %48 = arith.addf %36, %47 : vector<56x32xf32>
    %c0_40 = arith.constant 0 : index
    %c0_41 = arith.constant 0 : index
    %49 = vector.load %arg4[%c0_40, %c0_41] : memref<56x32xf32, #tpu.memory_space<vmem>>, vector<56x32xf32>
    %50 = arith.addf %49, %48 : vector<56x32xf32>
    %51 = arith.truncf %50 : vector<56x32xf32> to vector<56x32xbf16>
    %c0_42 = arith.constant 0 : index
    %c0_43 = arith.constant 0 : index
    %52 = vector.load %arg5[%c0_42, %c0_43] : memref<32x128xbf16, #tpu.memory_space<vmem>>, vector<32x128xbf16>
    %cst_44 = arith.constant dense<0.000000e+00> : vector<56x128xf32>
    %53 = tpu.matmul %51, %52, %cst_44 {dimension_numbers = #tpu.dot_dimension_numbers<[1], [0], [0], [1], [0, 0, 1, 1], [], []>} : vector<56x32xbf16>, vector<32x128xbf16>, vector<56x128xf32> -> vector<56x128xf32>
    %c0_45 = arith.constant 0 : index
    %c0_46 = arith.constant 0 : index
    %54 = vector.load %arg6[%c0_45, %c0_46] : memref<1x128xf32, #tpu.memory_space<vmem>>, vector<1x128xf32>
    %55 = vector.broadcast %54 : vector<1x128xf32> to vector<56x128xf32>
    %56 = arith.addf %53, %55 : vector<56x128xf32>
    %c0_47 = arith.constant 0 : index
    %c0_48 = arith.constant 0 : index
    %57 = vector.load %arg7[%c0_47, %c0_48] : memref<32x256xbf16, #tpu.memory_space<vmem>>, vector<32x256xbf16>
    %c0_49 = arith.constant 0 : index
    %c0_50 = arith.constant 0 : index
    %58 = vector.load %arg8[%c0_49, %c0_50] : memref<1x256xf32, #tpu.memory_space<vmem>>, vector<1x256xf32>
    %c0_51 = arith.constant 0 : index
    %c0_52 = arith.constant 0 : index
    %59 = vector.load %arg9[%c0_51, %c0_52] : memref<32x128xbf16, #tpu.memory_space<vmem>>, vector<32x128xbf16>
    %c0_53 = arith.constant 0 : index
    %c0_54 = arith.constant 0 : index
    %60 = vector.load %arg10[%c0_53, %c0_54] : memref<1x128xf32, #tpu.memory_space<vmem>>, vector<1x128xf32>
    %cst_55 = arith.constant 0.000000e+00 : f32
    %61 = vector.broadcast %cst_55 : f32 to vector<8x32xf32>
    %cst_56 = arith.constant 0.000000e+00 : f32
    %62 = vector.broadcast %cst_56 : f32 to vector<8x32xf32>
    %63 = vector.extract_strided_slice %58 {offsets = [0, 0], sizes = [1, 128], strides = [1, 1]} : vector<1x256xf32> to vector<1x128xf32>
    %64 = vector.extract_strided_slice %56 {offsets = [0, 0], sizes = [8, 128], strides = [1, 1]} : vector<56x128xf32> to vector<8x128xf32>
    %65 = vector.extract_strided_slice %64 {offsets = [0, 0], sizes = [8, 32], strides = [1, 1]} : vector<8x128xf32> to vector<8x32xf32>
    %66 = vector.extract_strided_slice %63 {offsets = [0, 0], sizes = [1, 32], strides = [1, 1]} : vector<1x128xf32> to vector<1x32xf32>
    %67 = vector.broadcast %66 : vector<1x32xf32> to vector<8x32xf32>
    %68 = arith.addf %65, %67 : vector<8x32xf32>
    %69 = arith.negf %68 : vector<8x32xf32>
    %70 = math.exp %69 : vector<8x32xf32>
    %cst_57 = arith.constant 1.000000e+00 : f32
    %71 = vector.broadcast %cst_57 : f32 to vector<8x32xf32>
    %72 = arith.addf %71, %70 : vector<8x32xf32>
    %73 = arith.divf %71, %72 : vector<8x32xf32>
    %74 = vector.extract_strided_slice %64 {offsets = [0, 32], sizes = [8, 32], strides = [1, 1]} : vector<8x128xf32> to vector<8x32xf32>
    %75 = vector.extract_strided_slice %63 {offsets = [0, 32], sizes = [1, 32], strides = [1, 1]} : vector<1x128xf32> to vector<1x32xf32>
    %76 = vector.broadcast %75 : vector<1x32xf32> to vector<8x32xf32>
    %77 = arith.addf %74, %76 : vector<8x32xf32>
    %78 = arith.negf %77 : vector<8x32xf32>
    %79 = math.exp %78 : vector<8x32xf32>
    %cst_58 = arith.constant 1.000000e+00 : f32
    %80 = vector.broadcast %cst_58 : f32 to vector<8x32xf32>
    %81 = arith.addf %80, %79 : vector<8x32xf32>
    %82 = arith.divf %80, %81 : vector<8x32xf32>
    %83 = vector.extract_strided_slice %64 {offsets = [0, 64], sizes = [8, 32], strides = [1, 1]} : vector<8x128xf32> to vector<8x32xf32>
    %84 = vector.extract_strided_slice %63 {offsets = [0, 64], sizes = [1, 32], strides = [1, 1]} : vector<1x128xf32> to vector<1x32xf32>
    %85 = vector.broadcast %84 : vector<1x32xf32> to vector<8x32xf32>
    %86 = arith.mulf %73, %85 : vector<8x32xf32>
    %87 = arith.addf %83, %86 : vector<8x32xf32>
    %88 = math.tanh %87 : vector<8x32xf32>
    %cst_59 = arith.constant 1.000000e+00 : f32
    %89 = vector.broadcast %cst_59 : f32 to vector<8x32xf32>
    %90 = arith.subf %89, %82 : vector<8x32xf32>
    %91 = arith.mulf %90, %88 : vector<8x32xf32>
    %92 = arith.mulf %82, %61 : vector<8x32xf32>
    %93 = arith.addf %91, %92 : vector<8x32xf32>
    %94 = arith.truncf %93 : vector<8x32xf32> to vector<8x32xbf16>
    %cst_60 = arith.constant dense<0.000000e+00> : vector<8x256xf32>
    %95 = tpu.matmul %94, %57, %cst_60 {dimension_numbers = #tpu.dot_dimension_numbers<[1], [0], [0], [1], [0, 0, 1, 1], [], []>} : vector<8x32xbf16>, vector<32x256xbf16>, vector<8x256xf32> -> vector<8x256xf32>
    %96 = vector.broadcast %58 : vector<1x256xf32> to vector<8x256xf32>
    %97 = arith.addf %95, %96 : vector<8x256xf32>
    %98 = vector.extract_strided_slice %97 {offsets = [0, 128], sizes = [8, 128], strides = [1, 1]} : vector<8x256xf32> to vector<8x128xf32>
    %99 = vector.extract_strided_slice %98 {offsets = [0, 0], sizes = [8, 32], strides = [1, 1]} : vector<8x128xf32> to vector<8x32xf32>
    %100 = vector.extract_strided_slice %60 {offsets = [0, 0], sizes = [1, 32], strides = [1, 1]} : vector<1x128xf32> to vector<1x32xf32>
    %101 = vector.broadcast %100 : vector<1x32xf32> to vector<8x32xf32>
    %102 = arith.addf %99, %101 : vector<8x32xf32>
    %103 = arith.negf %102 : vector<8x32xf32>
    %104 = math.exp %103 : vector<8x32xf32>
    %cst_61 = arith.constant 1.000000e+00 : f32
    %105 = vector.broadcast %cst_61 : f32 to vector<8x32xf32>
    %106 = arith.addf %105, %104 : vector<8x32xf32>
    %107 = arith.divf %105, %106 : vector<8x32xf32>
    %108 = vector.extract_strided_slice %98 {offsets = [0, 32], sizes = [8, 32], strides = [1, 1]} : vector<8x128xf32> to vector<8x32xf32>
    %109 = vector.extract_strided_slice %60 {offsets = [0, 32], sizes = [1, 32], strides = [1, 1]} : vector<1x128xf32> to vector<1x32xf32>
    %110 = vector.broadcast %109 : vector<1x32xf32> to vector<8x32xf32>
    %111 = arith.addf %108, %110 : vector<8x32xf32>
    %112 = arith.negf %111 : vector<8x32xf32>
    %113 = math.exp %112 : vector<8x32xf32>
    %cst_62 = arith.constant 1.000000e+00 : f32
    %114 = vector.broadcast %cst_62 : f32 to vector<8x32xf32>
    %115 = arith.addf %114, %113 : vector<8x32xf32>
    %116 = arith.divf %114, %115 : vector<8x32xf32>
    %117 = vector.extract_strided_slice %98 {offsets = [0, 64], sizes = [8, 32], strides = [1, 1]} : vector<8x128xf32> to vector<8x32xf32>
    %118 = vector.extract_strided_slice %60 {offsets = [0, 64], sizes = [1, 32], strides = [1, 1]} : vector<1x128xf32> to vector<1x32xf32>
    %119 = vector.broadcast %118 : vector<1x32xf32> to vector<8x32xf32>
    %120 = arith.mulf %107, %119 : vector<8x32xf32>
    %121 = arith.addf %117, %120 : vector<8x32xf32>
    %122 = math.tanh %121 : vector<8x32xf32>
    %cst_63 = arith.constant 1.000000e+00 : f32
    %123 = vector.broadcast %cst_63 : f32 to vector<8x32xf32>
    %124 = arith.subf %123, %116 : vector<8x32xf32>
    %125 = arith.mulf %124, %122 : vector<8x32xf32>
    %126 = arith.mulf %116, %62 : vector<8x32xf32>
    %127 = arith.addf %125, %126 : vector<8x32xf32>
    %c0_64 = arith.constant 0 : index
    %c0_65 = arith.constant 0 : index
    %128 = vector.load %arg14[%c0_64, %c0_65] : memref<56x32xf32, #tpu.memory_space<vmem>>, vector<8x32xf32>
    tpu.vector_store %arg14[%c0_64, %c0_65], %127 {strides = array<i32>} : memref<56x32xf32, #tpu.memory_space<vmem>>, vector<8x32xf32>,
    %129 = vector.extract_strided_slice %97 {offsets = [0, 0], sizes = [8, 128], strides = [1, 1]} : vector<8x256xf32> to vector<8x128xf32>
    %130 = vector.extract_strided_slice %56 {offsets = [8, 0], sizes = [8, 128], strides = [1, 1]} : vector<56x128xf32> to vector<8x128xf32>
    %131 = vector.extract_strided_slice %130 {offsets = [0, 0], sizes = [8, 32], strides = [1, 1]} : vector<8x128xf32> to vector<8x32xf32>
    %132 = vector.extract_strided_slice %129 {offsets = [0, 0], sizes = [8, 32], strides = [1, 1]} : vector<8x128xf32> to vector<8x32xf32>
    %133 = arith.addf %131, %132 : vector<8x32xf32>
    %134 = arith.negf %133 : vector<8x32xf32>
    %135 = math.exp %134 : vector<8x32xf32>
    %cst_66 = arith.constant 1.000000e+00 : f32
    %136 = vector.broadcast %cst_66 : f32 to vector<8x32xf32>
    %137 = arith.addf %136, %135 : vector<8x32xf32>
    %138 = arith.divf %136, %137 : vector<8x32xf32>
    %139 = vector.extract_strided_slice %130 {offsets = [0, 32], sizes = [8, 32], strides = [1, 1]} : vector<8x128xf32> to vector<8x32xf32>
    %140 = vector.extract_strided_slice %129 {offsets = [0, 32], sizes = [8, 32], strides = [1, 1]} : vector<8x128xf32> to vector<8x32xf32>
    %141 = arith.addf %139, %140 : vector<8x32xf32>
    %142 = arith.negf %141 : vector<8x32xf32>
    %143 = math.exp %142 : vector<8x32xf32>
    %cst_67 = arith.constant 1.000000e+00 : f32
    %144 = vector.broadcast %cst_67 : f32 to vector<8x32xf32>
    %145 = arith.addf %144, %143 : vector<8x32xf32>
    %146 = arith.divf %144, %145 : vector<8x32xf32>
    %147 = vector.extract_strided_slice %130 {offsets = [0, 64], sizes = [8, 32], strides = [1, 1]} : vector<8x128xf32> to vector<8x32xf32>
    %148 = vector.extract_strided_slice %129 {offsets = [0, 64], sizes = [8, 32], strides = [1, 1]} : vector<8x128xf32> to vector<8x32xf32>
    %149 = arith.mulf %138, %148 : vector<8x32xf32>
    %150 = arith.addf %147, %149 : vector<8x32xf32>
    %151 = math.tanh %150 : vector<8x32xf32>
    %cst_68 = arith.constant 1.000000e+00 : f32
    %152 = vector.broadcast %cst_68 : f32 to vector<8x32xf32>
    %153 = arith.subf %152, %146 : vector<8x32xf32>
    %154 = arith.mulf %153, %151 : vector<8x32xf32>
    %155 = arith.mulf %146, %93 : vector<8x32xf32>
    %156 = arith.addf %154, %155 : vector<8x32xf32>
    %157 = arith.truncf %156 : vector<8x32xf32> to vector<8x32xbf16>
    %cst_69 = arith.constant dense<0.000000e+00> : vector<8x256xf32>
    %158 = tpu.matmul %157, %57, %cst_69 {dimension_numbers = #tpu.dot_dimension_numbers<[1], [0], [0], [1], [0, 0, 1, 1], [], []>} : vector<8x32xbf16>, vector<32x256xbf16>, vector<8x256xf32> -> vector<8x256xf32>
    %159 = vector.broadcast %58 : vector<1x256xf32> to vector<8x256xf32>
    %160 = arith.addf %158, %159 : vector<8x256xf32>
    %161 = arith.truncf %127 : vector<8x32xf32> to vector<8x32xbf16>
    %cst_70 = arith.constant dense<0.000000e+00> : vector<8x128xf32>
    %162 = tpu.matmul %161, %59, %cst_70 {dimension_numbers = #tpu.dot_dimension_numbers<[1], [0], [0], [1], [0, 0, 1, 1], [], []>} : vector<8x32xbf16>, vector<32x128xbf16>, vector<8x128xf32> -> vector<8x128xf32>
    %163 = vector.broadcast %60 : vector<1x128xf32> to vector<8x128xf32>
    %164 = arith.addf %162, %163 : vector<8x128xf32>
    %165 = vector.extract_strided_slice %160 {offsets = [0, 128], sizes = [8, 128], strides = [1, 1]} : vector<8x256xf32> to vector<8x128xf32>
    %166 = vector.extract_strided_slice %165 {offsets = [0, 0], sizes = [8, 32], strides = [1, 1]} : vector<8x128xf32> to vector<8x32xf32>
    %167 = vector.extract_strided_slice %164 {offsets = [0, 0], sizes = [8, 32], strides = [1, 1]} : vector<8x128xf32> to vector<8x32xf32>
    %168 = arith.addf %166, %167 : vector<8x32xf32>
    %169 = arith.negf %168 : vector<8x32xf32>
    %170 = math.exp %169 : vector<8x32xf32>
    %cst_71 = arith.constant 1.000000e+00 : f32
    %171 = vector.broadcast %cst_71 : f32 to vector<8x32xf32>
    %172 = arith.addf %171, %170 : vector<8x32xf32>
    %173 = arith.divf %171, %172 : vector<8x32xf32>
    %174 = vector.extract_strided_slice %165 {offsets = [0, 32], sizes = [8, 32], strides = [1, 1]} : vector<8x128xf32> to vector<8x32xf32>
    %175 = vector.extract_strided_slice %164 {offsets = [0, 32], sizes = [8, 32], strides = [1, 1]} : vector<8x128xf32> to vector<8x32xf32>
    %176 = arith.addf %174, %175 : vector<8x32xf32>
    %177 = arith.negf %176 : vector<8x32xf32>
    %178 = math.exp %177 : vector<8x32xf32>
    %cst_72 = arith.constant 1.000000e+00 : f32
    %179 = vector.broadcast %cst_72 : f32 to vector<8x32xf32>
    %180 = arith.addf %179, %178 : vector<8x32xf32>
    %181 = arith.divf %179, %180 : vector<8x32xf32>
    %182 = vector.extract_strided_slice %165 {offsets = [0, 64], sizes = [8, 32], strides = [1, 1]} : vector<8x128xf32> to vector<8x32xf32>
    %183 = vector.extract_strided_slice %164 {offsets = [0, 64], sizes = [8, 32], strides = [1, 1]} : vector<8x128xf32> to vector<8x32xf32>
    %184 = arith.mulf %173, %183 : vector<8x32xf32>
    %185 = arith.addf %182, %184 : vector<8x32xf32>
    %186 = math.tanh %185 : vector<8x32xf32>
    %cst_73 = arith.constant 1.000000e+00 : f32
    %187 = vector.broadcast %cst_73 : f32 to vector<8x32xf32>
    %188 = arith.subf %187, %181 : vector<8x32xf32>
    %189 = arith.mulf %188, %186 : vector<8x32xf32>
    %190 = arith.mulf %181, %127 : vector<8x32xf32>
    %191 = arith.addf %189, %190 : vector<8x32xf32>
    %c8 = arith.constant 8 : index
    %c0_74 = arith.constant 0 : index
    %192 = vector.load %arg14[%c8, %c0_74] : memref<56x32xf32, #tpu.memory_space<vmem>>, vector<8x32xf32>
    tpu.vector_store %arg14[%c8, %c0_74], %191 {strides = array<i32>} : memref<56x32xf32, #tpu.memory_space<vmem>>, vector<8x32xf32>,
    %193 = vector.extract_strided_slice %160 {offsets = [0, 0], sizes = [8, 128], strides = [1, 1]} : vector<8x256xf32> to vector<8x128xf32>
    %194 = vector.extract_strided_slice %56 {offsets = [16, 0], sizes = [8, 128], strides = [1, 1]} : vector<56x128xf32> to vector<8x128xf32>
    %195 = vector.extract_strided_slice %194 {offsets = [0, 0], sizes = [8, 32], strides = [1, 1]} : vector<8x128xf32> to vector<8x32xf32>
    %196 = vector.extract_strided_slice %193 {offsets = [0, 0], sizes = [8, 32], strides = [1, 1]} : vector<8x128xf32> to vector<8x32xf32>
    %197 = arith.addf %195, %196 : vector<8x32xf32>
    %198 = arith.negf %197 : vector<8x32xf32>
    %199 = math.exp %198 : vector<8x32xf32>
    %cst_75 = arith.constant 1.000000e+00 : f32
    %200 = vector.broadcast %cst_75 : f32 to vector<8x32xf32>
    %201 = arith.addf %200, %199 : vector<8x32xf32>
    %202 = arith.divf %200, %201 : vector<8x32xf32>
    %203 = vector.extract_strided_slice %194 {offsets = [0, 32], sizes = [8, 32], strides = [1, 1]} : vector<8x128xf32> to vector<8x32xf32>
    %204 = vector.extract_strided_slice %193 {offsets = [0, 32], sizes = [8, 32], strides = [1, 1]} : vector<8x128xf32> to vector<8x32xf32>
    %205 = arith.addf %203, %204 : vector<8x32xf32>
    %206 = arith.negf %205 : vector<8x32xf32>
    %207 = math.exp %206 : vector<8x32xf32>
    %cst_76 = arith.constant 1.000000e+00 : f32
    %208 = vector.broadcast %cst_76 : f32 to vector<8x32xf32>
    %209 = arith.addf %208, %207 : vector<8x32xf32>
    %210 = arith.divf %208, %209 : vector<8x32xf32>
    %211 = vector.extract_strided_slice %194 {offsets = [0, 64], sizes = [8, 32], strides = [1, 1]} : vector<8x128xf32> to vector<8x32xf32>
    %212 = vector.extract_strided_slice %193 {offsets = [0, 64], sizes = [8, 32], strides = [1, 1]} : vector<8x128xf32> to vector<8x32xf32>
    %213 = arith.mulf %202, %212 : vector<8x32xf32>
    %214 = arith.addf %211, %213 : vector<8x32xf32>
    %215 = math.tanh %214 : vector<8x32xf32>
    %cst_77 = arith.constant 1.000000e+00 : f32
    %216 = vector.broadcast %cst_77 : f32 to vector<8x32xf32>
    %217 = arith.subf %216, %210 : vector<8x32xf32>
    %218 = arith.mulf %217, %215 : vector<8x32xf32>
    %219 = arith.mulf %210, %156 : vector<8x32xf32>
    %220 = arith.addf %218, %219 : vector<8x32xf32>
    %221 = arith.truncf %220 : vector<8x32xf32> to vector<8x32xbf16>
    %cst_78 = arith.constant dense<0.000000e+00> : vector<8x256xf32>
    %222 = tpu.matmul %221, %57, %cst_78 {dimension_numbers = #tpu.dot_dimension_numbers<[1], [0], [0], [1], [0, 0, 1, 1], [], []>} : vector<8x32xbf16>, vector<32x256xbf16>, vector<8x256xf32> -> vector<8x256xf32>
    %223 = vector.broadcast %58 : vector<1x256xf32> to vector<8x256xf32>
    %224 = arith.addf %222, %223 : vector<8x256xf32>
    %225 = arith.truncf %191 : vector<8x32xf32> to vector<8x32xbf16>
    %cst_79 = arith.constant dense<0.000000e+00> : vector<8x128xf32>
    %226 = tpu.matmul %225, %59, %cst_79 {dimension_numbers = #tpu.dot_dimension_numbers<[1], [0], [0], [1], [0, 0, 1, 1], [], []>} : vector<8x32xbf16>, vector<32x128xbf16>, vector<8x128xf32> -> vector<8x128xf32>
    %227 = vector.broadcast %60 : vector<1x128xf32> to vector<8x128xf32>
    %228 = arith.addf %226, %227 : vector<8x128xf32>
    %229 = vector.extract_strided_slice %224 {offsets = [0, 128], sizes = [8, 128], strides = [1, 1]} : vector<8x256xf32> to vector<8x128xf32>
    %230 = vector.extract_strided_slice %229 {offsets = [0, 0], sizes = [8, 32], strides = [1, 1]} : vector<8x128xf32> to vector<8x32xf32>
    %231 = vector.extract_strided_slice %228 {offsets = [0, 0], sizes = [8, 32], strides = [1, 1]} : vector<8x128xf32> to vector<8x32xf32>
    %232 = arith.addf %230, %231 : vector<8x32xf32>
    %233 = arith.negf %232 : vector<8x32xf32>
    %234 = math.exp %233 : vector<8x32xf32>
    %cst_80 = arith.constant 1.000000e+00 : f32
    %235 = vector.broadcast %cst_80 : f32 to vector<8x32xf32>
    %236 = arith.addf %235, %234 : vector<8x32xf32>
    %237 = arith.divf %235, %236 : vector<8x32xf32>
    %238 = vector.extract_strided_slice %229 {offsets = [0, 32], sizes = [8, 32], strides = [1, 1]} : vector<8x128xf32> to vector<8x32xf32>
    %239 = vector.extract_strided_slice %228 {offsets = [0, 32], sizes = [8, 32], strides = [1, 1]} : vector<8x128xf32> to vector<8x32xf32>
    %240 = arith.addf %238, %239 : vector<8x32xf32>
    %241 = arith.negf %240 : vector<8x32xf32>
    %242 = math.exp %241 : vector<8x32xf32>
    %cst_81 = arith.constant 1.000000e+00 : f32
    %243 = vector.broadcast %cst_81 : f32 to vector<8x32xf32>
    %244 = arith.addf %243, %242 : vector<8x32xf32>
    %245 = arith.divf %243, %244 : vector<8x32xf32>
    %246 = vector.extract_strided_slice %229 {offsets = [0, 64], sizes = [8, 32], strides = [1, 1]} : vector<8x128xf32> to vector<8x32xf32>
    %247 = vector.extract_strided_slice %228 {offsets = [0, 64], sizes = [8, 32], strides = [1, 1]} : vector<8x128xf32> to vector<8x32xf32>
    %248 = arith.mulf %237, %247 : vector<8x32xf32>
    %249 = arith.addf %246, %248 : vector<8x32xf32>
    %250 = math.tanh %249 : vector<8x32xf32>
    %cst_82 = arith.constant 1.000000e+00 : f32
    %251 = vector.broadcast %cst_82 : f32 to vector<8x32xf32>
    %252 = arith.subf %251, %245 : vector<8x32xf32>
    %253 = arith.mulf %252, %250 : vector<8x32xf32>
    %254 = arith.mulf %245, %191 : vector<8x32xf32>
    %255 = arith.addf %253, %254 : vector<8x32xf32>
    %c16 = arith.constant 16 : index
    %c0_83 = arith.constant 0 : index
    %256 = vector.load %arg14[%c16, %c0_83] : memref<56x32xf32, #tpu.memory_space<vmem>>, vector<8x32xf32>
    tpu.vector_store %arg14[%c16, %c0_83], %255 {strides = array<i32>} : memref<56x32xf32, #tpu.memory_space<vmem>>, vector<8x32xf32>,
    %257 = vector.extract_strided_slice %224 {offsets = [0, 0], sizes = [8, 128], strides = [1, 1]} : vector<8x256xf32> to vector<8x128xf32>
    %258 = vector.extract_strided_slice %56 {offsets = [24, 0], sizes = [8, 128], strides = [1, 1]} : vector<56x128xf32> to vector<8x128xf32>
    %259 = vector.extract_strided_slice %258 {offsets = [0, 0], sizes = [8, 32], strides = [1, 1]} : vector<8x128xf32> to vector<8x32xf32>
    %260 = vector.extract_strided_slice %257 {offsets = [0, 0], sizes = [8, 32], strides = [1, 1]} : vector<8x128xf32> to vector<8x32xf32>
    %261 = arith.addf %259, %260 : vector<8x32xf32>
    %262 = arith.negf %261 : vector<8x32xf32>
    %263 = math.exp %262 : vector<8x32xf32>
    %cst_84 = arith.constant 1.000000e+00 : f32
    %264 = vector.broadcast %cst_84 : f32 to vector<8x32xf32>
    %265 = arith.addf %264, %263 : vector<8x32xf32>
    %266 = arith.divf %264, %265 : vector<8x32xf32>
    %267 = vector.extract_strided_slice %258 {offsets = [0, 32], sizes = [8, 32], strides = [1, 1]} : vector<8x128xf32> to vector<8x32xf32>
    %268 = vector.extract_strided_slice %257 {offsets = [0, 32], sizes = [8, 32], strides = [1, 1]} : vector<8x128xf32> to vector<8x32xf32>
    %269 = arith.addf %267, %268 : vector<8x32xf32>
    %270 = arith.negf %269 : vector<8x32xf32>
    %271 = math.exp %270 : vector<8x32xf32>
    %cst_85 = arith.constant 1.000000e+00 : f32
    %272 = vector.broadcast %cst_85 : f32 to vector<8x32xf32>
    %273 = arith.addf %272, %271 : vector<8x32xf32>
    %274 = arith.divf %272, %273 : vector<8x32xf32>
    %275 = vector.extract_strided_slice %258 {offsets = [0, 64], sizes = [8, 32], strides = [1, 1]} : vector<8x128xf32> to vector<8x32xf32>
    %276 = vector.extract_strided_slice %257 {offsets = [0, 64], sizes = [8, 32], strides = [1, 1]} : vector<8x128xf32> to vector<8x32xf32>
    %277 = arith.mulf %266, %276 : vector<8x32xf32>
    %278 = arith.addf %275, %277 : vector<8x32xf32>
    %279 = math.tanh %278 : vector<8x32xf32>
    %cst_86 = arith.constant 1.000000e+00 : f32
    %280 = vector.broadcast %cst_86 : f32 to vector<8x32xf32>
    %281 = arith.subf %280, %274 : vector<8x32xf32>
    %282 = arith.mulf %281, %279 : vector<8x32xf32>
    %283 = arith.mulf %274, %220 : vector<8x32xf32>
    %284 = arith.addf %282, %283 : vector<8x32xf32>
    %285 = arith.truncf %284 : vector<8x32xf32> to vector<8x32xbf16>
    %cst_87 = arith.constant dense<0.000000e+00> : vector<8x256xf32>
    %286 = tpu.matmul %285, %57, %cst_87 {dimension_numbers = #tpu.dot_dimension_numbers<[1], [0], [0], [1], [0, 0, 1, 1], [], []>} : vector<8x32xbf16>, vector<32x256xbf16>, vector<8x256xf32> -> vector<8x256xf32>
    %287 = vector.broadcast %58 : vector<1x256xf32> to vector<8x256xf32>
    %288 = arith.addf %286, %287 : vector<8x256xf32>
    %289 = arith.truncf %255 : vector<8x32xf32> to vector<8x32xbf16>
    %cst_88 = arith.constant dense<0.000000e+00> : vector<8x128xf32>
    %290 = tpu.matmul %289, %59, %cst_88 {dimension_numbers = #tpu.dot_dimension_numbers<[1], [0], [0], [1], [0, 0, 1, 1], [], []>} : vector<8x32xbf16>, vector<32x128xbf16>, vector<8x128xf32> -> vector<8x128xf32>
    %291 = vector.broadcast %60 : vector<1x128xf32> to vector<8x128xf32>
    %292 = arith.addf %290, %291 : vector<8x128xf32>
    %293 = vector.extract_strided_slice %288 {offsets = [0, 128], sizes = [8, 128], strides = [1, 1]} : vector<8x256xf32> to vector<8x128xf32>
    %294 = vector.extract_strided_slice %293 {offsets = [0, 0], sizes = [8, 32], strides = [1, 1]} : vector<8x128xf32> to vector<8x32xf32>
    %295 = vector.extract_strided_slice %292 {offsets = [0, 0], sizes = [8, 32], strides = [1, 1]} : vector<8x128xf32> to vector<8x32xf32>
    %296 = arith.addf %294, %295 : vector<8x32xf32>
    %297 = arith.negf %296 : vector<8x32xf32>
    %298 = math.exp %297 : vector<8x32xf32>
    %cst_89 = arith.constant 1.000000e+00 : f32
    %299 = vector.broadcast %cst_89 : f32 to vector<8x32xf32>
    %300 = arith.addf %299, %298 : vector<8x32xf32>
    %301 = arith.divf %299, %300 : vector<8x32xf32>
    %302 = vector.extract_strided_slice %293 {offsets = [0, 32], sizes = [8, 32], strides = [1, 1]} : vector<8x128xf32> to vector<8x32xf32>
    %303 = vector.extract_strided_slice %292 {offsets = [0, 32], sizes = [8, 32], strides = [1, 1]} : vector<8x128xf32> to vector<8x32xf32>
    %304 = arith.addf %302, %303 : vector<8x32xf32>
    %305 = arith.negf %304 : vector<8x32xf32>
    %306 = math.exp %305 : vector<8x32xf32>
    %cst_90 = arith.constant 1.000000e+00 : f32
    %307 = vector.broadcast %cst_90 : f32 to vector<8x32xf32>
    %308 = arith.addf %307, %306 : vector<8x32xf32>
    %309 = arith.divf %307, %308 : vector<8x32xf32>
    %310 = vector.extract_strided_slice %293 {offsets = [0, 64], sizes = [8, 32], strides = [1, 1]} : vector<8x128xf32> to vector<8x32xf32>
    %311 = vector.extract_strided_slice %292 {offsets = [0, 64], sizes = [8, 32], strides = [1, 1]} : vector<8x128xf32> to vector<8x32xf32>
    %312 = arith.mulf %301, %311 : vector<8x32xf32>
    %313 = arith.addf %310, %312 : vector<8x32xf32>
    %314 = math.tanh %313 : vector<8x32xf32>
    %cst_91 = arith.constant 1.000000e+00 : f32
    %315 = vector.broadcast %cst_91 : f32 to vector<8x32xf32>
    %316 = arith.subf %315, %309 : vector<8x32xf32>
    %317 = arith.mulf %316, %314 : vector<8x32xf32>
    %318 = arith.mulf %309, %255 : vector<8x32xf32>
    %319 = arith.addf %317, %318 : vector<8x32xf32>
    %c24 = arith.constant 24 : index
    %c0_92 = arith.constant 0 : index
    %320 = vector.load %arg14[%c24, %c0_92] : memref<56x32xf32, #tpu.memory_space<vmem>>, vector<8x32xf32>
    tpu.vector_store %arg14[%c24, %c0_92], %319 {strides = array<i32>} : memref<56x32xf32, #tpu.memory_space<vmem>>, vector<8x32xf32>,
    %321 = vector.extract_strided_slice %288 {offsets = [0, 0], sizes = [8, 128], strides = [1, 1]} : vector<8x256xf32> to vector<8x128xf32>
    %322 = vector.extract_strided_slice %56 {offsets = [32, 0], sizes = [8, 128], strides = [1, 1]} : vector<56x128xf32> to vector<8x128xf32>
    %323 = vector.extract_strided_slice %322 {offsets = [0, 0], sizes = [8, 32], strides = [1, 1]} : vector<8x128xf32> to vector<8x32xf32>
    %324 = vector.extract_strided_slice %321 {offsets = [0, 0], sizes = [8, 32], strides = [1, 1]} : vector<8x128xf32> to vector<8x32xf32>
    %325 = arith.addf %323, %324 : vector<8x32xf32>
    %326 = arith.negf %325 : vector<8x32xf32>
    %327 = math.exp %326 : vector<8x32xf32>
    %cst_93 = arith.constant 1.000000e+00 : f32
    %328 = vector.broadcast %cst_93 : f32 to vector<8x32xf32>
    %329 = arith.addf %328, %327 : vector<8x32xf32>
    %330 = arith.divf %328, %329 : vector<8x32xf32>
    %331 = vector.extract_strided_slice %322 {offsets = [0, 32], sizes = [8, 32], strides = [1, 1]} : vector<8x128xf32> to vector<8x32xf32>
    %332 = vector.extract_strided_slice %321 {offsets = [0, 32], sizes = [8, 32], strides = [1, 1]} : vector<8x128xf32> to vector<8x32xf32>
    %333 = arith.addf %331, %332 : vector<8x32xf32>
    %334 = arith.negf %333 : vector<8x32xf32>
    %335 = math.exp %334 : vector<8x32xf32>
    %cst_94 = arith.constant 1.000000e+00 : f32
    %336 = vector.broadcast %cst_94 : f32 to vector<8x32xf32>
    %337 = arith.addf %336, %335 : vector<8x32xf32>
    %338 = arith.divf %336, %337 : vector<8x32xf32>
    %339 = vector.extract_strided_slice %322 {offsets = [0, 64], sizes = [8, 32], strides = [1, 1]} : vector<8x128xf32> to vector<8x32xf32>
    %340 = vector.extract_strided_slice %321 {offsets = [0, 64], sizes = [8, 32], strides = [1, 1]} : vector<8x128xf32> to vector<8x32xf32>
    %341 = arith.mulf %330, %340 : vector<8x32xf32>
    %342 = arith.addf %339, %341 : vector<8x32xf32>
    %343 = math.tanh %342 : vector<8x32xf32>
    %cst_95 = arith.constant 1.000000e+00 : f32
    %344 = vector.broadcast %cst_95 : f32 to vector<8x32xf32>
    %345 = arith.subf %344, %338 : vector<8x32xf32>
    %346 = arith.mulf %345, %343 : vector<8x32xf32>
    %347 = arith.mulf %338, %284 : vector<8x32xf32>
    %348 = arith.addf %346, %347 : vector<8x32xf32>
    %349 = arith.truncf %348 : vector<8x32xf32> to vector<8x32xbf16>
    %cst_96 = arith.constant dense<0.000000e+00> : vector<8x256xf32>
    %350 = tpu.matmul %349, %57, %cst_96 {dimension_numbers = #tpu.dot_dimension_numbers<[1], [0], [0], [1], [0, 0, 1, 1], [], []>} : vector<8x32xbf16>, vector<32x256xbf16>, vector<8x256xf32> -> vector<8x256xf32>
    %351 = vector.broadcast %58 : vector<1x256xf32> to vector<8x256xf32>
    %352 = arith.addf %350, %351 : vector<8x256xf32>
    %353 = arith.truncf %319 : vector<8x32xf32> to vector<8x32xbf16>
    %cst_97 = arith.constant dense<0.000000e+00> : vector<8x128xf32>
    %354 = tpu.matmul %353, %59, %cst_97 {dimension_numbers = #tpu.dot_dimension_numbers<[1], [0], [0], [1], [0, 0, 1, 1], [], []>} : vector<8x32xbf16>, vector<32x128xbf16>, vector<8x128xf32> -> vector<8x128xf32>
    %355 = vector.broadcast %60 : vector<1x128xf32> to vector<8x128xf32>
    %356 = arith.addf %354, %355 : vector<8x128xf32>
    %357 = vector.extract_strided_slice %352 {offsets = [0, 128], sizes = [8, 128], strides = [1, 1]} : vector<8x256xf32> to vector<8x128xf32>
    %358 = vector.extract_strided_slice %357 {offsets = [0, 0], sizes = [8, 32], strides = [1, 1]} : vector<8x128xf32> to vector<8x32xf32>
    %359 = vector.extract_strided_slice %356 {offsets = [0, 0], sizes = [8, 32], strides = [1, 1]} : vector<8x128xf32> to vector<8x32xf32>
    %360 = arith.addf %358, %359 : vector<8x32xf32>
    %361 = arith.negf %360 : vector<8x32xf32>
    %362 = math.exp %361 : vector<8x32xf32>
    %cst_98 = arith.constant 1.000000e+00 : f32
    %363 = vector.broadcast %cst_98 : f32 to vector<8x32xf32>
    %364 = arith.addf %363, %362 : vector<8x32xf32>
    %365 = arith.divf %363, %364 : vector<8x32xf32>
    %366 = vector.extract_strided_slice %357 {offsets = [0, 32], sizes = [8, 32], strides = [1, 1]} : vector<8x128xf32> to vector<8x32xf32>
    %367 = vector.extract_strided_slice %356 {offsets = [0, 32], sizes = [8, 32], strides = [1, 1]} : vector<8x128xf32> to vector<8x32xf32>
    %368 = arith.addf %366, %367 : vector<8x32xf32>
    %369 = arith.negf %368 : vector<8x32xf32>
    %370 = math.exp %369 : vector<8x32xf32>
    %cst_99 = arith.constant 1.000000e+00 : f32
    %371 = vector.broadcast %cst_99 : f32 to vector<8x32xf32>
    %372 = arith.addf %371, %370 : vector<8x32xf32>
    %373 = arith.divf %371, %372 : vector<8x32xf32>
    %374 = vector.extract_strided_slice %357 {offsets = [0, 64], sizes = [8, 32], strides = [1, 1]} : vector<8x128xf32> to vector<8x32xf32>
    %375 = vector.extract_strided_slice %356 {offsets = [0, 64], sizes = [8, 32], strides = [1, 1]} : vector<8x128xf32> to vector<8x32xf32>
    %376 = arith.mulf %365, %375 : vector<8x32xf32>
    %377 = arith.addf %374, %376 : vector<8x32xf32>
    %378 = math.tanh %377 : vector<8x32xf32>
    %cst_100 = arith.constant 1.000000e+00 : f32
    %379 = vector.broadcast %cst_100 : f32 to vector<8x32xf32>
    %380 = arith.subf %379, %373 : vector<8x32xf32>
    %381 = arith.mulf %380, %378 : vector<8x32xf32>
    %382 = arith.mulf %373, %319 : vector<8x32xf32>
    %383 = arith.addf %381, %382 : vector<8x32xf32>
    %c32 = arith.constant 32 : index
    %c0_101 = arith.constant 0 : index
    %384 = vector.load %arg14[%c32, %c0_101] : memref<56x32xf32, #tpu.memory_space<vmem>>, vector<8x32xf32>
    tpu.vector_store %arg14[%c32, %c0_101], %383 {strides = array<i32>} : memref<56x32xf32, #tpu.memory_space<vmem>>, vector<8x32xf32>,
    %385 = vector.extract_strided_slice %352 {offsets = [0, 0], sizes = [8, 128], strides = [1, 1]} : vector<8x256xf32> to vector<8x128xf32>
    %386 = vector.extract_strided_slice %56 {offsets = [40, 0], sizes = [8, 128], strides = [1, 1]} : vector<56x128xf32> to vector<8x128xf32>
    %387 = vector.extract_strided_slice %386 {offsets = [0, 0], sizes = [8, 32], strides = [1, 1]} : vector<8x128xf32> to vector<8x32xf32>
    %388 = vector.extract_strided_slice %385 {offsets = [0, 0], sizes = [8, 32], strides = [1, 1]} : vector<8x128xf32> to vector<8x32xf32>
    %389 = arith.addf %387, %388 : vector<8x32xf32>
    %390 = arith.negf %389 : vector<8x32xf32>
    %391 = math.exp %390 : vector<8x32xf32>
    %cst_102 = arith.constant 1.000000e+00 : f32
    %392 = vector.broadcast %cst_102 : f32 to vector<8x32xf32>
    %393 = arith.addf %392, %391 : vector<8x32xf32>
    %394 = arith.divf %392, %393 : vector<8x32xf32>
    %395 = vector.extract_strided_slice %386 {offsets = [0, 32], sizes = [8, 32], strides = [1, 1]} : vector<8x128xf32> to vector<8x32xf32>
    %396 = vector.extract_strided_slice %385 {offsets = [0, 32], sizes = [8, 32], strides = [1, 1]} : vector<8x128xf32> to vector<8x32xf32>
    %397 = arith.addf %395, %396 : vector<8x32xf32>
    %398 = arith.negf %397 : vector<8x32xf32>
    %399 = math.exp %398 : vector<8x32xf32>
    %cst_103 = arith.constant 1.000000e+00 : f32
    %400 = vector.broadcast %cst_103 : f32 to vector<8x32xf32>
    %401 = arith.addf %400, %399 : vector<8x32xf32>
    %402 = arith.divf %400, %401 : vector<8x32xf32>
    %403 = vector.extract_strided_slice %386 {offsets = [0, 64], sizes = [8, 32], strides = [1, 1]} : vector<8x128xf32> to vector<8x32xf32>
    %404 = vector.extract_strided_slice %385 {offsets = [0, 64], sizes = [8, 32], strides = [1, 1]} : vector<8x128xf32> to vector<8x32xf32>
    %405 = arith.mulf %394, %404 : vector<8x32xf32>
    %406 = arith.addf %403, %405 : vector<8x32xf32>
    %407 = math.tanh %406 : vector<8x32xf32>
    %cst_104 = arith.constant 1.000000e+00 : f32
    %408 = vector.broadcast %cst_104 : f32 to vector<8x32xf32>
    %409 = arith.subf %408, %402 : vector<8x32xf32>
    %410 = arith.mulf %409, %407 : vector<8x32xf32>
    %411 = arith.mulf %402, %348 : vector<8x32xf32>
    %412 = arith.addf %410, %411 : vector<8x32xf32>
    %413 = arith.truncf %412 : vector<8x32xf32> to vector<8x32xbf16>
    %cst_105 = arith.constant dense<0.000000e+00> : vector<8x256xf32>
    %414 = tpu.matmul %413, %57, %cst_105 {dimension_numbers = #tpu.dot_dimension_numbers<[1], [0], [0], [1], [0, 0, 1, 1], [], []>} : vector<8x32xbf16>, vector<32x256xbf16>, vector<8x256xf32> -> vector<8x256xf32>
    %415 = vector.broadcast %58 : vector<1x256xf32> to vector<8x256xf32>
    %416 = arith.addf %414, %415 : vector<8x256xf32>
    %417 = arith.truncf %383 : vector<8x32xf32> to vector<8x32xbf16>
    %cst_106 = arith.constant dense<0.000000e+00> : vector<8x128xf32>
    %418 = tpu.matmul %417, %59, %cst_106 {dimension_numbers = #tpu.dot_dimension_numbers<[1], [0], [0], [1], [0, 0, 1, 1], [], []>} : vector<8x32xbf16>, vector<32x128xbf16>, vector<8x128xf32> -> vector<8x128xf32>
    %419 = vector.broadcast %60 : vector<1x128xf32> to vector<8x128xf32>
    %420 = arith.addf %418, %419 : vector<8x128xf32>
    %421 = vector.extract_strided_slice %416 {offsets = [0, 128], sizes = [8, 128], strides = [1, 1]} : vector<8x256xf32> to vector<8x128xf32>
    %422 = vector.extract_strided_slice %421 {offsets = [0, 0], sizes = [8, 32], strides = [1, 1]} : vector<8x128xf32> to vector<8x32xf32>
    %423 = vector.extract_strided_slice %420 {offsets = [0, 0], sizes = [8, 32], strides = [1, 1]} : vector<8x128xf32> to vector<8x32xf32>
    %424 = arith.addf %422, %423 : vector<8x32xf32>
    %425 = arith.negf %424 : vector<8x32xf32>
    %426 = math.exp %425 : vector<8x32xf32>
    %cst_107 = arith.constant 1.000000e+00 : f32
    %427 = vector.broadcast %cst_107 : f32 to vector<8x32xf32>
    %428 = arith.addf %427, %426 : vector<8x32xf32>
    %429 = arith.divf %427, %428 : vector<8x32xf32>
    %430 = vector.extract_strided_slice %421 {offsets = [0, 32], sizes = [8, 32], strides = [1, 1]} : vector<8x128xf32> to vector<8x32xf32>
    %431 = vector.extract_strided_slice %420 {offsets = [0, 32], sizes = [8, 32], strides = [1, 1]} : vector<8x128xf32> to vector<8x32xf32>
    %432 = arith.addf %430, %431 : vector<8x32xf32>
    %433 = arith.negf %432 : vector<8x32xf32>
    %434 = math.exp %433 : vector<8x32xf32>
    %cst_108 = arith.constant 1.000000e+00 : f32
    %435 = vector.broadcast %cst_108 : f32 to vector<8x32xf32>
    %436 = arith.addf %435, %434 : vector<8x32xf32>
    %437 = arith.divf %435, %436 : vector<8x32xf32>
    %438 = vector.extract_strided_slice %421 {offsets = [0, 64], sizes = [8, 32], strides = [1, 1]} : vector<8x128xf32> to vector<8x32xf32>
    %439 = vector.extract_strided_slice %420 {offsets = [0, 64], sizes = [8, 32], strides = [1, 1]} : vector<8x128xf32> to vector<8x32xf32>
    %440 = arith.mulf %429, %439 : vector<8x32xf32>
    %441 = arith.addf %438, %440 : vector<8x32xf32>
    %442 = math.tanh %441 : vector<8x32xf32>
    %cst_109 = arith.constant 1.000000e+00 : f32
    %443 = vector.broadcast %cst_109 : f32 to vector<8x32xf32>
    %444 = arith.subf %443, %437 : vector<8x32xf32>
    %445 = arith.mulf %444, %442 : vector<8x32xf32>
    %446 = arith.mulf %437, %383 : vector<8x32xf32>
    %447 = arith.addf %445, %446 : vector<8x32xf32>
    %c40 = arith.constant 40 : index
    %c0_110 = arith.constant 0 : index
    %448 = vector.load %arg14[%c40, %c0_110] : memref<56x32xf32, #tpu.memory_space<vmem>>, vector<8x32xf32>
    tpu.vector_store %arg14[%c40, %c0_110], %447 {strides = array<i32>} : memref<56x32xf32, #tpu.memory_space<vmem>>, vector<8x32xf32>,
    %449 = vector.extract_strided_slice %416 {offsets = [0, 0], sizes = [8, 128], strides = [1, 1]} : vector<8x256xf32> to vector<8x128xf32>
    %450 = vector.extract_strided_slice %56 {offsets = [48, 0], sizes = [8, 128], strides = [1, 1]} : vector<56x128xf32> to vector<8x128xf32>
    %451 = vector.extract_strided_slice %450 {offsets = [0, 0], sizes = [8, 32], strides = [1, 1]} : vector<8x128xf32> to vector<8x32xf32>
    %452 = vector.extract_strided_slice %449 {offsets = [0, 0], sizes = [8, 32], strides = [1, 1]} : vector<8x128xf32> to vector<8x32xf32>
    %453 = arith.addf %451, %452 : vector<8x32xf32>
    %454 = arith.negf %453 : vector<8x32xf32>
    %455 = math.exp %454 : vector<8x32xf32>
    %cst_111 = arith.constant 1.000000e+00 : f32
    %456 = vector.broadcast %cst_111 : f32 to vector<8x32xf32>
    %457 = arith.addf %456, %455 : vector<8x32xf32>
    %458 = arith.divf %456, %457 : vector<8x32xf32>
    %459 = vector.extract_strided_slice %450 {offsets = [0, 32], sizes = [8, 32], strides = [1, 1]} : vector<8x128xf32> to vector<8x32xf32>
    %460 = vector.extract_strided_slice %449 {offsets = [0, 32], sizes = [8, 32], strides = [1, 1]} : vector<8x128xf32> to vector<8x32xf32>
    %461 = arith.addf %459, %460 : vector<8x32xf32>
    %462 = arith.negf %461 : vector<8x32xf32>
    %463 = math.exp %462 : vector<8x32xf32>
    %cst_112 = arith.constant 1.000000e+00 : f32
    %464 = vector.broadcast %cst_112 : f32 to vector<8x32xf32>
    %465 = arith.addf %464, %463 : vector<8x32xf32>
    %466 = arith.divf %464, %465 : vector<8x32xf32>
    %467 = vector.extract_strided_slice %450 {offsets = [0, 64], sizes = [8, 32], strides = [1, 1]} : vector<8x128xf32> to vector<8x32xf32>
    %468 = vector.extract_strided_slice %449 {offsets = [0, 64], sizes = [8, 32], strides = [1, 1]} : vector<8x128xf32> to vector<8x32xf32>
    %469 = arith.mulf %458, %468 : vector<8x32xf32>
    %470 = arith.addf %467, %469 : vector<8x32xf32>
    %471 = math.tanh %470 : vector<8x32xf32>
    %cst_113 = arith.constant 1.000000e+00 : f32
    %472 = vector.broadcast %cst_113 : f32 to vector<8x32xf32>
    %473 = arith.subf %472, %466 : vector<8x32xf32>
    %474 = arith.mulf %473, %471 : vector<8x32xf32>
    %475 = arith.mulf %466, %412 : vector<8x32xf32>
    %476 = arith.addf %474, %475 : vector<8x32xf32>
    %477 = arith.truncf %476 : vector<8x32xf32> to vector<8x32xbf16>
    %cst_114 = arith.constant dense<0.000000e+00> : vector<8x256xf32>
    %478 = tpu.matmul %477, %57, %cst_114 {dimension_numbers = #tpu.dot_dimension_numbers<[1], [0], [0], [1], [0, 0, 1, 1], [], []>} : vector<8x32xbf16>, vector<32x256xbf16>, vector<8x256xf32> -> vector<8x256xf32>
    %479 = vector.broadcast %58 : vector<1x256xf32> to vector<8x256xf32>
    %480 = arith.addf %478, %479 : vector<8x256xf32>
    %481 = arith.truncf %447 : vector<8x32xf32> to vector<8x32xbf16>
    %cst_115 = arith.constant dense<0.000000e+00> : vector<8x128xf32>
    %482 = tpu.matmul %481, %59, %cst_115 {dimension_numbers = #tpu.dot_dimension_numbers<[1], [0], [0], [1], [0, 0, 1, 1], [], []>} : vector<8x32xbf16>, vector<32x128xbf16>, vector<8x128xf32> -> vector<8x128xf32>
    %483 = vector.broadcast %60 : vector<1x128xf32> to vector<8x128xf32>
    %484 = arith.addf %482, %483 : vector<8x128xf32>
    %485 = vector.extract_strided_slice %480 {offsets = [0, 128], sizes = [8, 128], strides = [1, 1]} : vector<8x256xf32> to vector<8x128xf32>
    %486 = vector.extract_strided_slice %485 {offsets = [0, 0], sizes = [8, 32], strides = [1, 1]} : vector<8x128xf32> to vector<8x32xf32>
    %487 = vector.extract_strided_slice %484 {offsets = [0, 0], sizes = [8, 32], strides = [1, 1]} : vector<8x128xf32> to vector<8x32xf32>
    %488 = arith.addf %486, %487 : vector<8x32xf32>
    %489 = arith.negf %488 : vector<8x32xf32>
    %490 = math.exp %489 : vector<8x32xf32>
    %cst_116 = arith.constant 1.000000e+00 : f32
    %491 = vector.broadcast %cst_116 : f32 to vector<8x32xf32>
    %492 = arith.addf %491, %490 : vector<8x32xf32>
    %493 = arith.divf %491, %492 : vector<8x32xf32>
    %494 = vector.extract_strided_slice %485 {offsets = [0, 32], sizes = [8, 32], strides = [1, 1]} : vector<8x128xf32> to vector<8x32xf32>
    %495 = vector.extract_strided_slice %484 {offsets = [0, 32], sizes = [8, 32], strides = [1, 1]} : vector<8x128xf32> to vector<8x32xf32>
    %496 = arith.addf %494, %495 : vector<8x32xf32>
    %497 = arith.negf %496 : vector<8x32xf32>
    %498 = math.exp %497 : vector<8x32xf32>
    %cst_117 = arith.constant 1.000000e+00 : f32
    %499 = vector.broadcast %cst_117 : f32 to vector<8x32xf32>
    %500 = arith.addf %499, %498 : vector<8x32xf32>
    %501 = arith.divf %499, %500 : vector<8x32xf32>
    %502 = vector.extract_strided_slice %485 {offsets = [0, 64], sizes = [8, 32], strides = [1, 1]} : vector<8x128xf32> to vector<8x32xf32>
    %503 = vector.extract_strided_slice %484 {offsets = [0, 64], sizes = [8, 32], strides = [1, 1]} : vector<8x128xf32> to vector<8x32xf32>
    %504 = arith.mulf %493, %503 : vector<8x32xf32>
    %505 = arith.addf %502, %504 : vector<8x32xf32>
    %506 = math.tanh %505 : vector<8x32xf32>
    %cst_118 = arith.constant 1.000000e+00 : f32
    %507 = vector.broadcast %cst_118 : f32 to vector<8x32xf32>
    %508 = arith.subf %507, %501 : vector<8x32xf32>
    %509 = arith.mulf %508, %506 : vector<8x32xf32>
    %510 = arith.mulf %501, %447 : vector<8x32xf32>
    %511 = arith.addf %509, %510 : vector<8x32xf32>
    %c48 = arith.constant 48 : index
    %c0_119 = arith.constant 0 : index
    %512 = vector.load %arg14[%c48, %c0_119] : memref<56x32xf32, #tpu.memory_space<vmem>>, vector<8x32xf32>
    tpu.vector_store %arg14[%c48, %c0_119], %511 {strides = array<i32>} : memref<56x32xf32, #tpu.memory_space<vmem>>, vector<8x32xf32>,
    %c0_120 = arith.constant 0 : index
    %c0_121 = arith.constant 0 : index
    %513 = vector.load %arg14[%c0_120, %c0_121] : memref<56x32xf32, #tpu.memory_space<vmem>>, vector<56x32xf32>
    %514 = arith.truncf %513 : vector<56x32xf32> to vector<56x32xbf16>
    %c0_122 = arith.constant 0 : index
    %c0_123 = arith.constant 0 : index
    %515 = vector.load %arg11[%c0_122, %c0_123] : memref<32x128xbf16, #tpu.memory_space<vmem>>, vector<32x128xbf16>
    %cst_124 = arith.constant dense<0.000000e+00> : vector<56x128xf32>
    %516 = tpu.matmul %514, %515, %cst_124 {dimension_numbers = #tpu.dot_dimension_numbers<[1], [0], [0], [1], [0, 0, 1, 1], [], []>} : vector<56x32xbf16>, vector<32x128xbf16>, vector<56x128xf32> -> vector<56x128xf32>
    %c0_125 = arith.constant 0 : index
    %c0_126 = arith.constant 0 : index
    %517 = vector.load %arg12[%c0_125, %c0_126] : memref<1x128xf32, #tpu.memory_space<vmem>>, vector<1x128xf32>
    %518 = vector.broadcast %517 : vector<1x128xf32> to vector<56x128xf32>
    %519 = arith.addf %516, %518 : vector<56x128xf32>
    %c0_127 = arith.constant 0 : index
    %c0_128 = arith.constant 0 : index
    %520 = vector.load %arg13[%c0_127, %c0_128] : memref<56x128xf32, #tpu.memory_space<vmem>>, vector<56x128xf32>
    tpu.vector_store %arg13[%c0_127, %c0_128], %519 {strides = array<i32>} : memref<56x128xf32, #tpu.memory_space<vmem>>, vector<56x128xf32>,
    return
  }
}

</mosaic_0001>

<llo_original>
// kernel: image_caption_forward.1
$region0: #{image_caption_forward.1}
  #allocation0 [shape = 'u32[]', space=smem, size = 0x4, offset = 0x4, fixed_abs, tag = 'smem constant byte address 0x4 - core index']
  #allocation1 [shape = 'u32[144,128]{1,0:T(1,128)}', space=vmem, size = 0x12000, scoped, tag = 'internal scratch']
  #allocation2 [shape = 'f32[56,32]{1,0:T(8,128)}', space=vmem, size = 0x7000, scoped, tag = 'scratch operand']
  %s0 = inlined_call_operand.vmem [shape: bf16[512,27], index: 0, kind: input, shape index: {}]
  %s1 = inlined_call_operand.vmem [shape: bf16[56,512], index: 1, kind: input, shape index: {}]
  %s2 = inlined_call_operand.vmem [shape: bf16[27,32], index: 2, kind: input, shape index: {}]
  %s3 = inlined_call_operand.vmem [shape: f32[1,32], index: 3, kind: input, shape index: {}]
  %s4 = inlined_call_operand.vmem [shape: f32[56,32], index: 4, kind: input, shape index: {}]
  %s5 = inlined_call_operand.vmem [shape: bf16[32,128], index: 5, kind: input, shape index: {}]
  %s6 = inlined_call_operand.vmem [shape: f32[1,128], index: 6, kind: input, shape index: {}]
  %s7 = inlined_call_operand.vmem [shape: bf16[32,256], index: 7, kind: input, shape index: {}]
  %s8 = inlined_call_operand.vmem [shape: f32[1,256], index: 8, kind: input, shape index: {}]
  %s9 = inlined_call_operand.vmem [shape: bf16[32,128], index: 9, kind: input, shape index: {}]
  %s10 = inlined_call_operand.vmem [shape: f32[1,128], index: 10, kind: input, shape index: {}]
  %s11 = inlined_call_operand.vmem [shape: bf16[32,128], index: 11, kind: input, shape index: {}]
  %s12 = inlined_call_operand.vmem [shape: f32[1,128], index: 12, kind: input, shape index: {}]
  %s13 = inlined_call_operand.vmem [shape: f32[56,128], index: 13, kind: output, shape index: {}]
  %s14 = sld [smem:[#allocation0]]
  $region62: #{image_caption_forward.1} parent=0
    _
  %s16 = ssub.s32 1, %s14
  %s17 = scalar_select 0, %s16, %s14
  // Predicated region
  $region2: #{image_caption_forward.1} parent=0 // pred_check
    _
  $region3: #{image_caption_forward.1} parent=0 // pred_check_branch
    %19 = sbr.rel (0) target = $region5
  $region4: #{image_caption_forward.1} parent=0 // pred_region
    _
  $region5: #{image_caption_forward.1} parent=0 // pred_fallthru
    _
  // Predicated region
  $region6: #{image_caption_forward.1} parent=0 // pred_check
    _
  $region7: #{image_caption_forward.1} parent=0 // pred_check_branch
    %21 = sbr.rel (0) target = $region9
  $region8: #{image_caption_forward.1} parent=0 // pred_region
    _
  $region9: #{image_caption_forward.1} parent=0 // pred_fallthru
    _
  // Predicated region
  $region10: #{image_caption_forward.1} parent=0 // pred_check
    _
  $region11: #{image_caption_forward.1} parent=0 // pred_check_branch
    %23 = sbr.rel (0) target = $region13
  $region12: #{image_caption_forward.1} parent=0 // pred_region
    _
  $region13: #{image_caption_forward.1} parent=0 // pred_fallthru
    _
  // Predicated region
  $region14: #{image_caption_forward.1} parent=0 // pred_check
    _
  $region15: #{image_caption_forward.1} parent=0 // pred_check_branch
    %25 = sbr.rel (0) target = $region17
  $region16: #{image_caption_forward.1} parent=0 // pred_region
    _
  $region17: #{image_caption_forward.1} parent=0 // pred_fallthru
    _
  // Predicated region
  $region18: #{image_caption_forward.1} parent=0 // pred_check
    _
  $region19: #{image_caption_forward.1} parent=0 // pred_check_branch
    %27 = sbr.rel (0) target = $region21
  $region20: #{image_caption_forward.1} parent=0 // pred_region
    _
  $region21: #{image_caption_forward.1} parent=0 // pred_fallthru
    _
  // Predicated region
  $region22: #{image_caption_forward.1} parent=0 // pred_check
    _
  $region23: #{image_caption_forward.1} parent=0 // pred_check_branch
    %29 = sbr.rel (0) target = $region25
  $region24: #{image_caption_forward.1} parent=0 // pred_region
    _
  $region25: #{image_caption_forward.1} parent=0 // pred_fallthru
    _
  // Predicated region
  $region26: #{image_caption_forward.1} parent=0 // pred_check
    _
  $region27: #{image_caption_forward.1} parent=0 // pred_check_branch
    %31 = sbr.rel (0) target = $region29
  $region28: #{image_caption_forward.1} parent=0 // pred_region
    _
  $region29: #{image_caption_forward.1} parent=0 // pred_fallthru
    _
  // Predicated region
  $region30: #{image_caption_forward.1} parent=0 // pred_check
    _
  $region31: #{image_caption_forward.1} parent=0 // pred_check_branch
    %33 = sbr.rel (0) target = $region33
  $region32: #{image_caption_forward.1} parent=0 // pred_region
    _
  $region33: #{image_caption_forward.1} parent=0 // pred_fallthru
    _
  // Predicated region
  $region34: #{image_caption_forward.1} parent=0 // pred_check
    _
  $region35: #{image_caption_forward.1} parent=0 // pred_check_branch
    %35 = sbr.rel (0) target = $region37
  $region36: #{image_caption_forward.1} parent=0 // pred_region
    _
  $region37: #{image_caption_forward.1} parent=0 // pred_fallthru
    _
  // Predicated region
  $region38: #{image_caption_forward.1} parent=0 // pred_check
    _
  $region39: #{image_caption_forward.1} parent=0 // pred_check_branch
    %37 = sbr.rel (0) target = $region41
  $region40: #{image_caption_forward.1} parent=0 // pred_region
    _
  $region41: #{image_caption_forward.1} parent=0 // pred_fallthru
    _
  // Predicated region
  $region42: #{image_caption_forward.1} parent=0 // pred_check
    _
  $region43: #{image_caption_forward.1} parent=0 // pred_check_branch
    %39 = sbr.rel (0) target = $region45
  $region44: #{image_caption_forward.1} parent=0 // pred_region
    _
  $region45: #{image_caption_forward.1} parent=0 // pred_fallthru
    _
  // Predicated region
  $region46: #{image_caption_forward.1} parent=0 // pred_check
    _
  $region47: #{image_caption_forward.1} parent=0 // pred_check_branch
    %41 = sbr.rel (0) target = $region49
  $region48: #{image_caption_forward.1} parent=0 // pred_region
    _
  $region49: #{image_caption_forward.1} parent=0 // pred_fallthru
    _
  // Predicated region
  $region50: #{image_caption_forward.1} parent=0 // pred_check
    _
  $region51: #{image_caption_forward.1} parent=0 // pred_check_branch
    %43 = sbr.rel (0) target = $region53
  $region52: #{image_caption_forward.1} parent=0 // pred_region
    _
  $region53: #{image_caption_forward.1} parent=0 // pred_fallthru
    _
  %v45 = vld [vmem:[%s0] sm:$0xf]
  %v46 = vld [vmem:[%s0 + $0x4] sm:$0xf]
  %v47 = vld [vmem:[%s0 + $0x8] sm:$0xf]
  %v48 = vld [vmem:[%s0 + $0xc] sm:$0xf]
  %v49 = vld [vmem:[%s0 + $0x10] sm:$0xf]
  %v50 = vld [vmem:[%s0 + $0x14] sm:$0xf]
  %v51 = vld [vmem:[%s0 + $0x18] sm:$0xf]
  %v52 = vld [vmem:[%s0 + $0x1c] sm:$0xf]
  %v53 = vld [vmem:[%s0 + $0x20] sm:$0xf]
  %v54 = vld [vmem:[%s0 + $0x24] sm:$0xf]
  %v55 = vld [vmem:[%s0 + $0x28] sm:$0xf]
  %v56 = vld [vmem:[%s0 + $0x2c] sm:$0xf]
  %v57 = vld [vmem:[%s0 + $0x30] sm:$0xf]
  %v58 = vld [vmem:[%s0 + $0x34] sm:$0xf]
  %v59 = vld [vmem:[%s0 + $0x38] sm:$0xf]
  %v60 = vld [vmem:[%s0 + $0x3c] sm:$0xf]
  %v61 = vld [vmem:[%s2] sm:$0xf]
  %v62 = vld [vmem:[%s2 + $0x4] sm:$0xf]
  %v63 = vld [vmem:[%s2 + $0x8] sm:$0xf]
  %v64 = vld [vmem:[%s2 + $0xc] sm:$0x3]
  %v65 = vld [vmem:[%s3] sm:$0x1]
  %v67 = vlaneseq
  %v68 = vshrl.u32 %v67, 7
  %v69 = vsub.s32 0, %v68
  %v70 = vrot.slane %v65, %v69
  %v88 = vunpack.c.l.b16 %v45
  %v89 = vunpack.c.l.b16 %v46
  %v90 = vunpack.c.l.b16 %v47
  %v91 = vunpack.c.l.b16 %v48
  %v92 = vunpack.c.l.b16 %v49
  %v93 = vunpack.c.l.b16 %v50
  %v94 = vunpack.c.l.b16 %v51
  %v95 = vunpack.c.l.b16 %v52
  %v96 = vunpack.c.l.b16 %v53
  %v97 = vunpack.c.l.b16 %v54
  %v98 = vunpack.c.l.b16 %v55
  %v99 = vunpack.c.l.b16 %v56
  %v100 = vunpack.c.l.b16 %v57
  %v101 = vunpack.c.l.b16 %v58
  %v102 = vunpack.c.l.b16 %v59
  %v103 = vunpack.c.l.b16 %v60
  %v104 = vpack.c.b16 %v89, %v88
  %v105 = vpack.c.b16 %v91, %v90
  %v106 = vpack.c.b16 %v93, %v92
  %v107 = vpack.c.b16 %v95, %v94
  %v108 = vpack.c.b16 %v97, %v96
  %v109 = vpack.c.b16 %v99, %v98
  %v110 = vpack.c.b16 %v101, %v100
  %v111 = vpack.c.b16 %v103, %v102
  %v116 = vunpack.c.l.b16 %v61
  %v117 = vunpack.c.l.b16 %v62
  %v118 = vunpack.c.l.b16 %v63
  %v119 = vunpack.c.l.b16 %v64
  %v120 = vpack.c.b16 %v117, %v116
  %v121 = vpack.c.b16 %v119, %v118
  %vm123 = vcmask 220160
  %v125 = vsel %vm123, %v104, 0
  %v128 = vsel %vm123, %v105, 0
  %v131 = vsel %vm123, %v106, 0
  %v134 = vsel %vm123, %v107, 0
  %v137 = vsel %vm123, %v108, 0
  %v140 = vsel %vm123, %v109, 0
  %v143 = vsel %vm123, %v110, 0
  %v146 = vsel %vm123, %v111, 0
  %vm148 = vcmask 1044480
  %vm149 = vcmask 1045504
  %v150 = vsel %vm148, 4294967295, 65535
  %v151 = vsel %vm149, %v150, 0
  %v153 = vand.u32 %v121, %v151
  %155 = vmatprep.subr.bf16.mxu0 0
  %156 = vmatpush1.bf16.msra.mxu0 %v120
  %157 = vmatprep.subr.bf16.mxu0 0
  %158 = vmatpush1.bf16.msra.mxu0 %v153
  %159 = vmatprep.subr.bf16.mxu0 0
  %160 = vmatpush1.bf16.msra.mxu0 0
  %161 = vmatprep.subr.bf16.mxu0 0
  %162 = vmatpush1.bf16.msra.mxu0 0
  %163 = vmatprep.subr.bf16.mxu0 0
  %164 = vmatpush1.bf16.msra.mxu0 0
  %165 = vmatprep.subr.bf16.mxu0 0
  %166 = vmatpush1.bf16.msra.mxu0 0
  %167 = vmatprep.subr.bf16.mxu0 0
  %168 = vmatpush1.bf16.msra.mxu0 0
  %169 = vmatprep.subr.bf16.mxu0 0
  %170 = vmatpush1.bf16.msra.mxu0 0
  %171 = vmatprep.subr.bf16.mxu0 0
  %172 = vmatpush1.bf16.msra.mxu0 0
  %173 = vmatprep.subr.bf16.mxu0 0
  %174 = vmatpush1.bf16.msra.mxu0 0
  %175 = vmatprep.subr.bf16.mxu0 0
  %176 = vmatpush1.bf16.msra.mxu0 0
  %177 = vmatprep.subr.bf16.mxu0 0
  %178 = vmatpush1.bf16.msra.mxu0 0
  %179 = vmatprep.subr.bf16.mxu0 0
  %180 = vmatpush1.bf16.msra.mxu0 0
  %181 = vmatprep.subr.bf16.mxu0 0
  %182 = vmatpush1.bf16.msra.mxu0 0
  %183 = vmatprep.subr.bf16.mxu0 0
  %184 = vmatpush1.bf16.msra.mxu0 0
  %185 = vmatprep.subr.bf16.mxu0 0
  %186 = vmatpush1.bf16.msra.mxu0 0
  %187 = vmatprep.mubr.bf16.mxu0 0
  %188 = vmatmul.mubr.bf16.gmra.mrb[0].mxu0 %v125
  %v189 = vpop.f32.mrb[0].mxu0
  %v190 = vadd.f32 %v70, %v189
  %v191 = vpop.f32.mrb[0].mxu0
  %v192 = vpop.f32.mrb[0].mxu0
  %v193 = vadd.f32 %v70, %v192
  %v194 = vpop.f32.mrb[0].mxu0
  %195 = vmatprep.mubr.bf16.mxu0 0
  %196 = vmatmul.mubr.bf16.gmra.mrb[0].mxu0 %v128
  %v197 = vpop.f32.mrb[0].mxu0
  %v198 = vadd.f32 %v70, %v197
  %v199 = vpop.f32.mrb[0].mxu0
  %v200 = vpop.f32.mrb[0].mxu0
  %v201 = vadd.f32 %v70, %v200
  %v202 = vpop.f32.mrb[0].mxu0
  %203 = vmatprep.mubr.bf16.mxu0 0
  %204 = vmatmul.mubr.bf16.gmra.mrb[0].mxu0 %v131
  %v205 = vpop.f32.mrb[0].mxu0
  %v206 = vadd.f32 %v70, %v205
  %v207 = vpop.f32.mrb[0].mxu0
  %v208 = vpop.f32.mrb[0].mxu0
  %v209 = vadd.f32 %v70, %v208
  %v210 = vpop.f32.mrb[0].mxu0
  %211 = vmatprep.mubr.bf16.mxu0 0
  %212 = vmatmul.mubr.bf16.gmra.mrb[0].mxu0 %v134
  %v213 = vpop.f32.mrb[0].mxu0
  %v214 = vadd.f32 %v70, %v213
  %v215 = vpop.f32.mrb[0].mxu0
  %v216 = vpop.f32.mrb[0].mxu0
  %v217 = vadd.f32 %v70, %v216
  %v218 = vpop.f32.mrb[0].mxu0
  %219 = vmatprep.mubr.bf16.mxu0 0
  %220 = vmatmul.mubr.bf16.gmra.mrb[0].mxu0 %v137
  %v221 = vpop.f32.mrb[0].mxu0
  %v222 = vadd.f32 %v70, %v221
  %v223 = vpop.f32.mrb[0].mxu0
  %v224 = vpop.f32.mrb[0].mxu0
  %v225 = vadd.f32 %v70, %v224
  %v226 = vpop.f32.mrb[0].mxu0
  %227 = vmatprep.mubr.bf16.mxu0 0
  %228 = vmatmul.mubr.bf16.gmra.mrb[0].mxu0 %v140
  %v229 = vpop.f32.mrb[0].mxu0
  %v230 = vadd.f32 %v70, %v229
  %v231 = vpop.f32.mrb[0].mxu0
  %v232 = vpop.f32.mrb[0].mxu0
  %v233 = vadd.f32 %v70, %v232
  %v234 = vpop.f32.mrb[0].mxu0
  %235 = vmatprep.mubr.bf16.mxu0 0
  %236 = vmatmul.mubr.bf16.gmra.mrb[0].mxu0 %v143
  %v237 = vpop.f32.mrb[0].mxu0
  %v238 = vadd.f32 %v70, %v237
  %v239 = vpop.f32.mrb[0].mxu0
  %v240 = vpop.f32.mrb[0].mxu0
  %v241 = vadd.f32 %v70, %v240
  %v242 = vpop.f32.mrb[0].mxu0
  %243 = vmatprep.mubr.bf16.mxu0 0
  %244 = vmatmul.mubr.bf16.gmra.mrb[0].mxu0 %v146
  %v245 = vpop.f32.mrb[0].mxu0
  %v246 = vadd.f32 %v70, %v245
  %v247 = vpop.f32.mrb[0].mxu0
  %v248 = vpop.f32.mrb[0].mxu0
  %v249 = vadd.f32 %v70, %v248
  %v250 = vpop.f32.mrb[0].mxu0
  %251 = vdwg.mxu0
  %v252 = vmax.f32 %v190, 0.0
  %v253 = vmax.f32 %v193, 0.0
  %v254 = vmax.f32 %v198, 0.0
  %v255 = vmax.f32 %v201, 0.0
  %v256 = vmax.f32 %v206, 0.0
  %v257 = vmax.f32 %v209, 0.0
  %v258 = vmax.f32 %v214, 0.0
  %v259 = vmax.f32 %v217, 0.0
  %v260 = vmax.f32 %v222, 0.0
  %v261 = vmax.f32 %v225, 0.0
  %v262 = vmax.f32 %v230, 0.0
  %v263 = vmax.f32 %v233, 0.0
  %v264 = vmax.f32 %v238, 0.0
  %v265 = vmax.f32 %v241, 0.0
  %v266 = vmax.f32 %v246, 0.0
  %v267 = vmax.f32 %v249, 0.0
  %v268 = vpack.c.bf16 %v253, %v252
  %v269 = vpack.c.bf16 %v255, %v254
  %v270 = vpack.c.bf16 %v257, %v256
  %v271 = vpack.c.bf16 %v259, %v258
  %v272 = vpack.c.bf16 %v261, %v260
  %v273 = vpack.c.bf16 %v263, %v262
  %v274 = vpack.c.bf16 %v265, %v264
  %v275 = vpack.c.bf16 %v267, %v266
  %v276 = vld [vmem:[%s1] sm:$0xf]
  %v277 = vld [vmem:[%s1 + $0x10] sm:$0xf]
  %v278 = vld [vmem:[%s1 + $0x20] sm:$0xf]
  %v279 = vld [vmem:[%s1 + $0x30] sm:$0xf]
  %v280 = vld [vmem:[%s1 + $0x40] sm:$0xf]
  %v281 = vld [vmem:[%s1 + $0x50] sm:$0xf]
  %v282 = vld [vmem:[%s1 + $0x60] sm:$0xf]
  %v283 = vld [vmem:[%s0 + $0x40] sm:$0xf]
  %v284 = vld [vmem:[%s0 + $0x44] sm:$0xf]
  %v285 = vld [vmem:[%s0 + $0x48] sm:$0xf]
  %v286 = vld [vmem:[%s0 + $0x4c] sm:$0xf]
  %v287 = vld [vmem:[%s0 + $0x50] sm:$0xf]
  %v288 = vld [vmem:[%s0 + $0x54] sm:$0xf]
  %v289 = vld [vmem:[%s0 + $0x58] sm:$0xf]
  %v290 = vld [vmem:[%s0 + $0x5c] sm:$0xf]
  %v291 = vld [vmem:[%s0 + $0x60] sm:$0xf]
  %v292 = vld [vmem:[%s0 + $0x64] sm:$0xf]
  %v293 = vld [vmem:[%s0 + $0x68] sm:$0xf]
  %v294 = vld [vmem:[%s0 + $0x6c] sm:$0xf]
  %v295 = vld [vmem:[%s0 + $0x70] sm:$0xf]
  %v296 = vld [vmem:[%s0 + $0x74] sm:$0xf]
  %v297 = vld [vmem:[%s0 + $0x78] sm:$0xf]
  %v298 = vld [vmem:[%s0 + $0x7c] sm:$0xf]
  %v315 = vunpack.c.l.b16 %v283
  %v316 = vunpack.c.l.b16 %v284
  %v317 = vunpack.c.l.b16 %v285
  %v318 = vunpack.c.l.b16 %v286
  %v319 = vunpack.c.l.b16 %v287
  %v320 = vunpack.c.l.b16 %v288
  %v321 = vunpack.c.l.b16 %v289
  %v322 = vunpack.c.l.b16 %v290
  %v323 = vunpack.c.l.b16 %v291
  %v324 = vunpack.c.l.b16 %v292
  %v325 = vunpack.c.l.b16 %v293
  %v326 = vunpack.c.l.b16 %v294
  %v327 = vunpack.c.l.b16 %v295
  %v328 = vunpack.c.l.b16 %v296
  %v329 = vunpack.c.l.b16 %v297
  %v330 = vunpack.c.l.b16 %v298
  %v331 = vpack.c.b16 %v316, %v315
  %v332 = vpack.c.b16 %v318, %v317
  %v333 = vpack.c.b16 %v320, %v319
  %v334 = vpack.c.b16 %v322, %v321
  %v335 = vpack.c.b16 %v324, %v323
  %v336 = vpack.c.b16 %v326, %v325
  %v337 = vpack.c.b16 %v328, %v327
  %v338 = vpack.c.b16 %v330, %v329
  %v340 = vsel %vm123, %v331, 0
  %v343 = vsel %vm123, %v332, 0
  %v346 = vsel %vm123, %v333, 0
  %v349 = vsel %vm123, %v334, 0
  %v352 = vsel %vm123, %v335, 0
  %v355 = vsel %vm123, %v336, 0
  %v358 = vsel %vm123, %v337, 0
  %v361 = vsel %vm123, %v338, 0
  %363 = vmatprep.subr.bf16.mxu0 0
  %364 = vmatpush1.bf16.msra.mxu0 %v120
  %365 = vmatprep.subr.bf16.mxu0 0
  %366 = vmatpush1.bf16.msra.mxu0 %v153
  %367 = vmatprep.subr.bf16.mxu0 0
  %368 = vmatpush1.bf16.msra.mxu0 0
  %369 = vmatprep.subr.bf16.mxu0 0
  %370 = vmatpush1.bf16.msra.mxu0 0
  %371 = vmatprep.subr.bf16.mxu0 0
  %372 = vmatpush1.bf16.msra.mxu0 0
  %373 = vmatprep.subr.bf16.mxu0 0
  %374 = vmatpush1.bf16.msra.mxu0 0
  %375 = vmatprep.subr.bf16.mxu0 0
  %376 = vmatpush1.bf16.msra.mxu0 0
  %377 = vmatprep.subr.bf16.mxu0 0
  %378 = vmatpush1.bf16.msra.mxu0 0
  %379 = vmatprep.subr.bf16.mxu0 0
  %380 = vmatpush1.bf16.msra.mxu0 0
  %381 = vmatprep.subr.bf16.mxu0 0
  %382 = vmatpush1.bf16.msra.mxu0 0
  %383 = vmatprep.subr.bf16.mxu0 0
  %384 = vmatpush1.bf16.msra.mxu0 0
  %385 = vmatprep.subr.bf16.mxu0 0
  %386 = vmatpush1.bf16.msra.mxu0 0
  %387 = vmatprep.subr.bf16.mxu0 0
  %388 = vmatpush1.bf16.msra.mxu0 0
  %389 = vmatprep.subr.bf16.mxu0 0
  %390 = vmatpush1.bf16.msra.mxu0 0
  %391 = vmatprep.subr.bf16.mxu0 0
  %392 = vmatpush1.bf16.msra.mxu0 0
  %393 = vmatprep.subr.bf16.mxu0 0
  %394 = vmatpush1.bf16.msra.mxu0 0
  %395 = vmatprep.mubr.bf16.mxu0 0
  %396 = vmatmul.mubr.bf16.gmra.mrb[0].mxu0 %v340
  %v397 = vpop.f32.mrb[0].mxu0
  %v398 = vadd.f32 %v70, %v397
  %v399 = vpop.f32.mrb[0].mxu0
  %v400 = vpop.f32.mrb[0].mxu0
  %v401 = vadd.f32 %v70, %v400
  %v402 = vpop.f32.mrb[0].mxu0
  %403 = vmatprep.mubr.bf16.mxu0 0
  %404 = vmatmul.mubr.bf16.gmra.mrb[0].mxu0 %v343
  %v405 = vpop.f32.mrb[0].mxu0
  %v406 = vadd.f32 %v70, %v405
  %v407 = vpop.f32.mrb[0].mxu0
  %v408 = vpop.f32.mrb[0].mxu0
  %v409 = vadd.f32 %v70, %v408
  %v410 = vpop.f32.mrb[0].mxu0
  %411 = vmatprep.mubr.bf16.mxu0 0
  %412 = vmatmul.mubr.bf16.gmra.mrb[0].mxu0 %v346
  %v413 = vpop.f32.mrb[0].mxu0
  %v414 = vadd.f32 %v70, %v413
  %v415 = vpop.f32.mrb[0].mxu0
  %v416 = vpop.f32.mrb[0].mxu0
  %v417 = vadd.f32 %v70, %v416
  %v418 = vpop.f32.mrb[0].mxu0
  %419 = vmatprep.mubr.bf16.mxu0 0
  %420 = vmatmul.mubr.bf16.gmra.mrb[0].mxu0 %v349
  %v421 = vpop.f32.mrb[0].mxu0
  %v422 = vadd.f32 %v70, %v421
  %v423 = vpop.f32.mrb[0].mxu0
  %v424 = vpop.f32.mrb[0].mxu0
  %v425 = vadd.f32 %v70, %v424
  %v426 = vpop.f32.mrb[0].mxu0
  %427 = vmatprep.mubr.bf16.mxu0 0
  %428 = vmatmul.mubr.bf16.gmra.mrb[0].mxu0 %v352
  %v429 = vpop.f32.mrb[0].mxu0
  %v430 = vadd.f32 %v70, %v429
  %v431 = vpop.f32.mrb[0].mxu0
  %v432 = vpop.f32.mrb[0].mxu0
  %v433 = vadd.f32 %v70, %v432
  %v434 = vpop.f32.mrb[0].mxu0
  %435 = vmatprep.mubr.bf16.mxu0 0
  %436 = vmatmul.mubr.bf16.gmra.mrb[0].mxu0 %v355
  %v437 = vpop.f32.mrb[0].mxu0
  %v438 = vadd.f32 %v70, %v437
  %v439 = vpop.f32.mrb[0].mxu0
  %v440 = vpop.f32.mrb[0].mxu0
  %v441 = vadd.f32 %v70, %v440
  %v442 = vpop.f32.mrb[0].mxu0
  %443 = vmatprep.mubr.bf16.mxu0 0
  %444 = vmatmul.mubr.bf16.gmra.mrb[0].mxu0 %v358
  %v445 = vpop.f32.mrb[0].mxu0
  %v446 = vadd.f32 %v70, %v445
  %v447 = vpop.f32.mrb[0].mxu0
  %v448 = vpop.f32.mrb[0].mxu0
  %v449 = vadd.f32 %v70, %v448
  %v450 = vpop.f32.mrb[0].mxu0
  %451 = vmatprep.mubr.bf16.mxu0 0
  %452 = vmatmul.mubr.bf16.gmra.mrb[0].mxu0 %v361
  %v453 = vpop.f32.mrb[0].mxu0
  %v454 = vadd.f32 %v70, %v453
  %v455 = vpop.f32.mrb[0].mxu0
  %v456 = vpop.f32.mrb[0].mxu0
  %v457 = vadd.f32 %v70, %v456
  %v458 = vpop.f32.mrb[0].mxu0
  %459 = vdwg.mxu0
  %v460 = vmax.f32 %v398, 0.0
  %v461 = vmax.f32 %v401, 0.0
  %v462 = vmax.f32 %v406, 0.0
  %v463 = vmax.f32 %v409, 0.0
  %v464 = vmax.f32 %v414, 0.0
  %v465 = vmax.f32 %v417, 0.0
  %v466 = vmax.f32 %v422, 0.0
  %v467 = vmax.f32 %v425, 0.0
  %v468 = vmax.f32 %v430, 0.0
  %v469 = vmax.f32 %v433, 0.0
  %v470 = vmax.f32 %v438, 0.0
  %v471 = vmax.f32 %v441, 0.0
  %v472 = vmax.f32 %v446, 0.0
  %v473 = vmax.f32 %v449, 0.0
  %v474 = vmax.f32 %v454, 0.0
  %v475 = vmax.f32 %v457, 0.0
  %v476 = vpack.c.bf16 %v461, %v460
  %v477 = vpack.c.bf16 %v463, %v462
  %v478 = vpack.c.bf16 %v465, %v464
  %v479 = vpack.c.bf16 %v467, %v466
  %v480 = vpack.c.bf16 %v469, %v468
  %v481 = vpack.c.bf16 %v471, %v470
  %v482 = vpack.c.bf16 %v473, %v472
  %v483 = vpack.c.bf16 %v475, %v474
  %v484 = vld [vmem:[%s1 + $0x4] sm:$0xf]
  %v485 = vld [vmem:[%s1 + $0x14] sm:$0xf]
  %v486 = vld [vmem:[%s1 + $0x24] sm:$0xf]
  %v487 = vld [vmem:[%s1 + $0x34] sm:$0xf]
  %v488 = vld [vmem:[%s1 + $0x44] sm:$0xf]
  %v489 = vld [vmem:[%s1 + $0x54] sm:$0xf]
  %v490 = vld [vmem:[%s1 + $0x64] sm:$0xf]
  %v498 = vunpack.c.l.b16 %v484
  %v499 = vunpack.c.l.b16 %v485
  %v500 = vunpack.c.l.b16 %v486
  %v501 = vunpack.c.l.b16 %v487
  %v502 = vunpack.c.l.b16 %v488
  %v503 = vunpack.c.l.b16 %v489
  %v504 = vunpack.c.l.b16 %v490
  %v505 = vpack.c.b16 %v499, %v498
  %v506 = vpack.c.b16 %v501, %v500
  %v507 = vpack.c.b16 %v503, %v502
  %v508 = vpack.c.b16 %v504, %v504
  %513 = vmatprep.subr.bf16.mxu0 0
  %514 = vmatpush1.bf16.msra.mxu0 %v476
  %515 = vmatprep.subr.bf16.mxu0 0
  %516 = vmatpush1.bf16.msra.mxu0 %v477
  %517 = vmatprep.subr.bf16.mxu0 0
  %518 = vmatpush1.bf16.msra.mxu0 %v478
  %519 = vmatprep.subr.bf16.mxu0 0
  %520 = vmatpush1.bf16.msra.mxu0 %v479
  %521 = vmatprep.subr.bf16.mxu0 0
  %522 = vmatpush1.bf16.msra.mxu0 %v480
  %523 = vmatprep.subr.bf16.mxu0 0
  %524 = vmatpush1.bf16.msra.mxu0 %v481
  %525 = vmatprep.subr.bf16.mxu0 0
  %526 = vmatpush1.bf16.msra.mxu0 %v482
  %527 = vmatprep.subr.bf16.mxu0 0
  %528 = vmatpush1.bf16.msra.mxu0 %v483
  %529 = vmatprep.subr.bf16.mxu0 0
  %530 = vmatpush1.bf16.msra.mxu0 0
  %531 = vmatprep.subr.bf16.mxu0 0
  %532 = vmatpush1.bf16.msra.mxu0 0
  %533 = vmatprep.subr.bf16.mxu0 0
  %534 = vmatpush1.bf16.msra.mxu0 0
  %535 = vmatprep.subr.bf16.mxu0 0
  %536 = vmatpush1.bf16.msra.mxu0 0
  %537 = vmatprep.subr.bf16.mxu0 0
  %538 = vmatpush1.bf16.msra.mxu0 0
  %539 = vmatprep.subr.bf16.mxu0 0
  %540 = vmatpush1.bf16.msra.mxu0 0
  %541 = vmatprep.subr.bf16.mxu0 0
  %542 = vmatpush1.bf16.msra.mxu0 0
  %543 = vmatprep.subr.bf16.mxu0 0
  %544 = vmatpush1.bf16.msra.mxu0 0
  %545 = vmatprep.mubr.bf16.mxu0 0
  %546 = vmatmul.mubr.bf16.gmra.mrb[0].mxu0 %v505
  %v547 = vpop.f32.mrb[0].mxu0
  %v548 = vadd.f32 0.0, %v547
  %v549 = vpop.f32.mrb[0].mxu0
  %v550 = vpop.f32.mrb[0].mxu0
  %v551 = vadd.f32 0.0, %v550
  %v552 = vpop.f32.mrb[0].mxu0
  %553 = vmatprep.mubr.bf16.mxu0 0
  %554 = vmatmul.mubr.bf16.gmra.mrb[0].mxu0 %v506
  %v555 = vpop.f32.mrb[0].mxu0
  %v556 = vadd.f32 0.0, %v555
  %v557 = vpop.f32.mrb[0].mxu0
  %v558 = vpop.f32.mrb[0].mxu0
  %v559 = vadd.f32 0.0, %v558
  %v560 = vpop.f32.mrb[0].mxu0
  %561 = vmatprep.mubr.bf16.mxu0 0
  %562 = vmatmul.mubr.bf16.gmra.mrb[0].mxu0 %v507
  %v563 = vpop.f32.mrb[0].mxu0
  %v564 = vadd.f32 0.0, %v563
  %v565 = vpop.f32.mrb[0].mxu0
  %v566 = vpop.f32.mrb[0].mxu0
  %v567 = vadd.f32 0.0, %v566
  %v568 = vpop.f32.mrb[0].mxu0
  %569 = vmatprep.mubr.bf16.mxu0 0
  %570 = vmatmul.mubr.bf16.gmra.mrb[0].mxu0 %v508
  %v571 = vpop.f32.mrb[0].mxu0
  %v572 = vadd.f32 0.0, %v571
  %v573 = vpop.f32.mrb[0].mxu0
  %v574 = vpop.f32.mrb[0].mxu0
  %v575 = vpop.f32.mrb[0].mxu0
  %576 = vdwg.mxu0
  %v584 = vunpack.c.l.b16 %v276
  %v585 = vunpack.c.l.b16 %v277
  %v586 = vunpack.c.l.b16 %v278
  %v587 = vunpack.c.l.b16 %v279
  %v588 = vunpack.c.l.b16 %v280
  %v589 = vunpack.c.l.b16 %v281
  %v590 = vunpack.c.l.b16 %v282
  %v591 = vpack.c.b16 %v585, %v584
  %v592 = vpack.c.b16 %v587, %v586
  %v593 = vpack.c.b16 %v589, %v588
  %v594 = vpack.c.b16 %v590, %v590
  %599 = vmatprep.subr.bf16.mxu0 0
  %600 = vmatpush1.bf16.msra.mxu0 %v268
  %601 = vmatprep.subr.bf16.mxu0 0
  %602 = vmatpush1.bf16.msra.mxu0 %v269
  %603 = vmatprep.subr.bf16.mxu0 0
  %604 = vmatpush1.bf16.msra.mxu0 %v270
  %605 = vmatprep.subr.bf16.mxu0 0
  %606 = vmatpush1.bf16.msra.mxu0 %v271
  %607 = vmatprep.subr.bf16.mxu0 0
  %608 = vmatpush1.bf16.msra.mxu0 %v272
  %609 = vmatprep.subr.bf16.mxu0 0
  %610 = vmatpush1.bf16.msra.mxu0 %v273
  %611 = vmatprep.subr.bf16.mxu0 0
  %612 = vmatpush1.bf16.msra.mxu0 %v274
  %613 = vmatprep.subr.bf16.mxu0 0
  %614 = vmatpush1.bf16.msra.mxu0 %v275
  %615 = vmatprep.subr.bf16.mxu0 0
  %616 = vmatpush1.bf16.msra.mxu0 0
  %617 = vmatprep.subr.bf16.mxu0 0
  %618 = vmatpush1.bf16.msra.mxu0 0
  %619 = vmatprep.subr.bf16.mxu0 0
  %620 = vmatpush1.bf16.msra.mxu0 0
  %621 = vmatprep.subr.bf16.mxu0 0
  %622 = vmatpush1.bf16.msra.mxu0 0
  %623 = vmatprep.subr.bf16.mxu0 0
  %624 = vmatpush1.bf16.msra.mxu0 0
  %625 = vmatprep.subr.bf16.mxu0 0
  %626 = vmatpush1.bf16.msra.mxu0 0
  %627 = vmatprep.subr.bf16.mxu0 0
  %628 = vmatpush1.bf16.msra.mxu0 0
  %629 = vmatprep.subr.bf16.mxu0 0
  %630 = vmatpush1.bf16.msra.mxu0 0
  %631 = vmatprep.mubr.bf16.mxu0 0
  %632 = vmatmul.mubr.bf16.gmra.mrb[0].mxu0 %v591
  %v633 = vpop.f32.mrb[0].mxu0
  %v634 = vadd.f32 %v548, %v633
  %v635 = vpop.f32.mrb[0].mxu0
  %v636 = vpop.f32.mrb[0].mxu0
  %v637 = vadd.f32 %v551, %v636
  %v638 = vpop.f32.mrb[0].mxu0
  %639 = vmatprep.mubr.bf16.mxu0 0
  %640 = vmatmul.mubr.bf16.gmra.mrb[0].mxu0 %v592
  %v641 = vpop.f32.mrb[0].mxu0
  %v642 = vadd.f32 %v556, %v641
  %v643 = vpop.f32.mrb[0].mxu0
  %v644 = vpop.f32.mrb[0].mxu0
  %v645 = vadd.f32 %v559, %v644
  %v646 = vpop.f32.mrb[0].mxu0
  %647 = vmatprep.mubr.bf16.mxu0 0
  %648 = vmatmul.mubr.bf16.gmra.mrb[0].mxu0 %v593
  %v649 = vpop.f32.mrb[0].mxu0
  %v650 = vadd.f32 %v564, %v649
  %v651 = vpop.f32.mrb[0].mxu0
  %v652 = vpop.f32.mrb[0].mxu0
  %v653 = vadd.f32 %v567, %v652
  %v654 = vpop.f32.mrb[0].mxu0
  %655 = vmatprep.mubr.bf16.mxu0 0
  %656 = vmatmul.mubr.bf16.gmra.mrb[0].mxu0 %v594
  %v657 = vpop.f32.mrb[0].mxu0
  %v658 = vadd.f32 %v572, %v657
  %v659 = vpop.f32.mrb[0].mxu0
  %v660 = vpop.f32.mrb[0].mxu0
  %v661 = vpop.f32.mrb[0].mxu0
  %662 = vdwg.mxu0
  %v663 = vld [vmem:[%s0 + $0x80] sm:$0xf]
  %v664 = vld [vmem:[%s0 + $0x84] sm:$0xf]
  %v665 = vld [vmem:[%s0 + $0x88] sm:$0xf]
  %v666 = vld [vmem:[%s0 + $0x8c] sm:$0xf]
  %v667 = vld [vmem:[%s0 + $0x90] sm:$0xf]
  %v668 = vld [vmem:[%s0 + $0x94] sm:$0xf]
  %v669 = vld [vmem:[%s0 + $0x98] sm:$0xf]
  %v670 = vld [vmem:[%s0 + $0x9c] sm:$0xf]
  %v671 = vld [vmem:[%s0 + $0xa0] sm:$0xf]
  %v672 = vld [vmem:[%s0 + $0xa4] sm:$0xf]
  %v673 = vld [vmem:[%s0 + $0xa8] sm:$0xf]
  %v674 = vld [vmem:[%s0 + $0xac] sm:$0xf]
  %v675 = vld [vmem:[%s0 + $0xb0] sm:$0xf]
  %v676 = vld [vmem:[%s0 + $0xb4] sm:$0xf]
  %v677 = vld [vmem:[%s0 + $0xb8] sm:$0xf]
  %v678 = vld [vmem:[%s0 + $0xbc] sm:$0xf]
  %v695 = vunpack.c.l.b16 %v663
  %v696 = vunpack.c.l.b16 %v664
  %v697 = vunpack.c.l.b16 %v665
  %v698 = vunpack.c.l.b16 %v666
  %v699 = vunpack.c.l.b16 %v667
  %v700 = vunpack.c.l.b16 %v668
  %v701 = vunpack.c.l.b16 %v669
  %v702 = vunpack.c.l.b16 %v670
  %v703 = vunpack.c.l.b16 %v671
  %v704 = vunpack.c.l.b16 %v672
  %v705 = vunpack.c.l.b16 %v673
  %v706 = vunpack.c.l.b16 %v674
  %v707 = vunpack.c.l.b16 %v675
  %v708 = vunpack.c.l.b16 %v676
  %v709 = vunpack.c.l.b16 %v677
  %v710 = vunpack.c.l.b16 %v678
  %v711 = vpack.c.b16 %v696, %v695
  %v712 = vpack.c.b16 %v698, %v697
  %v713 = vpack.c.b16 %v700, %v699
  %v714 = vpack.c.b16 %v702, %v701
  %v715 = vpack.c.b16 %v704, %v703
  %v716 = vpack.c.b16 %v706, %v705
  %v717 = vpack.c.b16 %v708, %v707
  %v718 = vpack.c.b16 %v710, %v709
  %v720 = vsel %vm123, %v711, 0
  %v723 = vsel %vm123, %v712, 0
  %v726 = vsel %vm123, %v713, 0
  %v729 = vsel %vm123, %v714, 0
  %v732 = vsel %vm123, %v715, 0
  %v735 = vsel %vm123, %v716, 0
  %v738 = vsel %vm123, %v717, 0
  %v741 = vsel %vm123, %v718, 0
  %743 = vmatprep.subr.bf16.mxu0 0
  %744 = vmatpush1.bf16.msra.mxu0 %v120
  %745 = vmatprep.subr.bf16.mxu0 0
  %746 = vmatpush1.bf16.msra.mxu0 %v153
  %747 = vmatprep.subr.bf16.mxu0 0
  %748 = vmatpush1.bf16.msra.mxu0 0
  %749 = vmatprep.subr.bf16.mxu0 0
  %750 = vmatpush1.bf16.msra.mxu0 0
  %751 = vmatprep.subr.bf16.mxu0 0
  %752 = vmatpush1.bf16.msra.mxu0 0
  %753 = vmatprep.subr.bf16.mxu0 0
  %754 = vmatpush1.bf16.msra.mxu0 0
  %755 = vmatprep.subr.bf16.mxu0 0
  %756 = vmatpush1.bf16.msra.mxu0 0
  %757 = vmatprep.subr.bf16.mxu0 0
  %758 = vmatpush1.bf16.msra.mxu0 0
  %759 = vmatprep.subr.bf16.mxu0 0
  %760 = vmatpush1.bf16.msra.mxu0 0
  %761 = vmatprep.subr.bf16.mxu0 0
  %762 = vmatpush1.bf16.msra.mxu0 0
  %763 = vmatprep.subr.bf16.mxu0 0
  %764 = vmatpush1.bf16.msra.mxu0 0
  %765 = vmatprep.subr.bf16.mxu0 0
  %766 = vmatpush1.bf16.msra.mxu0 0
  %767 = vmatprep.subr.bf16.mxu0 0
  %768 = vmatpush1.bf16.msra.mxu0 0
  %769 = vmatprep.subr.bf16.mxu0 0
  %770 = vmatpush1.bf16.msra.mxu0 0
  %771 = vmatprep.subr.bf16.mxu0 0
  %772 = vmatpush1.bf16.msra.mxu0 0
  %773 = vmatprep.subr.bf16.mxu0 0
  %774 = vmatpush1.bf16.msra.mxu0 0
  %775 = vmatprep.mubr.bf16.mxu0 0
  %776 = vmatmul.mubr.bf16.gmra.mrb[0].mxu0 %v720
  %v777 = vpop.f32.mrb[0].mxu0
  %v778 = vadd.f32 %v70, %v777
  %v779 = vpop.f32.mrb[0].mxu0
  %v780 = vpop.f32.mrb[0].mxu0
  %v781 = vadd.f32 %v70, %v780
  %v782 = vpop.f32.mrb[0].mxu0
  %783 = vmatprep.mubr.bf16.mxu0 0
  %784 = vmatmul.mubr.bf16.gmra.mrb[0].mxu0 %v723
  %v785 = vpop.f32.mrb[0].mxu0
  %v786 = vadd.f32 %v70, %v785
  %v787 = vpop.f32.mrb[0].mxu0
  %v788 = vpop.f32.mrb[0].mxu0
  %v789 = vadd.f32 %v70, %v788
  %v790 = vpop.f32.mrb[0].mxu0
  %791 = vmatprep.mubr.bf16.mxu0 0
  %792 = vmatmul.mubr.bf16.gmra.mrb[0].mxu0 %v726
  %v793 = vpop.f32.mrb[0].mxu0
  %v794 = vadd.f32 %v70, %v793
  %v795 = vpop.f32.mrb[0].mxu0
  %v796 = vpop.f32.mrb[0].mxu0
  %v797 = vadd.f32 %v70, %v796
  %v798 = vpop.f32.mrb[0].mxu0
  %799 = vmatprep.mubr.bf16.mxu0 0
  %800 = vmatmul.mubr.bf16.gmra.mrb[0].mxu0 %v729
  %v801 = vpop.f32.mrb[0].mxu0
  %v802 = vadd.f32 %v70, %v801
  %v803 = vpop.f32.mrb[0].mxu0
  %v804 = vpop.f32.mrb[0].mxu0
  %v805 = vadd.f32 %v70, %v804
  %v806 = vpop.f32.mrb[0].mxu0
  %807 = vmatprep.mubr.bf16.mxu0 0
  %808 = vmatmul.mubr.bf16.gmra.mrb[0].mxu0 %v732
  %v809 = vpop.f32.mrb[0].mxu0
  %v810 = vadd.f32 %v70, %v809
  %v811 = vpop.f32.mrb[0].mxu0
  %v812 = vpop.f32.mrb[0].mxu0
  %v813 = vadd.f32 %v70, %v812
  %v814 = vpop.f32.mrb[0].mxu0
  %815 = vmatprep.mubr.bf16.mxu0 0
  %816 = vmatmul.mubr.bf16.gmra.mrb[0].mxu0 %v735
  %v817 = vpop.f32.mrb[0].mxu0
  %v818 = vadd.f32 %v70, %v817
  %v819 = vpop.f32.mrb[0].mxu0
  %v820 = vpop.f32.mrb[0].mxu0
  %v821 = vadd.f32 %v70, %v820
  %v822 = vpop.f32.mrb[0].mxu0
  %823 = vmatprep.mubr.bf16.mxu0 0
  %824 = vmatmul.mubr.bf16.gmra.mrb[0].mxu0 %v738
  %v825 = vpop.f32.mrb[0].mxu0
  %v826 = vadd.f32 %v70, %v825
  %v827 = vpop.f32.mrb[0].mxu0
  %v828 = vpop.f32.mrb[0].mxu0
  %v829 = vadd.f32 %v70, %v828
  %v830 = vpop.f32.mrb[0].mxu0
  %831 = vmatprep.mubr.bf16.mxu0 0
  %832 = vmatmul.mubr.bf16.gmra.mrb[0].mxu0 %v741
  %v833 = vpop.f32.mrb[0].mxu0
  %v834 = vadd.f32 %v70, %v833
  %v835 = vpop.f32.mrb[0].mxu0
  %v836 = vpop.f32.mrb[0].mxu0
  %v837 = vadd.f32 %v70, %v836
  %v838 = vpop.f32.mrb[0].mxu0
  %839 = vdwg.mxu0
  %v840 = vmax.f32 %v778, 0.0
  %v841 = vmax.f32 %v781, 0.0
  %v842 = vmax.f32 %v786, 0.0
  %v843 = vmax.f32 %v789, 0.0
  %v844 = vmax.f32 %v794, 0.0
  %v845 = vmax.f32 %v797, 0.0
  %v846 = vmax.f32 %v802, 0.0
  %v847 = vmax.f32 %v805, 0.0
  %v848 = vmax.f32 %v810, 0.0
  %v849 = vmax.f32 %v813, 0.0
  %v850 = vmax.f32 %v818, 0.0
  %v851 = vmax.f32 %v821, 0.0
  %v852 = vmax.f32 %v826, 0.0
  %v853 = vmax.f32 %v829, 0.0
  %v854 = vmax.f32 %v834, 0.0
  %v855 = vmax.f32 %v837, 0.0
  %v856 = vpack.c.bf16 %v841, %v840
  %v857 = vpack.c.bf16 %v843, %v842
  %v858 = vpack.c.bf16 %v845, %v844
  %v859 = vpack.c.bf16 %v847, %v846
  %v860 = vpack.c.bf16 %v849, %v848
  %v861 = vpack.c.bf16 %v851, %v850
  %v862 = vpack.c.bf16 %v853, %v852
  %v863 = vpack.c.bf16 %v855, %v854
  %v864 = vld [vmem:[%s1 + $0x8] sm:$0xf]
  %v865 = vld [vmem:[%s1 + $0x18] sm:$0xf]
  %v866 = vld [vmem:[%s1 + $0x28] sm:$0xf]
  %v867 = vld [vmem:[%s1 + $0x38] sm:$0xf]
  %v868 = vld [vmem:[%s1 + $0x48] sm:$0xf]
  %v869 = vld [vmem:[%s1 + $0x58] sm:$0xf]
  %v870 = vld [vmem:[%s1 + $0x68] sm:$0xf]
  %v878 = vunpack.c.l.b16 %v864
  %v879 = vunpack.c.l.b16 %v865
  %v880 = vunpack.c.l.b16 %v866
  %v881 = vunpack.c.l.b16 %v867
  %v882 = vunpack.c.l.b16 %v868
  %v883 = vunpack.c.l.b16 %v869
  %v884 = vunpack.c.l.b16 %v870
  %v885 = vpack.c.b16 %v879, %v878
  %v886 = vpack.c.b16 %v881, %v880
  %v887 = vpack.c.b16 %v883, %v882
  %v888 = vpack.c.b16 %v884, %v884
  %893 = vmatprep.subr.bf16.mxu0 0
  %894 = vmatpush1.bf16.msra.mxu0 %v856
  %895 = vmatprep.subr.bf16.mxu0 0
  %896 = vmatpush1.bf16.msra.mxu0 %v857
  %897 = vmatprep.subr.bf16.mxu0 0
  %898 = vmatpush1.bf16.msra.mxu0 %v858
  %899 = vmatprep.subr.bf16.mxu0 0
  %900 = vmatpush1.bf16.msra.mxu0 %v859
  %901 = vmatprep.subr.bf16.mxu0 0
  %902 = vmatpush1.bf16.msra.mxu0 %v860
  %903 = vmatprep.subr.bf16.mxu0 0
  %904 = vmatpush1.bf16.msra.mxu0 %v861
  %905 = vmatprep.subr.bf16.mxu0 0
  %906 = vmatpush1.bf16.msra.mxu0 %v862
  %907 = vmatprep.subr.bf16.mxu0 0
  %908 = vmatpush1.bf16.msra.mxu0 %v863
  %909 = vmatprep.subr.bf16.mxu0 0
  %910 = vmatpush1.bf16.msra.mxu0 0
  %911 = vmatprep.subr.bf16.mxu0 0
  %912 = vmatpush1.bf16.msra.mxu0 0
  %913 = vmatprep.subr.bf16.mxu0 0
  %914 = vmatpush1.bf16.msra.mxu0 0
  %915 = vmatprep.subr.bf16.mxu0 0
  %916 = vmatpush1.bf16.msra.mxu0 0
  %917 = vmatprep.subr.bf16.mxu0 0
  %918 = vmatpush1.bf16.msra.mxu0 0
  %919 = vmatprep.subr.bf16.mxu0 0
  %920 = vmatpush1.bf16.msra.mxu0 0
  %921 = vmatprep.subr.bf16.mxu0 0
  %922 = vmatpush1.bf16.msra.mxu0 0
  %923 = vmatprep.subr.bf16.mxu0 0
  %924 = vmatpush1.bf16.msra.mxu0 0
  %925 = vmatprep.mubr.bf16.mxu0 0
  %926 = vmatmul.mubr.bf16.gmra.mrb[0].mxu0 %v885
  %v927 = vpop.f32.mrb[0].mxu0
  %v928 = vadd.f32 0.0, %v927
  %v929 = vpop.f32.mrb[0].mxu0
  %v930 = vpop.f32.mrb[0].mxu0
  %v931 = vadd.f32 0.0, %v930
  %v932 = vpop.f32.mrb[0].mxu0
  %933 = vmatprep.mubr.bf16.mxu0 0
  %934 = vmatmul.mubr.bf16.gmra.mrb[0].mxu0 %v886
  %v935 = vpop.f32.mrb[0].mxu0
  %v936 = vadd.f32 0.0, %v935
  %v937 = vpop.f32.mrb[0].mxu0
  %v938 = vpop.f32.mrb[0].mxu0
  %v939 = vadd.f32 0.0, %v938
  %v940 = vpop.f32.mrb[0].mxu0
  %941 = vmatprep.mubr.bf16.mxu0 0
  %942 = vmatmul.mubr.bf16.gmra.mrb[0].mxu0 %v887
  %v943 = vpop.f32.mrb[0].mxu0
  %v944 = vadd.f32 0.0, %v943
  %v945 = vpop.f32.mrb[0].mxu0
  %v946 = vpop.f32.mrb[0].mxu0
  %v947 = vadd.f32 0.0, %v946
  %v948 = vpop.f32.mrb[0].mxu0
  %949 = vmatprep.mubr.bf16.mxu0 0
  %950 = vmatmul.mubr.bf16.gmra.mrb[0].mxu0 %v888
  %v951 = vpop.f32.mrb[0].mxu0
  %v952 = vadd.f32 0.0, %v951
  %v953 = vpop.f32.mrb[0].mxu0
  %v954 = vpop.f32.mrb[0].mxu0
  %v955 = vpop.f32.mrb[0].mxu0
  %956 = vdwg.mxu0
  %v957 = vadd.f32 %v634, %v928
  %v958 = vadd.f32 %v637, %v931
  %v959 = vadd.f32 %v642, %v936
  %v960 = vadd.f32 %v645, %v939
  %v961 = vadd.f32 %v650, %v944
  %v962 = vadd.f32 %v653, %v947
  %v963 = vadd.f32 %v658, %v952
  %v964 = vld [vmem:[%s0 + $0xc0] sm:$0xf]
  %v965 = vld [vmem:[%s0 + $0xc4] sm:$0xf]
  %v966 = vld [vmem:[%s0 + $0xc8] sm:$0xf]
  %v967 = vld [vmem:[%s0 + $0xcc] sm:$0xf]
  %v968 = vld [vmem:[%s0 + $0xd0] sm:$0xf]
  %v969 = vld [vmem:[%s0 + $0xd4] sm:$0xf]
  %v970 = vld [vmem:[%s0 + $0xd8] sm:$0xf]
  %v971 = vld [vmem:[%s0 + $0xdc] sm:$0xf]
  %v972 = vld [vmem:[%s0 + $0xe0] sm:$0xf]
  %v973 = vld [vmem:[%s0 + $0xe4] sm:$0xf]
  %v974 = vld [vmem:[%s0 + $0xe8] sm:$0xf]
  %v975 = vld [vmem:[%s0 + $0xec] sm:$0xf]
  %v976 = vld [vmem:[%s0 + $0xf0] sm:$0xf]
  %v977 = vld [vmem:[%s0 + $0xf4] sm:$0xf]
  %v978 = vld [vmem:[%s0 + $0xf8] sm:$0xf]
  %v979 = vld [vmem:[%s0 + $0xfc] sm:$0xf]
  %v996 = vunpack.c.l.b16 %v964
  %v997 = vunpack.c.l.b16 %v965
  %v998 = vunpack.c.l.b16 %v966
  %v999 = vunpack.c.l.b16 %v967
  %v1000 = vunpack.c.l.b16 %v968
  %v1001 = vunpack.c.l.b16 %v969
  %v1002 = vunpack.c.l.b16 %v970
  %v1003 = vunpack.c.l.b16 %v971
  %v1004 = vunpack.c.l.b16 %v972
  %v1005 = vunpack.c.l.b16 %v973
  %v1006 = vunpack.c.l.b16 %v974
  %v1007 = vunpack.c.l.b16 %v975
  %v1008 = vunpack.c.l.b16 %v976
  %v1009 = vunpack.c.l.b16 %v977
  %v1010 = vunpack.c.l.b16 %v978
  %v1011 = vunpack.c.l.b16 %v979
  %v1012 = vpack.c.b16 %v997, %v996
  %v1013 = vpack.c.b16 %v999, %v998
  %v1014 = vpack.c.b16 %v1001, %v1000
  %v1015 = vpack.c.b16 %v1003, %v1002
  %v1016 = vpack.c.b16 %v1005, %v1004
  %v1017 = vpack.c.b16 %v1007, %v1006
  %v1018 = vpack.c.b16 %v1009, %v1008
  %v1019 = vpack.c.b16 %v1011, %v1010
  %v1021 = vsel %vm123, %v1012, 0
  %v1024 = vsel %vm123, %v1013, 0
  %v1027 = vsel %vm123, %v1014, 0
  %v1030 = vsel %vm123, %v1015, 0
  %v1033 = vsel %vm123, %v1016, 0
  %v1036 = vsel %vm123, %v1017, 0
  %v1039 = vsel %vm123, %v1018, 0
  %v1042 = vsel %vm123, %v1019, 0
  %1044 = vmatprep.subr.bf16.mxu0 0
  %1045 = vmatpush1.bf16.msra.mxu0 %v120
  %1046 = vmatprep.subr.bf16.mxu0 0
  %1047 = vmatpush1.bf16.msra.mxu0 %v153
  %1048 = vmatprep.subr.bf16.mxu0 0
  %1049 = vmatpush1.bf16.msra.mxu0 0
  %1050 = vmatprep.subr.bf16.mxu0 0
  %1051 = vmatpush1.bf16.msra.mxu0 0
  %1052 = vmatprep.subr.bf16.mxu0 0
  %1053 = vmatpush1.bf16.msra.mxu0 0
  %1054 = vmatprep.subr.bf16.mxu0 0
  %1055 = vmatpush1.bf16.msra.mxu0 0
  %1056 = vmatprep.subr.bf16.mxu0 0
  %1057 = vmatpush1.bf16.msra.mxu0 0
  %1058 = vmatprep.subr.bf16.mxu0 0
  %1059 = vmatpush1.bf16.msra.mxu0 0
  %1060 = vmatprep.subr.bf16.mxu0 0
  %1061 = vmatpush1.bf16.msra.mxu0 0
  %1062 = vmatprep.subr.bf16.mxu0 0
  %1063 = vmatpush1.bf16.msra.mxu0 0
  %1064 = vmatprep.subr.bf16.mxu0 0
  %1065 = vmatpush1.bf16.msra.mxu0 0
  %1066 = vmatprep.subr.bf16.mxu0 0
  %1067 = vmatpush1.bf16.msra.mxu0 0
  %1068 = vmatprep.subr.bf16.mxu0 0
  %1069 = vmatpush1.bf16.msra.mxu0 0
  %1070 = vmatprep.subr.bf16.mxu0 0
  %1071 = vmatpush1.bf16.msra.mxu0 0
  %1072 = vmatprep.subr.bf16.mxu0 0
  %1073 = vmatpush1.bf16.msra.mxu0 0
  %1074 = vmatprep.subr.bf16.mxu0 0
  %1075 = vmatpush1.bf16.msra.mxu0 0
  %1076 = vmatprep.mubr.bf16.mxu0 0
  %1077 = vmatmul.mubr.bf16.gmra.mrb[0].mxu0 %v1021
  %v1078 = vpop.f32.mrb[0].mxu0
  %v1079 = vadd.f32 %v70, %v1078
  %v1080 = vpop.f32.mrb[0].mxu0
  %v1081 = vpop.f32.mrb[0].mxu0
  %v1082 = vadd.f32 %v70, %v1081
  %v1083 = vpop.f32.mrb[0].mxu0
  %1084 = vmatprep.mubr.bf16.mxu0 0
  %1085 = vmatmul.mubr.bf16.gmra.mrb[0].mxu0 %v1024
  %v1086 = vpop.f32.mrb[0].mxu0
  %v1087 = vadd.f32 %v70, %v1086
  %v1088 = vpop.f32.mrb[0].mxu0
  %v1089 = vpop.f32.mrb[0].mxu0
  %v1090 = vadd.f32 %v70, %v1089
  %v1091 = vpop.f32.mrb[0].mxu0
  %1092 = vmatprep.mubr.bf16.mxu0 0
  %1093 = vmatmul.mubr.bf16.gmra.mrb[0].mxu0 %v1027
  %v1094 = vpop.f32.mrb[0].mxu0
  %v1095 = vadd.f32 %v70, %v1094
  %v1096 = vpop.f32.mrb[0].mxu0
  %v1097 = vpop.f32.mrb[0].mxu0
  %v1098 = vadd.f32 %v70, %v1097
  %v1099 = vpop.f32.mrb[0].mxu0
  %1100 = vmatprep.mubr.bf16.mxu0 0
  %1101 = vmatmul.mubr.bf16.gmra.mrb[0].mxu0 %v1030
  %v1102 = vpop.f32.mrb[0].mxu0
  %v1103 = vadd.f32 %v70, %v1102
  %v1104 = vpop.f32.mrb[0].mxu0
  %v1105 = vpop.f32.mrb[0].mxu0
  %v1106 = vadd.f32 %v70, %v1105
  %v1107 = vpop.f32.mrb[0].mxu0
  %1108 = vmatprep.mubr.bf16.mxu0 0
  %1109 = vmatmul.mubr.bf16.gmra.mrb[0].mxu0 %v1033
  %v1110 = vpop.f32.mrb[0].mxu0
  %v1111 = vadd.f32 %v70, %v1110
  %v1112 = vpop.f32.mrb[0].mxu0
  %v1113 = vpop.f32.mrb[0].mxu0
  %v1114 = vadd.f32 %v70, %v1113
  %v1115 = vpop.f32.mrb[0].mxu0
  %1116 = vmatprep.mubr.bf16.mxu0 0
  %1117 = vmatmul.mubr.bf16.gmra.mrb[0].mxu0 %v1036
  %v1118 = vpop.f32.mrb[0].mxu0
  %v1119 = vadd.f32 %v70, %v1118
  %v1120 = vpop.f32.mrb[0].mxu0
  %v1121 = vpop.f32.mrb[0].mxu0
  %v1122 = vadd.f32 %v70, %v1121
  %v1123 = vpop.f32.mrb[0].mxu0
  %1124 = vmatprep.mubr.bf16.mxu0 0
  %1125 = vmatmul.mubr.bf16.gmra.mrb[0].mxu0 %v1039
  %v1126 = vpop.f32.mrb[0].mxu0
  %v1127 = vadd.f32 %v70, %v1126
  %v1128 = vpop.f32.mrb[0].mxu0
  %v1129 = vpop.f32.mrb[0].mxu0
  %v1130 = vadd.f32 %v70, %v1129
  %v1131 = vpop.f32.mrb[0].mxu0
  %1132 = vmatprep.mubr.bf16.mxu0 0
  %1133 = vmatmul.mubr.bf16.gmra.mrb[0].mxu0 %v1042
  %v1134 = vpop.f32.mrb[0].mxu0
  %v1135 = vadd.f32 %v70, %v1134
  %v1136 = vpop.f32.mrb[0].mxu0
  %v1137 = vpop.f32.mrb[0].mxu0
  %v1138 = vadd.f32 %v70, %v1137
  %v1139 = vpop.f32.mrb[0].mxu0
  %1140 = vdwg.mxu0
  %v1141 = vmax.f32 %v1079, 0.0
  %v1142 = vmax.f32 %v1082, 0.0
  %v1143 = vmax.f32 %v1087, 0.0
  %v1144 = vmax.f32 %v1090, 0.0
  %v1145 = vmax.f32 %v1095, 0.0
  %v1146 = vmax.f32 %v1098, 0.0
  %v1147 = vmax.f32 %v1103, 0.0
  %v1148 = vmax.f32 %v1106, 0.0
  %v1149 = vmax.f32 %v1111, 0.0
  %v1150 = vmax.f32 %v1114, 0.0
  %v1151 = vmax.f32 %v1119, 0.0
  %v1152 = vmax.f32 %v1122, 0.0
  %v1153 = vmax.f32 %v1127, 0.0
  %v1154 = vmax.f32 %v1130, 0.0
  %v1155 = vmax.f32 %v1135, 0.0
  %v1156 = vmax.f32 %v1138, 0.0
  %v1157 = vpack.c.bf16 %v1142, %v1141
  %v1158 = vpack.c.bf16 %v1144, %v1143
  %v1159 = vpack.c.bf16 %v1146, %v1145
  %v1160 = vpack.c.bf16 %v1148, %v1147
  %v1161 = vpack.c.bf16 %v1150, %v1149
  %v1162 = vpack.c.bf16 %v1152, %v1151
  %v1163 = vpack.c.bf16 %v1154, %v1153
  %v1164 = vpack.c.bf16 %v1156, %v1155
  %v1165 = vld [vmem:[%s1 + $0xc] sm:$0xf]
  %v1166 = vld [vmem:[%s1 + $0x1c] sm:$0xf]
  %v1167 = vld [vmem:[%s1 + $0x2c] sm:$0xf]
  %v1168 = vld [vmem:[%s1 + $0x3c] sm:$0xf]
  %v1169 = vld [vmem:[%s1 + $0x4c] sm:$0xf]
  %v1170 = vld [vmem:[%s1 + $0x5c] sm:$0xf]
  %v1171 = vld [vmem:[%s1 + $0x6c] sm:$0xf]
  %v1179 = vunpack.c.l.b16 %v1165
  %v1180 = vunpack.c.l.b16 %v1166
  %v1181 = vunpack.c.l.b16 %v1167
  %v1182 = vunpack.c.l.b16 %v1168
  %v1183 = vunpack.c.l.b16 %v1169
  %v1184 = vunpack.c.l.b16 %v1170
  %v1185 = vunpack.c.l.b16 %v1171
  %v1186 = vpack.c.b16 %v1180, %v1179
  %v1187 = vpack.c.b16 %v1182, %v1181
  %v1188 = vpack.c.b16 %v1184, %v1183
  %v1189 = vpack.c.b16 %v1185, %v1185
  %1194 = vmatprep.subr.bf16.mxu0 0
  %1195 = vmatpush1.bf16.msra.mxu0 %v1157
  %1196 = vmatprep.subr.bf16.mxu0 0
  %1197 = vmatpush1.bf16.msra.mxu0 %v1158
  %1198 = vmatprep.subr.bf16.mxu0 0
  %1199 = vmatpush1.bf16.msra.mxu0 %v1159
  %1200 = vmatprep.subr.bf16.mxu0 0
  %1201 = vmatpush1.bf16.msra.mxu0 %v1160
  %1202 = vmatprep.subr.bf16.mxu0 0
  %1203 = vmatpush1.bf16.msra.mxu0 %v1161
  %1204 = vmatprep.subr.bf16.mxu0 0
  %1205 = vmatpush1.bf16.msra.mxu0 %v1162
  %1206 = vmatprep.subr.bf16.mxu0 0
  %1207 = vmatpush1.bf16.msra.mxu0 %v1163
  %1208 = vmatprep.subr.bf16.mxu0 0
  %1209 = vmatpush1.bf16.msra.mxu0 %v1164
  %1210 = vmatprep.subr.bf16.mxu0 0
  %1211 = vmatpush1.bf16.msra.mxu0 0
  %1212 = vmatprep.subr.bf16.mxu0 0
  %1213 = vmatpush1.bf16.msra.mxu0 0
  %1214 = vmatprep.subr.bf16.mxu0 0
  %1215 = vmatpush1.bf16.msra.mxu0 0
  %1216 = vmatprep.subr.bf16.mxu0 0
  %1217 = vmatpush1.bf16.msra.mxu0 0
  %1218 = vmatprep.subr.bf16.mxu0 0
  %1219 = vmatpush1.bf16.msra.mxu0 0
  %1220 = vmatprep.subr.bf16.mxu0 0
  %1221 = vmatpush1.bf16.msra.mxu0 0
  %1222 = vmatprep.subr.bf16.mxu0 0
  %1223 = vmatpush1.bf16.msra.mxu0 0
  %1224 = vmatprep.subr.bf16.mxu0 0
  %1225 = vmatpush1.bf16.msra.mxu0 0
  %1226 = vmatprep.mubr.bf16.mxu0 0
  %1227 = vmatmul.mubr.bf16.gmra.mrb[0].mxu0 %v1186
  %v1228 = vpop.f32.mrb[0].mxu0
  %v1229 = vadd.f32 0.0, %v1228
  %v1230 = vpop.f32.mrb[0].mxu0
  %v1231 = vpop.f32.mrb[0].mxu0
  %v1232 = vadd.f32 0.0, %v1231
  %v1233 = vpop.f32.mrb[0].mxu0
  %1234 = vmatprep.mubr.bf16.mxu0 0
  %1235 = vmatmul.mubr.bf16.gmra.mrb[0].mxu0 %v1187
  %v1236 = vpop.f32.mrb[0].mxu0
  %v1237 = vadd.f32 0.0, %v1236
  %v1238 = vpop.f32.mrb[0].mxu0
  %v1239 = vpop.f32.mrb[0].mxu0
  %v1240 = vadd.f32 0.0, %v1239
  %v1241 = vpop.f32.mrb[0].mxu0
  %1242 = vmatprep.mubr.bf16.mxu0 0
  %1243 = vmatmul.mubr.bf16.gmra.mrb[0].mxu0 %v1188
  %v1244 = vpop.f32.mrb[0].mxu0
  %v1245 = vadd.f32 0.0, %v1244
  %v1246 = vpop.f32.mrb[0].mxu0
  %v1247 = vpop.f32.mrb[0].mxu0
  %v1248 = vadd.f32 0.0, %v1247
  %v1249 = vpop.f32.mrb[0].mxu0
  %1250 = vmatprep.mubr.bf16.mxu0 0
  %1251 = vmatmul.mubr.bf16.gmra.mrb[0].mxu0 %v1189
  %v1252 = vpop.f32.mrb[0].mxu0
  %v1253 = vadd.f32 0.0, %v1252
  %v1254 = vpop.f32.mrb[0].mxu0
  %v1255 = vpop.f32.mrb[0].mxu0
  %v1256 = vpop.f32.mrb[0].mxu0
  %1257 = vdwg.mxu0
  %v1258 = vadd.f32 %v957, %v1229
  %v1259 = vadd.f32 %v958, %v1232
  %v1260 = vadd.f32 %v959, %v1237
  %v1261 = vadd.f32 %v960, %v1240
  %v1262 = vadd.f32 %v961, %v1245
  %v1263 = vadd.f32 %v962, %v1248
  %v1264 = vadd.f32 %v963, %v1253
  %v1265 = vld [vmem:[%s4] sm:$0xff]
  %v1266 = vld [vmem:[%s4 + $0x8] sm:$0xff]
  %v1267 = vld [vmem:[%s4 + $0x10] sm:$0xff]
  %v1268 = vld [vmem:[%s4 + $0x18] sm:$0xff]
  %v1269 = vld [vmem:[%s4 + $0x20] sm:$0xff]
  %v1270 = vld [vmem:[%s4 + $0x28] sm:$0xff]
  %v1271 = vld [vmem:[%s4 + $0x30] sm:$0xff]
  %v1272 = vadd.f32 %v1265, %v1258
  %v1273 = vadd.f32 %v1266, %v1259
  %v1274 = vadd.f32 %v1267, %v1260
  %v1275 = vadd.f32 %v1268, %v1261
  %v1276 = vadd.f32 %v1269, %v1262
  %v1277 = vadd.f32 %v1270, %v1263
  %v1278 = vadd.f32 %v1271, %v1264
  %v1279 = vpack.c.bf16 %v1273, %v1272
  %v1280 = vpack.c.bf16 %v1275, %v1274
  %v1281 = vpack.c.bf16 %v1277, %v1276
  %v1282 = vpack.c.bf16 %v1278, %v1278
  %v1283 = vld [vmem:[%s5] sm:$0xf]
  %v1284 = vld [vmem:[%s5 + $0x4] sm:$0xf]
  %v1285 = vld [vmem:[%s5 + $0x8] sm:$0xf]
  %v1286 = vld [vmem:[%s5 + $0xc] sm:$0xf]
  %v1287 = vld [vmem:[%s6] sm:$0x1]
  %v1289 = vlaneseq
  %v1290 = vshrl.u32 %v1289, 7
  %v1291 = vsub.s32 0, %v1290
  %v1292 = vrot.slane %v1287, %v1291
  %v1298 = vunpack.c.l.b16 %v1283
  %v1299 = vunpack.c.l.b16 %v1284
  %v1300 = vunpack.c.l.b16 %v1285
  %v1301 = vunpack.c.l.b16 %v1286
  %v1302 = vpack.c.b16 %v1299, %v1298
  %v1303 = vpack.c.b16 %v1301, %v1300
  %vm1306 = vcmask 261120
  %v1308 = vsel %vm1306, %v1279, 0
  %v1311 = vsel %vm1306, %v1280, 0
  %v1314 = vsel %vm1306, %v1281, 0
  %v1317 = vsel %vm1306, %v1282, 0
  %1319 = vmatprep.subr.bf16.mxu0 0
  %1320 = vmatpush1.bf16.msra.mxu0 %v1302
  %1321 = vmatprep.subr.bf16.mxu0 0
  %1322 = vmatpush1.bf16.msra.mxu0 %v1303
  %1323 = vmatprep.subr.bf16.mxu0 0
  %1324 = vmatpush1.bf16.msra.mxu0 0
  %1325 = vmatprep.subr.bf16.mxu0 0
  %1326 = vmatpush1.bf16.msra.mxu0 0
  %1327 = vmatprep.subr.bf16.mxu0 0
  %1328 = vmatpush1.bf16.msra.mxu0 0
  %1329 = vmatprep.subr.bf16.mxu0 0
  %1330 = vmatpush1.bf16.msra.mxu0 0
  %1331 = vmatprep.subr.bf16.mxu0 0
  %1332 = vmatpush1.bf16.msra.mxu0 0
  %1333 = vmatprep.subr.bf16.mxu0 0
  %1334 = vmatpush1.bf16.msra.mxu0 0
  %1335 = vmatprep.subr.bf16.mxu0 0
  %1336 = vmatpush1.bf16.msra.mxu0 0
  %1337 = vmatprep.subr.bf16.mxu0 0
  %1338 = vmatpush1.bf16.msra.mxu0 0
  %1339 = vmatprep.subr.bf16.mxu0 0
  %1340 = vmatpush1.bf16.msra.mxu0 0
  %1341 = vmatprep.subr.bf16.mxu0 0
  %1342 = vmatpush1.bf16.msra.mxu0 0
  %1343 = vmatprep.subr.bf16.mxu0 0
  %1344 = vmatpush1.bf16.msra.mxu0 0
  %1345 = vmatprep.subr.bf16.mxu0 0
  %1346 = vmatpush1.bf16.msra.mxu0 0
  %1347 = vmatprep.subr.bf16.mxu0 0
  %1348 = vmatpush1.bf16.msra.mxu0 0
  %1349 = vmatprep.subr.bf16.mxu0 0
  %1350 = vmatpush1.bf16.msra.mxu0 0
  %1351 = vmatprep.mubr.bf16.mxu0 0
  %1352 = vmatmul.mubr.bf16.gmra.mrb[0].mxu0 %v1308
  %v1353 = vpop.f32.mrb[0].mxu0
  %v1354 = vadd.f32 %v1292, %v1353
  %v1355 = vpop.f32.mrb[0].mxu0
  %v1356 = vpop.f32.mrb[0].mxu0
  %v1357 = vadd.f32 %v1292, %v1356
  %v1358 = vpop.f32.mrb[0].mxu0
  %1359 = vmatprep.mubr.bf16.mxu0 0
  %1360 = vmatmul.mubr.bf16.gmra.mrb[0].mxu0 %v1311
  %v1361 = vpop.f32.mrb[0].mxu0
  %v1362 = vadd.f32 %v1292, %v1361
  %v1363 = vpop.f32.mrb[0].mxu0
  %v1364 = vpop.f32.mrb[0].mxu0
  %v1365 = vadd.f32 %v1292, %v1364
  %v1366 = vpop.f32.mrb[0].mxu0
  %1367 = vmatprep.mubr.bf16.mxu0 0
  %1368 = vmatmul.mubr.bf16.gmra.mrb[0].mxu0 %v1314
  %v1369 = vpop.f32.mrb[0].mxu0
  %v1370 = vadd.f32 %v1292, %v1369
  %v1371 = vpop.f32.mrb[0].mxu0
  %v1372 = vpop.f32.mrb[0].mxu0
  %v1373 = vadd.f32 %v1292, %v1372
  %v1374 = vpop.f32.mrb[0].mxu0
  %1375 = vmatprep.mubr.bf16.mxu0 0
  %1376 = vmatmul.mubr.bf16.gmra.mrb[0].mxu0 %v1317
  %v1377 = vpop.f32.mrb[0].mxu0
  %v1378 = vadd.f32 %v1292, %v1377
  %v1379 = vpop.f32.mrb[0].mxu0
  %v1380 = vpop.f32.mrb[0].mxu0
  %v1381 = vpop.f32.mrb[0].mxu0
  %1382 = vdwg.mxu0
  %v1383 = vld [vmem:[%s7] sm:$0xff]
  %v1384 = vld [vmem:[%s7 + $0x8] sm:$0xff]
  %v1385 = vld [vmem:[%s7 + $0x10] sm:$0xff]
  %v1386 = vld [vmem:[%s7 + $0x18] sm:$0xff]
  %v1387 = vld [vmem:[%s8] sm:$0x3]
  %v1388 = vld [vmem:[%s9] sm:$0xf]
  %v1389 = vld [vmem:[%s9 + $0x4] sm:$0xf]
  %v1390 = vld [vmem:[%s9 + $0x8] sm:$0xf]
  %v1391 = vld [vmem:[%s9 + $0xc] sm:$0xf]
  %v1392 = vld [vmem:[%s10] sm:$0x1]
  %v1394 = vlaneseq
  %v1395 = vshrl.u32 %v1394, 7
  %v1396 = vsub.s32 0, %v1395
  %v1397 = vrot.slane %v1387, %v1396
  %v1399 = vadd.f32 %v1354, %v1397
  %v1400 = vxor.u32 %v1399, 2147483648
  %v1401 = vmul.f32 %v1400, 1.442695
  %v1402 = vpow.pop %v1401
  %v1403 = vadd.f32 %v1402, 1.0
  %v1404 = vrcp.pop %v1403
  %v1405 = vmul.f32 1.0, %v1404
  %1406 = vrot.lane.b32.xlu0 %v1397, 64
  %v1407 = vpop.permute.xlu0 %1406
  %v1409 = vmul.f32 %v1405, %v1407
  %1411 = vrot.lane.b32.xlu0 %v1409, 64
  %v1412 = vpop.permute.xlu0 %1411
  %v1414 = vadd.f32 %v1354, %v1412
  %v1415 = vtanh.pop %v1414
  %v1416 = vsub.f32 1.0, %v1405
  %1418 = vrot.lane.b32.xlu0 %v1415, 96
  %v1419 = vpop.permute.xlu0 %1418
  %v1421 = vmul.f32 %v1416, %v1419
  %v1422 = vmul.f32 %v1405, 0.0
  %v1423 = vadd.f32 %v1421, %v1422
  %v1424 = vpack.c.bf16 %v1423, %v1423
  %v1425 = vlaneseq
  %v1426 = vshrl.u32 %v1425, 7
  %v1427 = vsub.s32 1, %v1426
  %v1428 = vrot.slane %v1387, %v1427
  %1431 = vrot.lane.b32.xlu0 %v1424, 96
  %v1432 = vpop.permute.xlu0 %1431
  %v1437 = vunpack.c.l.b16 %v1383
  %v1438 = vunpack.c.h.b16 %v1383
  %v1439 = vunpack.c.l.b16 %v1384
  %v1440 = vunpack.c.h.b16 %v1384
  %v1441 = vunpack.c.l.b16 %v1385
  %v1442 = vunpack.c.h.b16 %v1385
  %v1443 = vunpack.c.l.b16 %v1386
  %v1444 = vunpack.c.h.b16 %v1386
  %v1445 = vpack.c.b16 %v1439, %v1437
  %v1446 = vpack.c.b16 %v1440, %v1438
  %v1447 = vpack.c.b16 %v1443, %v1441
  %v1448 = vpack.c.b16 %v1444, %v1442
  %v1454 = vsel %vm1306, %v1432, 0
  %1456 = vmatprep.subr.bf16.mxu0 %v1446
  %1457 = vmatpush1.bf16.msra.mxu0 %v1445
  %1458 = vmatprep.subr.bf16.mxu0 %v1448
  %1459 = vmatpush1.bf16.msra.mxu0 %v1447
  %1460 = vmatprep.subr.bf16.mxu0 0
  %1461 = vmatpush1.bf16.msra.mxu0 0
  %1462 = vmatprep.subr.bf16.mxu0 0
  %1463 = vmatpush1.bf16.msra.mxu0 0
  %1464 = vmatprep.subr.bf16.mxu0 0
  %1465 = vmatpush1.bf16.msra.mxu0 0
  %1466 = vmatprep.subr.bf16.mxu0 0
  %1467 = vmatpush1.bf16.msra.mxu0 0
  %1468 = vmatprep.subr.bf16.mxu0 0
  %1469 = vmatpush1.bf16.msra.mxu0 0
  %1470 = vmatprep.subr.bf16.mxu0 0
  %1471 = vmatpush1.bf16.msra.mxu0 0
  %1472 = vmatprep.subr.bf16.mxu0 0
  %1473 = vmatpush1.bf16.msra.mxu0 0
  %1474 = vmatprep.subr.bf16.mxu0 0
  %1475 = vmatpush1.bf16.msra.mxu0 0
  %1476 = vmatprep.subr.bf16.mxu0 0
  %1477 = vmatpush1.bf16.msra.mxu0 0
  %1478 = vmatprep.subr.bf16.mxu0 0
  %1479 = vmatpush1.bf16.msra.mxu0 0
  %1480 = vmatprep.subr.bf16.mxu0 0
  %1481 = vmatpush1.bf16.msra.mxu0 0
  %1482 = vmatprep.subr.bf16.mxu0 0
  %1483 = vmatpush1.bf16.msra.mxu0 0
  %1484 = vmatprep.subr.bf16.mxu0 0
  %1485 = vmatpush1.bf16.msra.mxu0 0
  %1486 = vmatprep.subr.bf16.mxu0 0
  %1487 = vmatpush1.bf16.msra.mxu0 0
  %1488 = vmatprep.mubr.bf16.mxu0 0
  %1489 = vmatmul.mubr.bf16.gmra.mrb[0].mxu0 %v1454
  %v1490 = vpop.f32.mrb[0].mxu0
  %v1491 = vadd.f32 %v1397, %v1490
  %v1492 = vpop.f32.mrb[0].mxu0
  %v1493 = vadd.f32 %v1428, %v1492
  %v1494 = vpop.f32.mrb[0].mxu0
  %v1495 = vpop.f32.mrb[0].mxu0
  %1496 = vdwg.mxu0
  %v1498 = vlaneseq
  %v1499 = vshrl.u32 %v1498, 7
  %v1500 = vsub.s32 0, %v1499
  %v1501 = vrot.slane %v1392, %v1500
  %v1503 = vadd.f32 %v1493, %v1501
  %v1504 = vxor.u32 %v1503, 2147483648
  %v1505 = vmul.f32 %v1504, 1.442695
  %v1506 = vpow.pop %v1505
  %v1507 = vadd.f32 %v1506, 1.0
  %v1508 = vrcp.pop %v1507
  %v1509 = vmul.f32 1.0, %v1508
  %1510 = vrot.lane.b32.xlu0 %v1501, 64
  %v1511 = vpop.permute.xlu0 %1510
  %v1513 = vmul.f32 %v1509, %v1511
  %1515 = vrot.lane.b32.xlu0 %v1513, 64
  %v1516 = vpop.permute.xlu0 %1515
  %v1518 = vadd.f32 %v1493, %v1516
  %v1519 = vtanh.pop %v1518
  %v1520 = vsub.f32 1.0, %v1509
  %1522 = vrot.lane.b32.xlu0 %v1519, 96
  %v1523 = vpop.permute.xlu0 %1522
  %v1525 = vmul.f32 %v1520, %v1523
  %v1526 = vmul.f32 %v1509, 0.0
  %v1527 = vadd.f32 %v1525, %v1526
  %1529 = vrot.lane.b32.xlu0 %v1527, 96
  %v1530 = vpop.permute.xlu0 %1529
  %1532 = vst.msk [vmem:[#allocation2] sm:$0xff] %vm1306, %v1530
  %v1533 = vadd.f32 %v1357, %v1491
  %v1534 = vxor.u32 %v1533, 2147483648
  %v1535 = vmul.f32 %v1534, 1.442695
  %v1536 = vpow.pop %v1535
  %v1537 = vadd.f32 %v1536, 1.0
  %v1538 = vrcp.pop %v1537
  %v1539 = vmul.f32 1.0, %v1538
  %1541 = vrot.lane.b32.xlu0 %v1491, 64
  %v1542 = vpop.permute.xlu0 %1541
  %v1544 = vmul.f32 %v1539, %v1542
  %1546 = vrot.lane.b32.xlu0 %v1544, 64
  %v1547 = vpop.permute.xlu0 %1546
  %v1549 = vadd.f32 %v1357, %v1547
  %v1550 = vtanh.pop %v1549
  %v1551 = vsub.f32 1.0, %v1539
  %1553 = vrot.lane.b32.xlu0 %v1550, 96
  %v1554 = vpop.permute.xlu0 %1553
  %v1556 = vmul.f32 %v1551, %v1554
  %v1557 = vmul.f32 %v1539, %v1423
  %v1558 = vadd.f32 %v1556, %v1557
  %v1559 = vpack.c.bf16 %v1558, %v1558
  %1561 = vrot.lane.b32.xlu0 %v1559, 96
  %v1562 = vpop.permute.xlu0 %1561
  %v1564 = vsel %vm1306, %v1562, 0
  %1566 = vmatprep.subr.bf16.mxu0 %v1446
  %1567 = vmatpush1.bf16.msra.mxu0 %v1445
  %1568 = vmatprep.subr.bf16.mxu0 %v1448
  %1569 = vmatpush1.bf16.msra.mxu0 %v1447
  %1570 = vmatprep.subr.bf16.mxu0 0
  %1571 = vmatpush1.bf16.msra.mxu0 0
  %1572 = vmatprep.subr.bf16.mxu0 0
  %1573 = vmatpush1.bf16.msra.mxu0 0
  %1574 = vmatprep.subr.bf16.mxu0 0
  %1575 = vmatpush1.bf16.msra.mxu0 0
  %1576 = vmatprep.subr.bf16.mxu0 0
  %1577 = vmatpush1.bf16.msra.mxu0 0
  %1578 = vmatprep.subr.bf16.mxu0 0
  %1579 = vmatpush1.bf16.msra.mxu0 0
  %1580 = vmatprep.subr.bf16.mxu0 0
  %1581 = vmatpush1.bf16.msra.mxu0 0
  %1582 = vmatprep.subr.bf16.mxu0 0
  %1583 = vmatpush1.bf16.msra.mxu0 0
  %1584 = vmatprep.subr.bf16.mxu0 0
  %1585 = vmatpush1.bf16.msra.mxu0 0
  %1586 = vmatprep.subr.bf16.mxu0 0
  %1587 = vmatpush1.bf16.msra.mxu0 0
  %1588 = vmatprep.subr.bf16.mxu0 0
  %1589 = vmatpush1.bf16.msra.mxu0 0
  %1590 = vmatprep.subr.bf16.mxu0 0
  %1591 = vmatpush1.bf16.msra.mxu0 0
  %1592 = vmatprep.subr.bf16.mxu0 0
  %1593 = vmatpush1.bf16.msra.mxu0 0
  %1594 = vmatprep.subr.bf16.mxu0 0
  %1595 = vmatpush1.bf16.msra.mxu0 0
  %1596 = vmatprep.subr.bf16.mxu0 0
  %1597 = vmatpush1.bf16.msra.mxu0 0
  %1598 = vmatprep.mubr.bf16.mxu0 0
  %1599 = vmatmul.mubr.bf16.gmra.mrb[0].mxu0 %v1564
  %v1600 = vpop.f32.mrb[0].mxu0
  %v1601 = vadd.f32 %v1397, %v1600
  %v1602 = vpop.f32.mrb[0].mxu0
  %v1603 = vadd.f32 %v1428, %v1602
  %v1604 = vpop.f32.mrb[0].mxu0
  %v1605 = vpop.f32.mrb[0].mxu0
  %1606 = vdwg.mxu0
  %v1607 = vpack.c.bf16 %v1527, %v1527
  %1609 = vrot.lane.b32.xlu0 %v1607, 96
  %v1610 = vpop.permute.xlu0 %1609
  %v1615 = vunpack.c.l.b16 %v1388
  %v1616 = vunpack.c.l.b16 %v1389
  %v1617 = vunpack.c.l.b16 %v1390
  %v1618 = vunpack.c.l.b16 %v1391
  %v1619 = vpack.c.b16 %v1616, %v1615
  %v1620 = vpack.c.b16 %v1618, %v1617
  %v1624 = vsel %vm1306, %v1610, 0
  %1626 = vmatprep.subr.bf16.mxu0 0
  %1627 = vmatpush1.bf16.msra.mxu0 %v1619
  %1628 = vmatprep.subr.bf16.mxu0 0
  %1629 = vmatpush1.bf16.msra.mxu0 %v1620
  %1630 = vmatprep.subr.bf16.mxu0 0
  %1631 = vmatpush1.bf16.msra.mxu0 0
  %1632 = vmatprep.subr.bf16.mxu0 0
  %1633 = vmatpush1.bf16.msra.mxu0 0
  %1634 = vmatprep.subr.bf16.mxu0 0
  %1635 = vmatpush1.bf16.msra.mxu0 0
  %1636 = vmatprep.subr.bf16.mxu0 0
  %1637 = vmatpush1.bf16.msra.mxu0 0
  %1638 = vmatprep.subr.bf16.mxu0 0
  %1639 = vmatpush1.bf16.msra.mxu0 0
  %1640 = vmatprep.subr.bf16.mxu0 0
  %1641 = vmatpush1.bf16.msra.mxu0 0
  %1642 = vmatprep.subr.bf16.mxu0 0
  %1643 = vmatpush1.bf16.msra.mxu0 0
  %1644 = vmatprep.subr.bf16.mxu0 0
  %1645 = vmatpush1.bf16.msra.mxu0 0
  %1646 = vmatprep.subr.bf16.mxu0 0
  %1647 = vmatpush1.bf16.msra.mxu0 0
  %1648 = vmatprep.subr.bf16.mxu0 0
  %1649 = vmatpush1.bf16.msra.mxu0 0
  %1650 = vmatprep.subr.bf16.mxu0 0
  %1651 = vmatpush1.bf16.msra.mxu0 0
  %1652 = vmatprep.subr.bf16.mxu0 0
  %1653 = vmatpush1.bf16.msra.mxu0 0
  %1654 = vmatprep.subr.bf16.mxu0 0
  %1655 = vmatpush1.bf16.msra.mxu0 0
  %1656 = vmatprep.subr.bf16.mxu0 0
  %1657 = vmatpush1.bf16.msra.mxu0 0
  %1658 = vmatprep.mubr.bf16.mxu0 0
  %1659 = vmatmul.mubr.bf16.gmra.mrb[0].mxu0 %v1624
  %v1660 = vpop.f32.mrb[0].mxu0
  %v1661 = vadd.f32 %v1501, %v1660
  %v1662 = vpop.f32.mrb[0].mxu0
  %v1663 = vpop.f32.mrb[0].mxu0
  %v1664 = vpop.f32.mrb[0].mxu0
  %1665 = vdwg.mxu0
  %v1666 = vadd.f32 %v1603, %v1661
  %v1667 = vxor.u32 %v1666, 2147483648
  %v1668 = vmul.f32 %v1667, 1.442695
  %v1669 = vpow.pop %v1668
  %v1670 = vadd.f32 %v1669, 1.0
  %v1671 = vrcp.pop %v1670
  %v1672 = vmul.f32 1.0, %v1671
  %1674 = vrot.lane.b32.xlu0 %v1661, 64
  %v1675 = vpop.permute.xlu0 %1674
  %v1677 = vmul.f32 %v1672, %v1675
  %1679 = vrot.lane.b32.xlu0 %v1677, 64
  %v1680 = vpop.permute.xlu0 %1679
  %v1682 = vadd.f32 %v1603, %v1680
  %v1683 = vtanh.pop %v1682
  %v1684 = vsub.f32 1.0, %v1672
  %1686 = vrot.lane.b32.xlu0 %v1683, 96
  %v1687 = vpop.permute.xlu0 %1686
  %v1689 = vmul.f32 %v1684, %v1687
  %v1690 = vmul.f32 %v1672, %v1527
  %v1691 = vadd.f32 %v1689, %v1690
  %1693 = vrot.lane.b32.xlu0 %v1691, 96
  %v1694 = vpop.permute.xlu0 %1693
  %1696 = vst.msk [vmem:[#allocation2 + $0x8] sm:$0xff] %vm1306, %v1694
  %v1697 = vadd.f32 %v1362, %v1601
  %v1698 = vxor.u32 %v1697, 2147483648
  %v1699 = vmul.f32 %v1698, 1.442695
  %v1700 = vpow.pop %v1699
  %v1701 = vadd.f32 %v1700, 1.0
  %v1702 = vrcp.pop %v1701
  %v1703 = vmul.f32 1.0, %v1702
  %1705 = vrot.lane.b32.xlu0 %v1601, 64
  %v1706 = vpop.permute.xlu0 %1705
  %v1708 = vmul.f32 %v1703, %v1706
  %1710 = vrot.lane.b32.xlu0 %v1708, 64
  %v1711 = vpop.permute.xlu0 %1710
  %v1713 = vadd.f32 %v1362, %v1711
  %v1714 = vtanh.pop %v1713
  %v1715 = vsub.f32 1.0, %v1703
  %1717 = vrot.lane.b32.xlu0 %v1714, 96
  %v1718 = vpop.permute.xlu0 %1717
  %v1720 = vmul.f32 %v1715, %v1718
  %v1721 = vmul.f32 %v1703, %v1558
  %v1722 = vadd.f32 %v1720, %v1721
  %v1723 = vpack.c.bf16 %v1722, %v1722
  %1725 = vrot.lane.b32.xlu0 %v1723, 96
  %v1726 = vpop.permute.xlu0 %1725
  %v1728 = vsel %vm1306, %v1726, 0
  %1730 = vmatprep.subr.bf16.mxu0 %v1446
  %1731 = vmatpush1.bf16.msra.mxu0 %v1445
  %1732 = vmatprep.subr.bf16.mxu0 %v1448
  %1733 = vmatpush1.bf16.msra.mxu0 %v1447
  %1734 = vmatprep.subr.bf16.mxu0 0
  %1735 = vmatpush1.bf16.msra.mxu0 0
  %1736 = vmatprep.subr.bf16.mxu0 0
  %1737 = vmatpush1.bf16.msra.mxu0 0
  %1738 = vmatprep.subr.bf16.mxu0 0
  %1739 = vmatpush1.bf16.msra.mxu0 0
  %1740 = vmatprep.subr.bf16.mxu0 0
  %1741 = vmatpush1.bf16.msra.mxu0 0
  %1742 = vmatprep.subr.bf16.mxu0 0
  %1743 = vmatpush1.bf16.msra.mxu0 0
  %1744 = vmatprep.subr.bf16.mxu0 0
  %1745 = vmatpush1.bf16.msra.mxu0 0
  %1746 = vmatprep.subr.bf16.mxu0 0
  %1747 = vmatpush1.bf16.msra.mxu0 0
  %1748 = vmatprep.subr.bf16.mxu0 0
  %1749 = vmatpush1.bf16.msra.mxu0 0
  %1750 = vmatprep.subr.bf16.mxu0 0
  %1751 = vmatpush1.bf16.msra.mxu0 0
  %1752 = vmatprep.subr.bf16.mxu0 0
  %1753 = vmatpush1.bf16.msra.mxu0 0
  %1754 = vmatprep.subr.bf16.mxu0 0
  %1755 = vmatpush1.bf16.msra.mxu0 0
  %1756 = vmatprep.subr.bf16.mxu0 0
  %1757 = vmatpush1.bf16.msra.mxu0 0
  %1758 = vmatprep.subr.bf16.mxu0 0
  %1759 = vmatpush1.bf16.msra.mxu0 0
  %1760 = vmatprep.subr.bf16.mxu0 0
  %1761 = vmatpush1.bf16.msra.mxu0 0
  %1762 = vmatprep.mubr.bf16.mxu0 0
  %1763 = vmatmul.mubr.bf16.gmra.mrb[0].mxu0 %v1728
  %v1764 = vpop.f32.mrb[0].mxu0
  %v1765 = vadd.f32 %v1397, %v1764
  %v1766 = vpop.f32.mrb[0].mxu0
  %v1767 = vadd.f32 %v1428, %v1766
  %v1768 = vpop.f32.mrb[0].mxu0
  %v1769 = vpop.f32.mrb[0].mxu0
  %1770 = vdwg.mxu0
  %v1771 = vpack.c.bf16 %v1691, %v1691
  %1773 = vrot.lane.b32.xlu0 %v1771, 96
  %v1774 = vpop.permute.xlu0 %1773
  %v1776 = vsel %vm1306, %v1774, 0
  %1778 = vmatprep.subr.bf16.mxu0 0
  %1779 = vmatpush1.bf16.msra.mxu0 %v1619
  %1780 = vmatprep.subr.bf16.mxu0 0
  %1781 = vmatpush1.bf16.msra.mxu0 %v1620
  %1782 = vmatprep.subr.bf16.mxu0 0
  %1783 = vmatpush1.bf16.msra.mxu0 0
  %1784 = vmatprep.subr.bf16.mxu0 0
  %1785 = vmatpush1.bf16.msra.mxu0 0
  %1786 = vmatprep.subr.bf16.mxu0 0
  %1787 = vmatpush1.bf16.msra.mxu0 0
  %1788 = vmatprep.subr.bf16.mxu0 0
  %1789 = vmatpush1.bf16.msra.mxu0 0
  %1790 = vmatprep.subr.bf16.mxu0 0
  %1791 = vmatpush1.bf16.msra.mxu0 0
  %1792 = vmatprep.subr.bf16.mxu0 0
  %1793 = vmatpush1.bf16.msra.mxu0 0
  %1794 = vmatprep.subr.bf16.mxu0 0
  %1795 = vmatpush1.bf16.msra.mxu0 0
  %1796 = vmatprep.subr.bf16.mxu0 0
  %1797 = vmatpush1.bf16.msra.mxu0 0
  %1798 = vmatprep.subr.bf16.mxu0 0
  %1799 = vmatpush1.bf16.msra.mxu0 0
  %1800 = vmatprep.subr.bf16.mxu0 0
  %1801 = vmatpush1.bf16.msra.mxu0 0
  %1802 = vmatprep.subr.bf16.mxu0 0
  %1803 = vmatpush1.bf16.msra.mxu0 0
  %1804 = vmatprep.subr.bf16.mxu0 0
  %1805 = vmatpush1.bf16.msra.mxu0 0
  %1806 = vmatprep.subr.bf16.mxu0 0
  %1807 = vmatpush1.bf16.msra.mxu0 0
  %1808 = vmatprep.subr.bf16.mxu0 0
  %1809 = vmatpush1.bf16.msra.mxu0 0
  %1810 = vmatprep.mubr.bf16.mxu0 0
  %1811 = vmatmul.mubr.bf16.gmra.mrb[0].mxu0 %v1776
  %v1812 = vpop.f32.mrb[0].mxu0
  %v1813 = vadd.f32 %v1501, %v1812
  %v1814 = vpop.f32.mrb[0].mxu0
  %v1815 = vpop.f32.mrb[0].mxu0
  %v1816 = vpop.f32.mrb[0].mxu0
  %1817 = vdwg.mxu0
  %v1818 = vadd.f32 %v1767, %v1813
  %v1819 = vxor.u32 %v1818, 2147483648
  %v1820 = vmul.f32 %v1819, 1.442695
  %v1821 = vpow.pop %v1820
  %v1822 = vadd.f32 %v1821, 1.0
  %v1823 = vrcp.pop %v1822
  %v1824 = vmul.f32 1.0, %v1823
  %1826 = vrot.lane.b32.xlu0 %v1813, 64
  %v1827 = vpop.permute.xlu0 %1826
  %v1829 = vmul.f32 %v1824, %v1827
  %1831 = vrot.lane.b32.xlu0 %v1829, 64
  %v1832 = vpop.permute.xlu0 %1831
  %v1834 = vadd.f32 %v1767, %v1832
  %v1835 = vtanh.pop %v1834
  %v1836 = vsub.f32 1.0, %v1824
  %1838 = vrot.lane.b32.xlu0 %v1835, 96
  %v1839 = vpop.permute.xlu0 %1838
  %v1841 = vmul.f32 %v1836, %v1839
  %v1842 = vmul.f32 %v1824, %v1691
  %v1843 = vadd.f32 %v1841, %v1842
  %1845 = vrot.lane.b32.xlu0 %v1843, 96
  %v1846 = vpop.permute.xlu0 %1845
  %1848 = vst.msk [vmem:[#allocation2 + $0x10] sm:$0xff] %vm1306, %v1846
  %v1849 = vadd.f32 %v1365, %v1765
  %v1850 = vxor.u32 %v1849, 2147483648
  %v1851 = vmul.f32 %v1850, 1.442695
  %v1852 = vpow.pop %v1851
  %v1853 = vadd.f32 %v1852, 1.0
  %v1854 = vrcp.pop %v1853
  %v1855 = vmul.f32 1.0, %v1854
  %1857 = vrot.lane.b32.xlu0 %v1765, 64
  %v1858 = vpop.permute.xlu0 %1857
  %v1860 = vmul.f32 %v1855, %v1858
  %1862 = vrot.lane.b32.xlu0 %v1860, 64
  %v1863 = vpop.permute.xlu0 %1862
  %v1865 = vadd.f32 %v1365, %v1863
  %v1866 = vtanh.pop %v1865
  %v1867 = vsub.f32 1.0, %v1855
  %1869 = vrot.lane.b32.xlu0 %v1866, 96
  %v1870 = vpop.permute.xlu0 %1869
  %v1872 = vmul.f32 %v1867, %v1870
  %v1873 = vmul.f32 %v1855, %v1722
  %v1874 = vadd.f32 %v1872, %v1873
  %v1875 = vpack.c.bf16 %v1874, %v1874
  %1877 = vrot.lane.b32.xlu0 %v1875, 96
  %v1878 = vpop.permute.xlu0 %1877
  %v1880 = vsel %vm1306, %v1878, 0
  %1882 = vmatprep.subr.bf16.mxu0 %v1446
  %1883 = vmatpush1.bf16.msra.mxu0 %v1445
  %1884 = vmatprep.subr.bf16.mxu0 %v1448
  %1885 = vmatpush1.bf16.msra.mxu0 %v1447
  %1886 = vmatprep.subr.bf16.mxu0 0
  %1887 = vmatpush1.bf16.msra.mxu0 0
  %1888 = vmatprep.subr.bf16.mxu0 0
  %1889 = vmatpush1.bf16.msra.mxu0 0
  %1890 = vmatprep.subr.bf16.mxu0 0
  %1891 = vmatpush1.bf16.msra.mxu0 0
  %1892 = vmatprep.subr.bf16.mxu0 0
  %1893 = vmatpush1.bf16.msra.mxu0 0
  %1894 = vmatprep.subr.bf16.mxu0 0
  %1895 = vmatpush1.bf16.msra.mxu0 0
  %1896 = vmatprep.subr.bf16.mxu0 0
  %1897 = vmatpush1.bf16.msra.mxu0 0
  %1898 = vmatprep.subr.bf16.mxu0 0
  %1899 = vmatpush1.bf16.msra.mxu0 0
  %1900 = vmatprep.subr.bf16.mxu0 0
  %1901 = vmatpush1.bf16.msra.mxu0 0
  %1902 = vmatprep.subr.bf16.mxu0 0
  %1903 = vmatpush1.bf16.msra.mxu0 0
  %1904 = vmatprep.subr.bf16.mxu0 0
  %1905 = vmatpush1.bf16.msra.mxu0 0
  %1906 = vmatprep.subr.bf16.mxu0 0
  %1907 = vmatpush1.bf16.msra.mxu0 0
  %1908 = vmatprep.subr.bf16.mxu0 0
  %1909 = vmatpush1.bf16.msra.mxu0 0
  %1910 = vmatprep.subr.bf16.mxu0 0
  %1911 = vmatpush1.bf16.msra.mxu0 0
  %1912 = vmatprep.subr.bf16.mxu0 0
  %1913 = vmatpush1.bf16.msra.mxu0 0
  %1914 = vmatprep.mubr.bf16.mxu0 0
  %1915 = vmatmul.mubr.bf16.gmra.mrb[0].mxu0 %v1880
  %v1916 = vpop.f32.mrb[0].mxu0
  %v1917 = vadd.f32 %v1397, %v1916
  %v1918 = vpop.f32.mrb[0].mxu0
  %v1919 = vadd.f32 %v1428, %v1918
  %v1920 = vpop.f32.mrb[0].mxu0
  %v1921 = vpop.f32.mrb[0].mxu0
  %1922 = vdwg.mxu0
  %v1923 = vpack.c.bf16 %v1843, %v1843
  %1925 = vrot.lane.b32.xlu0 %v1923, 96
  %v1926 = vpop.permute.xlu0 %1925
  %v1928 = vsel %vm1306, %v1926, 0
  %1930 = vmatprep.subr.bf16.mxu0 0
  %1931 = vmatpush1.bf16.msra.mxu0 %v1619
  %1932 = vmatprep.subr.bf16.mxu0 0
  %1933 = vmatpush1.bf16.msra.mxu0 %v1620
  %1934 = vmatprep.subr.bf16.mxu0 0
  %1935 = vmatpush1.bf16.msra.mxu0 0
  %1936 = vmatprep.subr.bf16.mxu0 0
  %1937 = vmatpush1.bf16.msra.mxu0 0
  %1938 = vmatprep.subr.bf16.mxu0 0
  %1939 = vmatpush1.bf16.msra.mxu0 0
  %1940 = vmatprep.subr.bf16.mxu0 0
  %1941 = vmatpush1.bf16.msra.mxu0 0
  %1942 = vmatprep.subr.bf16.mxu0 0
  %1943 = vmatpush1.bf16.msra.mxu0 0
  %1944 = vmatprep.subr.bf16.mxu0 0
  %1945 = vmatpush1.bf16.msra.mxu0 0
  %1946 = vmatprep.subr.bf16.mxu0 0
  %1947 = vmatpush1.bf16.msra.mxu0 0
  %1948 = vmatprep.subr.bf16.mxu0 0
  %1949 = vmatpush1.bf16.msra.mxu0 0
  %1950 = vmatprep.subr.bf16.mxu0 0
  %1951 = vmatpush1.bf16.msra.mxu0 0
  %1952 = vmatprep.subr.bf16.mxu0 0
  %1953 = vmatpush1.bf16.msra.mxu0 0
  %1954 = vmatprep.subr.bf16.mxu0 0
  %1955 = vmatpush1.bf16.msra.mxu0 0
  %1956 = vmatprep.subr.bf16.mxu0 0
  %1957 = vmatpush1.bf16.msra.mxu0 0
  %1958 = vmatprep.subr.bf16.mxu0 0
  %1959 = vmatpush1.bf16.msra.mxu0 0
  %1960 = vmatprep.subr.bf16.mxu0 0
  %1961 = vmatpush1.bf16.msra.mxu0 0
  %1962 = vmatprep.mubr.bf16.mxu0 0
  %1963 = vmatmul.mubr.bf16.gmra.mrb[0].mxu0 %v1928
  %v1964 = vpop.f32.mrb[0].mxu0
  %v1965 = vadd.f32 %v1501, %v1964
  %v1966 = vpop.f32.mrb[0].mxu0
  %v1967 = vpop.f32.mrb[0].mxu0
  %v1968 = vpop.f32.mrb[0].mxu0
  %1969 = vdwg.mxu0
  %v1970 = vadd.f32 %v1919, %v1965
  %v1971 = vxor.u32 %v1970, 2147483648
  %v1972 = vmul.f32 %v1971, 1.442695
  %v1973 = vpow.pop %v1972
  %v1974 = vadd.f32 %v1973, 1.0
  %v1975 = vrcp.pop %v1974
  %v1976 = vmul.f32 1.0, %v1975
  %1978 = vrot.lane.b32.xlu0 %v1965, 64
  %v1979 = vpop.permute.xlu0 %1978
  %v1981 = vmul.f32 %v1976, %v1979
  %1983 = vrot.lane.b32.xlu0 %v1981, 64
  %v1984 = vpop.permute.xlu0 %1983
  %v1986 = vadd.f32 %v1919, %v1984
  %v1987 = vtanh.pop %v1986
  %v1988 = vsub.f32 1.0, %v1976
  %1990 = vrot.lane.b32.xlu0 %v1987, 96
  %v1991 = vpop.permute.xlu0 %1990
  %v1993 = vmul.f32 %v1988, %v1991
  %v1994 = vmul.f32 %v1976, %v1843
  %v1995 = vadd.f32 %v1993, %v1994
  %1997 = vrot.lane.b32.xlu0 %v1995, 96
  %v1998 = vpop.permute.xlu0 %1997
  %2000 = vst.msk [vmem:[#allocation2 + $0x18] sm:$0xff] %vm1306, %v1998
  %v2001 = vadd.f32 %v1370, %v1917
  %v2002 = vxor.u32 %v2001, 2147483648
  %v2003 = vmul.f32 %v2002, 1.442695
  %v2004 = vpow.pop %v2003
  %v2005 = vadd.f32 %v2004, 1.0
  %v2006 = vrcp.pop %v2005
  %v2007 = vmul.f32 1.0, %v2006
  %2009 = vrot.lane.b32.xlu0 %v1917, 64
  %v2010 = vpop.permute.xlu0 %2009
  %v2012 = vmul.f32 %v2007, %v2010
  %2014 = vrot.lane.b32.xlu0 %v2012, 64
  %v2015 = vpop.permute.xlu0 %2014
  %v2017 = vadd.f32 %v1370, %v2015
  %v2018 = vtanh.pop %v2017
  %v2019 = vsub.f32 1.0, %v2007
  %2021 = vrot.lane.b32.xlu0 %v2018, 96
  %v2022 = vpop.permute.xlu0 %2021
  %v2024 = vmul.f32 %v2019, %v2022
  %v2025 = vmul.f32 %v2007, %v1874
  %v2026 = vadd.f32 %v2024, %v2025
  %v2027 = vpack.c.bf16 %v2026, %v2026
  %2029 = vrot.lane.b32.xlu0 %v2027, 96
  %v2030 = vpop.permute.xlu0 %2029
  %v2032 = vsel %vm1306, %v2030, 0
  %2034 = vmatprep.subr.bf16.mxu0 %v1446
  %2035 = vmatpush1.bf16.msra.mxu0 %v1445
  %2036 = vmatprep.subr.bf16.mxu0 %v1448
  %2037 = vmatpush1.bf16.msra.mxu0 %v1447
  %2038 = vmatprep.subr.bf16.mxu0 0
  %2039 = vmatpush1.bf16.msra.mxu0 0
  %2040 = vmatprep.subr.bf16.mxu0 0
  %2041 = vmatpush1.bf16.msra.mxu0 0
  %2042 = vmatprep.subr.bf16.mxu0 0
  %2043 = vmatpush1.bf16.msra.mxu0 0
  %2044 = vmatprep.subr.bf16.mxu0 0
  %2045 = vmatpush1.bf16.msra.mxu0 0
  %2046 = vmatprep.subr.bf16.mxu0 0
  %2047 = vmatpush1.bf16.msra.mxu0 0
  %2048 = vmatprep.subr.bf16.mxu0 0
  %2049 = vmatpush1.bf16.msra.mxu0 0
  %2050 = vmatprep.subr.bf16.mxu0 0
  %2051 = vmatpush1.bf16.msra.mxu0 0
  %2052 = vmatprep.subr.bf16.mxu0 0
  %2053 = vmatpush1.bf16.msra.mxu0 0
  %2054 = vmatprep.subr.bf16.mxu0 0
  %2055 = vmatpush1.bf16.msra.mxu0 0
  %2056 = vmatprep.subr.bf16.mxu0 0
  %2057 = vmatpush1.bf16.msra.mxu0 0
  %2058 = vmatprep.subr.bf16.mxu0 0
  %2059 = vmatpush1.bf16.msra.mxu0 0
  %2060 = vmatprep.subr.bf16.mxu0 0
  %2061 = vmatpush1.bf16.msra.mxu0 0
  %2062 = vmatprep.subr.bf16.mxu0 0
  %2063 = vmatpush1.bf16.msra.mxu0 0
  %2064 = vmatprep.subr.bf16.mxu0 0
  %2065 = vmatpush1.bf16.msra.mxu0 0
  %2066 = vmatprep.mubr.bf16.mxu0 0
  %2067 = vmatmul.mubr.bf16.gmra.mrb[0].mxu0 %v2032
  %v2068 = vpop.f32.mrb[0].mxu0
  %v2069 = vadd.f32 %v1397, %v2068
  %v2070 = vpop.f32.mrb[0].mxu0
  %v2071 = vadd.f32 %v1428, %v2070
  %v2072 = vpop.f32.mrb[0].mxu0
  %v2073 = vpop.f32.mrb[0].mxu0
  %2074 = vdwg.mxu0
  %v2075 = vpack.c.bf16 %v1995, %v1995
  %2077 = vrot.lane.b32.xlu0 %v2075, 96
  %v2078 = vpop.permute.xlu0 %2077
  %v2080 = vsel %vm1306, %v2078, 0
  %2082 = vmatprep.subr.bf16.mxu0 0
  %2083 = vmatpush1.bf16.msra.mxu0 %v1619
  %2084 = vmatprep.subr.bf16.mxu0 0
  %2085 = vmatpush1.bf16.msra.mxu0 %v1620
  %2086 = vmatprep.subr.bf16.mxu0 0
  %2087 = vmatpush1.bf16.msra.mxu0 0
  %2088 = vmatprep.subr.bf16.mxu0 0
  %2089 = vmatpush1.bf16.msra.mxu0 0
  %2090 = vmatprep.subr.bf16.mxu0 0
  %2091 = vmatpush1.bf16.msra.mxu0 0
  %2092 = vmatprep.subr.bf16.mxu0 0
  %2093 = vmatpush1.bf16.msra.mxu0 0
  %2094 = vmatprep.subr.bf16.mxu0 0
  %2095 = vmatpush1.bf16.msra.mxu0 0
  %2096 = vmatprep.subr.bf16.mxu0 0
  %2097 = vmatpush1.bf16.msra.mxu0 0
  %2098 = vmatprep.subr.bf16.mxu0 0
  %2099 = vmatpush1.bf16.msra.mxu0 0
  %2100 = vmatprep.subr.bf16.mxu0 0
  %2101 = vmatpush1.bf16.msra.mxu0 0
  %2102 = vmatprep.subr.bf16.mxu0 0
  %2103 = vmatpush1.bf16.msra.mxu0 0
  %2104 = vmatprep.subr.bf16.mxu0 0
  %2105 = vmatpush1.bf16.msra.mxu0 0
  %2106 = vmatprep.subr.bf16.mxu0 0
  %2107 = vmatpush1.bf16.msra.mxu0 0
  %2108 = vmatprep.subr.bf16.mxu0 0
  %2109 = vmatpush1.bf16.msra.mxu0 0
  %2110 = vmatprep.subr.bf16.mxu0 0
  %2111 = vmatpush1.bf16.msra.mxu0 0
  %2112 = vmatprep.subr.bf16.mxu0 0
  %2113 = vmatpush1.bf16.msra.mxu0 0
  %2114 = vmatprep.mubr.bf16.mxu0 0
  %2115 = vmatmul.mubr.bf16.gmra.mrb[0].mxu0 %v2080
  %v2116 = vpop.f32.mrb[0].mxu0
  %v2117 = vadd.f32 %v1501, %v2116
  %v2118 = vpop.f32.mrb[0].mxu0
  %v2119 = vpop.f32.mrb[0].mxu0
  %v2120 = vpop.f32.mrb[0].mxu0
  %2121 = vdwg.mxu0
  %v2122 = vadd.f32 %v2071, %v2117
  %v2123 = vxor.u32 %v2122, 2147483648
  %v2124 = vmul.f32 %v2123, 1.442695
  %v2125 = vpow.pop %v2124
  %v2126 = vadd.f32 %v2125, 1.0
  %v2127 = vrcp.pop %v2126
  %v2128 = vmul.f32 1.0, %v2127
  %2130 = vrot.lane.b32.xlu0 %v2117, 64
  %v2131 = vpop.permute.xlu0 %2130
  %v2133 = vmul.f32 %v2128, %v2131
  %2135 = vrot.lane.b32.xlu0 %v2133, 64
  %v2136 = vpop.permute.xlu0 %2135
  %v2138 = vadd.f32 %v2071, %v2136
  %v2139 = vtanh.pop %v2138
  %v2140 = vsub.f32 1.0, %v2128
  %2142 = vrot.lane.b32.xlu0 %v2139, 96
  %v2143 = vpop.permute.xlu0 %2142
  %v2145 = vmul.f32 %v2140, %v2143
  %v2146 = vmul.f32 %v2128, %v1995
  %v2147 = vadd.f32 %v2145, %v2146
  %2149 = vrot.lane.b32.xlu0 %v2147, 96
  %v2150 = vpop.permute.xlu0 %2149
  %2152 = vst.msk [vmem:[#allocation2 + $0x20] sm:$0xff] %vm1306, %v2150
  %v2153 = vadd.f32 %v1373, %v2069
  %v2154 = vxor.u32 %v2153, 2147483648
  %v2155 = vmul.f32 %v2154, 1.442695
  %v2156 = vpow.pop %v2155
  %v2157 = vadd.f32 %v2156, 1.0
  %v2158 = vrcp.pop %v2157
  %v2159 = vmul.f32 1.0, %v2158
  %2161 = vrot.lane.b32.xlu0 %v2069, 64
  %v2162 = vpop.permute.xlu0 %2161
  %v2164 = vmul.f32 %v2159, %v2162
  %2166 = vrot.lane.b32.xlu0 %v2164, 64
  %v2167 = vpop.permute.xlu0 %2166
  %v2169 = vadd.f32 %v1373, %v2167
  %v2170 = vtanh.pop %v2169
  %v2171 = vsub.f32 1.0, %v2159
  %2173 = vrot.lane.b32.xlu0 %v2170, 96
  %v2174 = vpop.permute.xlu0 %2173
  %v2176 = vmul.f32 %v2171, %v2174
  %v2177 = vmul.f32 %v2159, %v2026
  %v2178 = vadd.f32 %v2176, %v2177
  %v2179 = vpack.c.bf16 %v2178, %v2178
  %2181 = vrot.lane.b32.xlu0 %v2179, 96
  %v2182 = vpop.permute.xlu0 %2181
  %v2184 = vsel %vm1306, %v2182, 0
  %2186 = vmatprep.subr.bf16.mxu0 %v1446
  %2187 = vmatpush1.bf16.msra.mxu0 %v1445
  %2188 = vmatprep.subr.bf16.mxu0 %v1448
  %2189 = vmatpush1.bf16.msra.mxu0 %v1447
  %2190 = vmatprep.subr.bf16.mxu0 0
  %2191 = vmatpush1.bf16.msra.mxu0 0
  %2192 = vmatprep.subr.bf16.mxu0 0
  %2193 = vmatpush1.bf16.msra.mxu0 0
  %2194 = vmatprep.subr.bf16.mxu0 0
  %2195 = vmatpush1.bf16.msra.mxu0 0
  %2196 = vmatprep.subr.bf16.mxu0 0
  %2197 = vmatpush1.bf16.msra.mxu0 0
  %2198 = vmatprep.subr.bf16.mxu0 0
  %2199 = vmatpush1.bf16.msra.mxu0 0
  %2200 = vmatprep.subr.bf16.mxu0 0
  %2201 = vmatpush1.bf16.msra.mxu0 0
  %2202 = vmatprep.subr.bf16.mxu0 0
  %2203 = vmatpush1.bf16.msra.mxu0 0
  %2204 = vmatprep.subr.bf16.mxu0 0
  %2205 = vmatpush1.bf16.msra.mxu0 0
  %2206 = vmatprep.subr.bf16.mxu0 0
  %2207 = vmatpush1.bf16.msra.mxu0 0
  %2208 = vmatprep.subr.bf16.mxu0 0
  %2209 = vmatpush1.bf16.msra.mxu0 0
  %2210 = vmatprep.subr.bf16.mxu0 0
  %2211 = vmatpush1.bf16.msra.mxu0 0
  %2212 = vmatprep.subr.bf16.mxu0 0
  %2213 = vmatpush1.bf16.msra.mxu0 0
  %2214 = vmatprep.subr.bf16.mxu0 0
  %2215 = vmatpush1.bf16.msra.mxu0 0
  %2216 = vmatprep.subr.bf16.mxu0 0
  %2217 = vmatpush1.bf16.msra.mxu0 0
  %2218 = vmatprep.mubr.bf16.mxu0 0
  %2219 = vmatmul.mubr.bf16.gmra.mrb[0].mxu0 %v2184
  %v2220 = vpop.f32.mrb[0].mxu0
  %v2221 = vadd.f32 %v1397, %v2220
  %v2222 = vpop.f32.mrb[0].mxu0
  %v2223 = vadd.f32 %v1428, %v2222
  %v2224 = vpop.f32.mrb[0].mxu0
  %v2225 = vpop.f32.mrb[0].mxu0
  %2226 = vdwg.mxu0
  %v2227 = vpack.c.bf16 %v2147, %v2147
  %2229 = vrot.lane.b32.xlu0 %v2227, 96
  %v2230 = vpop.permute.xlu0 %2229
  %v2232 = vsel %vm1306, %v2230, 0
  %2234 = vmatprep.subr.bf16.mxu0 0
  %2235 = vmatpush1.bf16.msra.mxu0 %v1619
  %2236 = vmatprep.subr.bf16.mxu0 0
  %2237 = vmatpush1.bf16.msra.mxu0 %v1620
  %2238 = vmatprep.subr.bf16.mxu0 0
  %2239 = vmatpush1.bf16.msra.mxu0 0
  %2240 = vmatprep.subr.bf16.mxu0 0
  %2241 = vmatpush1.bf16.msra.mxu0 0
  %2242 = vmatprep.subr.bf16.mxu0 0
  %2243 = vmatpush1.bf16.msra.mxu0 0
  %2244 = vmatprep.subr.bf16.mxu0 0
  %2245 = vmatpush1.bf16.msra.mxu0 0
  %2246 = vmatprep.subr.bf16.mxu0 0
  %2247 = vmatpush1.bf16.msra.mxu0 0
  %2248 = vmatprep.subr.bf16.mxu0 0
  %2249 = vmatpush1.bf16.msra.mxu0 0
  %2250 = vmatprep.subr.bf16.mxu0 0
  %2251 = vmatpush1.bf16.msra.mxu0 0
  %2252 = vmatprep.subr.bf16.mxu0 0
  %2253 = vmatpush1.bf16.msra.mxu0 0
  %2254 = vmatprep.subr.bf16.mxu0 0
  %2255 = vmatpush1.bf16.msra.mxu0 0
  %2256 = vmatprep.subr.bf16.mxu0 0
  %2257 = vmatpush1.bf16.msra.mxu0 0
  %2258 = vmatprep.subr.bf16.mxu0 0
  %2259 = vmatpush1.bf16.msra.mxu0 0
  %2260 = vmatprep.subr.bf16.mxu0 0
  %2261 = vmatpush1.bf16.msra.mxu0 0
  %2262 = vmatprep.subr.bf16.mxu0 0
  %2263 = vmatpush1.bf16.msra.mxu0 0
  %2264 = vmatprep.subr.bf16.mxu0 0
  %2265 = vmatpush1.bf16.msra.mxu0 0
  %2266 = vmatprep.mubr.bf16.mxu0 0
  %2267 = vmatmul.mubr.bf16.gmra.mrb[0].mxu0 %v2232
  %v2268 = vpop.f32.mrb[0].mxu0
  %v2269 = vadd.f32 %v1501, %v2268
  %v2270 = vpop.f32.mrb[0].mxu0
  %v2271 = vpop.f32.mrb[0].mxu0
  %v2272 = vpop.f32.mrb[0].mxu0
  %2273 = vdwg.mxu0
  %v2274 = vadd.f32 %v2223, %v2269
  %v2275 = vxor.u32 %v2274, 2147483648
  %v2276 = vmul.f32 %v2275, 1.442695
  %v2277 = vpow.pop %v2276
  %v2278 = vadd.f32 %v2277, 1.0
  %v2279 = vrcp.pop %v2278
  %v2280 = vmul.f32 1.0, %v2279
  %2282 = vrot.lane.b32.xlu0 %v2269, 64
  %v2283 = vpop.permute.xlu0 %2282
  %v2285 = vmul.f32 %v2280, %v2283
  %2287 = vrot.lane.b32.xlu0 %v2285, 64
  %v2288 = vpop.permute.xlu0 %2287
  %v2290 = vadd.f32 %v2223, %v2288
  %v2291 = vtanh.pop %v2290
  %v2292 = vsub.f32 1.0, %v2280
  %2294 = vrot.lane.b32.xlu0 %v2291, 96
  %v2295 = vpop.permute.xlu0 %2294
  %v2297 = vmul.f32 %v2292, %v2295
  %v2298 = vmul.f32 %v2280, %v2147
  %v2299 = vadd.f32 %v2297, %v2298
  %2301 = vrot.lane.b32.xlu0 %v2299, 96
  %v2302 = vpop.permute.xlu0 %2301
  %2304 = vst.msk [vmem:[#allocation2 + $0x28] sm:$0xff] %vm1306, %v2302
  %v2305 = vadd.f32 %v1378, %v2221
  %v2306 = vxor.u32 %v2305, 2147483648
  %v2307 = vmul.f32 %v2306, 1.442695
  %v2308 = vpow.pop %v2307
  %v2309 = vadd.f32 %v2308, 1.0
  %v2310 = vrcp.pop %v2309
  %v2311 = vmul.f32 1.0, %v2310
  %2313 = vrot.lane.b32.xlu0 %v2221, 64
  %v2314 = vpop.permute.xlu0 %2313
  %v2316 = vmul.f32 %v2311, %v2314
  %2318 = vrot.lane.b32.xlu0 %v2316, 64
  %v2319 = vpop.permute.xlu0 %2318
  %v2321 = vadd.f32 %v1378, %v2319
  %v2322 = vtanh.pop %v2321
  %v2323 = vsub.f32 1.0, %v2311
  %2325 = vrot.lane.b32.xlu0 %v2322, 96
  %v2326 = vpop.permute.xlu0 %2325
  %v2328 = vmul.f32 %v2323, %v2326
  %v2329 = vmul.f32 %v2311, %v2178
  %v2330 = vadd.f32 %v2328, %v2329
  %v2331 = vpack.c.bf16 %v2330, %v2330
  %2333 = vrot.lane.b32.xlu0 %v2331, 96
  %v2334 = vpop.permute.xlu0 %2333
  %v2336 = vsel %vm1306, %v2334, 0
  %2338 = vmatprep.subr.bf16.mxu0 %v1446
  %2339 = vmatpush1.bf16.msra.mxu0 %v1445
  %2340 = vmatprep.subr.bf16.mxu0 %v1448
  %2341 = vmatpush1.bf16.msra.mxu0 %v1447
  %2342 = vmatprep.subr.bf16.mxu0 0
  %2343 = vmatpush1.bf16.msra.mxu0 0
  %2344 = vmatprep.subr.bf16.mxu0 0
  %2345 = vmatpush1.bf16.msra.mxu0 0
  %2346 = vmatprep.subr.bf16.mxu0 0
  %2347 = vmatpush1.bf16.msra.mxu0 0
  %2348 = vmatprep.subr.bf16.mxu0 0
  %2349 = vmatpush1.bf16.msra.mxu0 0
  %2350 = vmatprep.subr.bf16.mxu0 0
  %2351 = vmatpush1.bf16.msra.mxu0 0
  %2352 = vmatprep.subr.bf16.mxu0 0
  %2353 = vmatpush1.bf16.msra.mxu0 0
  %2354 = vmatprep.subr.bf16.mxu0 0
  %2355 = vmatpush1.bf16.msra.mxu0 0
  %2356 = vmatprep.subr.bf16.mxu0 0
  %2357 = vmatpush1.bf16.msra.mxu0 0
  %2358 = vmatprep.subr.bf16.mxu0 0
  %2359 = vmatpush1.bf16.msra.mxu0 0
  %2360 = vmatprep.subr.bf16.mxu0 0
  %2361 = vmatpush1.bf16.msra.mxu0 0
  %2362 = vmatprep.subr.bf16.mxu0 0
  %2363 = vmatpush1.bf16.msra.mxu0 0
  %2364 = vmatprep.subr.bf16.mxu0 0
  %2365 = vmatpush1.bf16.msra.mxu0 0
  %2366 = vmatprep.subr.bf16.mxu0 0
  %2367 = vmatpush1.bf16.msra.mxu0 0
  %2368 = vmatprep.subr.bf16.mxu0 0
  %2369 = vmatpush1.bf16.msra.mxu0 0
  %2370 = vmatprep.mubr.bf16.mxu0 0
  %2371 = vmatmul.mubr.bf16.gmra.mrb[0].mxu0 %v2336
  %v2372 = vpop.f32.mrb[0].mxu0
  %v2373 = vpop.f32.mrb[0].mxu0
  %v2374 = vadd.f32 %v1428, %v2373
  %v2375 = vpop.f32.mrb[0].mxu0
  %v2376 = vpop.f32.mrb[0].mxu0
  %2377 = vdwg.mxu0
  %v2378 = vpack.c.bf16 %v2299, %v2299
  %2380 = vrot.lane.b32.xlu0 %v2378, 96
  %v2381 = vpop.permute.xlu0 %2380
  %v2383 = vsel %vm1306, %v2381, 0
  %2385 = vmatprep.subr.bf16.mxu0 0
  %2386 = vmatpush1.bf16.msra.mxu0 %v1619
  %2387 = vmatprep.subr.bf16.mxu0 0
  %2388 = vmatpush1.bf16.msra.mxu0 %v1620
  %2389 = vmatprep.subr.bf16.mxu0 0
  %2390 = vmatpush1.bf16.msra.mxu0 0
  %2391 = vmatprep.subr.bf16.mxu0 0
  %2392 = vmatpush1.bf16.msra.mxu0 0
  %2393 = vmatprep.subr.bf16.mxu0 0
  %2394 = vmatpush1.bf16.msra.mxu0 0
  %2395 = vmatprep.subr.bf16.mxu0 0
  %2396 = vmatpush1.bf16.msra.mxu0 0
  %2397 = vmatprep.subr.bf16.mxu0 0
  %2398 = vmatpush1.bf16.msra.mxu0 0
  %2399 = vmatprep.subr.bf16.mxu0 0
  %2400 = vmatpush1.bf16.msra.mxu0 0
  %2401 = vmatprep.subr.bf16.mxu0 0
  %2402 = vmatpush1.bf16.msra.mxu0 0
  %2403 = vmatprep.subr.bf16.mxu0 0
  %2404 = vmatpush1.bf16.msra.mxu0 0
  %2405 = vmatprep.subr.bf16.mxu0 0
  %2406 = vmatpush1.bf16.msra.mxu0 0
  %2407 = vmatprep.subr.bf16.mxu0 0
  %2408 = vmatpush1.bf16.msra.mxu0 0
  %2409 = vmatprep.subr.bf16.mxu0 0
  %2410 = vmatpush1.bf16.msra.mxu0 0
  %2411 = vmatprep.subr.bf16.mxu0 0
  %2412 = vmatpush1.bf16.msra.mxu0 0
  %2413 = vmatprep.subr.bf16.mxu0 0
  %2414 = vmatpush1.bf16.msra.mxu0 0
  %2415 = vmatprep.subr.bf16.mxu0 0
  %2416 = vmatpush1.bf16.msra.mxu0 0
  %2417 = vmatprep.mubr.bf16.mxu0 0
  %2418 = vmatmul.mubr.bf16.gmra.mrb[0].mxu0 %v2383
  %v2419 = vpop.f32.mrb[0].mxu0
  %v2420 = vadd.f32 %v1501, %v2419
  %v2421 = vpop.f32.mrb[0].mxu0
  %v2422 = vpop.f32.mrb[0].mxu0
  %v2423 = vpop.f32.mrb[0].mxu0
  %2424 = vdwg.mxu0
  %v2425 = vadd.f32 %v2374, %v2420
  %v2426 = vxor.u32 %v2425, 2147483648
  %v2427 = vmul.f32 %v2426, 1.442695
  %v2428 = vpow.pop %v2427
  %v2429 = vadd.f32 %v2428, 1.0
  %v2430 = vrcp.pop %v2429
  %v2431 = vmul.f32 1.0, %v2430
  %2433 = vrot.lane.b32.xlu0 %v2420, 64
  %v2434 = vpop.permute.xlu0 %2433
  %v2436 = vmul.f32 %v2431, %v2434
  %2438 = vrot.lane.b32.xlu0 %v2436, 64
  %v2439 = vpop.permute.xlu0 %2438
  %v2441 = vadd.f32 %v2374, %v2439
  %v2442 = vtanh.pop %v2441
  %v2443 = vsub.f32 1.0, %v2431
  %2445 = vrot.lane.b32.xlu0 %v2442, 96
  %v2446 = vpop.permute.xlu0 %2445
  %v2448 = vmul.f32 %v2443, %v2446
  %v2449 = vmul.f32 %v2431, %v2299
  %v2450 = vadd.f32 %v2448, %v2449
  %2452 = vrot.lane.b32.xlu0 %v2450, 96
  %v2453 = vpop.permute.xlu0 %2452
  %2455 = vst.msk [vmem:[#allocation2 + $0x30] sm:$0xff] %vm1306, %v2453
  %v2456 = vld [vmem:[#allocation2] sm:$0xff]
  %v2457 = vld [vmem:[#allocation2 + $0x8] sm:$0xff]
  %v2458 = vld [vmem:[#allocation2 + $0x10] sm:$0xff]
  %v2459 = vld [vmem:[#allocation2 + $0x18] sm:$0xff]
  %v2460 = vld [vmem:[#allocation2 + $0x20] sm:$0xff]
  %v2461 = vld [vmem:[#allocation2 + $0x28] sm:$0xff]
  %v2462 = vld [vmem:[#allocation2 + $0x30] sm:$0xff]
  %v2463 = vpack.c.bf16 %v2457, %v2456
  %v2464 = vpack.c.bf16 %v2459, %v2458
  %v2465 = vpack.c.bf16 %v2461, %v2460
  %v2466 = vpack.c.bf16 %v2462, %v2462
  %v2467 = vld [vmem:[%s11] sm:$0xf]
  %v2468 = vld [vmem:[%s11 + $0x4] sm:$0xf]
  %v2469 = vld [vmem:[%s11 + $0x8] sm:$0xf]
  %v2470 = vld [vmem:[%s11 + $0xc] sm:$0xf]
  %v2471 = vld [vmem:[%s12] sm:$0x1]
  %v2473 = vlaneseq
  %v2474 = vshrl.u32 %v2473, 7
  %v2475 = vsub.s32 0, %v2474
  %v2476 = vrot.slane %v2471, %v2475
  %v2482 = vunpack.c.l.b16 %v2467
  %v2483 = vunpack.c.l.b16 %v2468
  %v2484 = vunpack.c.l.b16 %v2469
  %v2485 = vunpack.c.l.b16 %v2470
  %v2486 = vpack.c.b16 %v2483, %v2482
  %v2487 = vpack.c.b16 %v2485, %v2484
  %v2491 = vsel %vm1306, %v2463, 0
  %v2494 = vsel %vm1306, %v2464, 0
  %v2497 = vsel %vm1306, %v2465, 0
  %v2500 = vsel %vm1306, %v2466, 0
  %2502 = vmatprep.subr.bf16.mxu0 0
  %2503 = vmatpush1.bf16.msra.mxu0 %v2486
  %2504 = vmatprep.subr.bf16.mxu0 0
  %2505 = vmatpush1.bf16.msra.mxu0 %v2487
  %2506 = vmatprep.subr.bf16.mxu0 0
  %2507 = vmatpush1.bf16.msra.mxu0 0
  %2508 = vmatprep.subr.bf16.mxu0 0
  %2509 = vmatpush1.bf16.msra.mxu0 0
  %2510 = vmatprep.subr.bf16.mxu0 0
  %2511 = vmatpush1.bf16.msra.mxu0 0
  %2512 = vmatprep.subr.bf16.mxu0 0
  %2513 = vmatpush1.bf16.msra.mxu0 0
  %2514 = vmatprep.subr.bf16.mxu0 0
  %2515 = vmatpush1.bf16.msra.mxu0 0
  %2516 = vmatprep.subr.bf16.mxu0 0
  %2517 = vmatpush1.bf16.msra.mxu0 0
  %2518 = vmatprep.subr.bf16.mxu0 0
  %2519 = vmatpush1.bf16.msra.mxu0 0
  %2520 = vmatprep.subr.bf16.mxu0 0
  %2521 = vmatpush1.bf16.msra.mxu0 0
  %2522 = vmatprep.subr.bf16.mxu0 0
  %2523 = vmatpush1.bf16.msra.mxu0 0
  %2524 = vmatprep.subr.bf16.mxu0 0
  %2525 = vmatpush1.bf16.msra.mxu0 0
  %2526 = vmatprep.subr.bf16.mxu0 0
  %2527 = vmatpush1.bf16.msra.mxu0 0
  %2528 = vmatprep.subr.bf16.mxu0 0
  %2529 = vmatpush1.bf16.msra.mxu0 0
  %2530 = vmatprep.subr.bf16.mxu0 0
  %2531 = vmatpush1.bf16.msra.mxu0 0
  %2532 = vmatprep.subr.bf16.mxu0 0
  %2533 = vmatpush1.bf16.msra.mxu0 0
  %2534 = vmatprep.mubr.bf16.mxu0 0
  %2535 = vmatmul.mubr.bf16.gmra.mrb[0].mxu0 %v2491
  %v2536 = vpop.f32.mrb[0].mxu0
  %v2537 = vadd.f32 %v2476, %v2536
  %v2538 = vpop.f32.mrb[0].mxu0
  %v2539 = vpop.f32.mrb[0].mxu0
  %v2540 = vadd.f32 %v2476, %v2539
  %v2541 = vpop.f32.mrb[0].mxu0
  %2542 = vmatprep.mubr.bf16.mxu0 0
  %2543 = vmatmul.mubr.bf16.gmra.mrb[0].mxu0 %v2494
  %v2544 = vpop.f32.mrb[0].mxu0
  %v2545 = vadd.f32 %v2476, %v2544
  %v2546 = vpop.f32.mrb[0].mxu0
  %v2547 = vpop.f32.mrb[0].mxu0
  %v2548 = vadd.f32 %v2476, %v2547
  %v2549 = vpop.f32.mrb[0].mxu0
  %2550 = vmatprep.mubr.bf16.mxu0 0
  %2551 = vmatmul.mubr.bf16.gmra.mrb[0].mxu0 %v2497
  %v2552 = vpop.f32.mrb[0].mxu0
  %v2553 = vadd.f32 %v2476, %v2552
  %v2554 = vpop.f32.mrb[0].mxu0
  %v2555 = vpop.f32.mrb[0].mxu0
  %v2556 = vadd.f32 %v2476, %v2555
  %v2557 = vpop.f32.mrb[0].mxu0
  %2558 = vmatprep.mubr.bf16.mxu0 0
  %2559 = vmatmul.mubr.bf16.gmra.mrb[0].mxu0 %v2500
  %v2560 = vpop.f32.mrb[0].mxu0
  %v2561 = vadd.f32 %v2476, %v2560
  %v2562 = vpop.f32.mrb[0].mxu0
  %v2563 = vpop.f32.mrb[0].mxu0
  %v2564 = vpop.f32.mrb[0].mxu0
  %2565 = vdwg.mxu0
  %2566 = vst [vmem:[%s13] sm:$0xff] %v2537
  %2567 = vst [vmem:[%s13 + $0x8] sm:$0xff] %v2540
  %2568 = vst [vmem:[%s13 + $0x10] sm:$0xff] %v2545
  %2569 = vst [vmem:[%s13 + $0x18] sm:$0xff] %v2548
  %2570 = vst [vmem:[%s13 + $0x20] sm:$0xff] %v2553
  %2571 = vst [vmem:[%s13 + $0x28] sm:$0xff] %v2556
  %2572 = vst [vmem:[%s13 + $0x30] sm:$0xff] %v2561
  // Predicated region
  $region54: #{image_caption_forward.1} parent=0 // pred_check
    _
  $region55: #{image_caption_forward.1} parent=0 // pred_check_branch
    %2574 = sbr.rel (0) target = $region57
  $region56: #{image_caption_forward.1} parent=0 // pred_region
    _
  $region57: #{image_caption_forward.1} parent=0 // pred_fallthru
    _
  // Predicated region
  $region58: #{image_caption_forward.1} parent=0 // pred_check
    _
  $region59: #{image_caption_forward.1} parent=0 // pred_check_branch
    %2576 = sbr.rel (0) target = $region61
  $region60: #{image_caption_forward.1} parent=0 // pred_region
    _
  $region61: #{image_caption_forward.1} parent=0 // pred_fallthru
    _

</llo_original>
